<compile_context>
chip_gen: v6e
topology: v6e:2x2x1
jax: 0.10.0
libtpu: 0.0.40
codegen_flags: <defaults>
</compile_context>

<pallas_src>
import jax
import jax.numpy as jnp
import numpy as np
from jax import lax
from jax.experimental import pallas as pl
from jax.experimental.pallas import tpu as pltpu

BN_EPS = 1e-5
CLASS_PAD = 128  # lane-dense padded class dimension (real classes = 11)


# ----------------------------------------------------------------------------
# Fused kernel: masked LSTM recurrence + per-sample MLP head (BN in train mode)
# ----------------------------------------------------------------------------
def fused_lstm_head_kernel(len_ref, x_ref, wih_ref, whh_ref, b_ref,
                           w1_hbm, b1_ref, g1_ref, be1_ref,
                           w2_hbm, b2_ref, g2_ref, be2_ref,
                           w3_hbm, b3_ref,
                           out_ref, hn_ref,
                           w1_vmem, w2_vmem, w3_vmem, y_sc, dma_sem):
    B, T, CP = out_ref.shape          # (B, T, 128)
    H = hn_ref.shape[1]

    # --- kick off head-weight DMAs (HBM -> VMEM) immediately; they overlap the
    #     serial recurrence below and are awaited right before their matmuls. ---
    cp_w1 = pltpu.make_async_copy(w1_hbm, w1_vmem, dma_sem.at[0]); cp_w1.start()
    cp_w2 = pltpu.make_async_copy(w2_hbm, w2_vmem, dma_sem.at[1]); cp_w2.start()
    cp_w3 = pltpu.make_async_copy(w3_hbm, w3_vmem, dma_sem.at[2]); cp_w3.start()

    # --- hoisted input projection: one (B*T, I) x (I, 4H) matmul -------------
    x2d = x_ref[...]                                               # (B*T, I), rows b*T + t
    xw = jnp.dot(x2d, wih_ref[...],
                 preferred_element_type=jnp.float32) + b_ref[...]  # (B*T, 4H)
    xw3 = xw.reshape(B, T, 4 * H)                                  # (B, T, 4H)

    lens = len_ref[...]                                            # (B, 1) int32
    whh = whh_ref[...]                                             # (H, 4H)

    # --- serial recurrence, fully unrolled (T small & static) ----------------
    h = jnp.zeros((B, H), jnp.float32)
    c = jnp.zeros((B, H), jnp.float32)
    for t in range(T):
        gates = xw3[:, t, :] + jnp.dot(h, whh,
                                       preferred_element_type=jnp.float32)  # (B, 4H)
        sg = jax.nn.sigmoid(gates)          # one full-vreg EUP push (f32)
        tg = jnp.tanh(gates)                # one full-vreg EUP push (f32)
        i_g = sg[:, 0 * H:1 * H]            # PyTorch gate order [i, f, g, o]
        f_g = sg[:, 1 * H:2 * H]
        o_g = sg[:, 3 * H:4 * H]
        g_g = tg[:, 2 * H:3 * H]

        c_upd = f_g * c + i_g * g_g
        h_upd = o_g * jnp.tanh(c_upd)

        # mask does not depend on h/c, so it is off the serial dependency chain
        mask = t < lens                     # (B, 1): only valid (packed) steps advance
        c = jnp.where(mask, c_upd, c)
        h = jnp.where(mask, h_upd, h)
        # padded positions -> 0, written straight to VMEM scratch (no live vregs)
        y_sc[:, t:t + 1, :] = jnp.where(mask, h_upd, 0.0).reshape(B, 1, H)

    hn_ref[...] = h                         # hn[-1]: state at last valid step per sequence

    # --- MLP head, batched over all B*T rows ---------------------------------
    y2d = y_sc[...].reshape(B * T, H)       # rows b*T + t (tile-aligned reshape)

    def bn_relu(a2d, gamma, beta):
        # One-pass train-mode BN per sample over the time dim, normalize folded
        # into a single scale/shift. All f32.
        D = a2d.shape[-1]
        a3 = a2d.reshape(B, T, D)                      # per-sample time-major view
        inv_t = 1.0 / T
        mu = jnp.sum(a3, axis=1, keepdims=True) * inv_t
        ex2 = jnp.sum(a3 * a3, axis=1, keepdims=True) * inv_t
        var = ex2 - mu * mu                            # biased (train mode)
        scale = gamma * lax.rsqrt(var + BN_EPS)
        shift = beta - mu * scale
        return jnp.maximum(a3 * scale + shift, 0.0).reshape(B * T, D)

    cp_w1.wait()   # weight only needed from here on
    a1 = jnp.dot(y2d.astype(jnp.bfloat16), w1_vmem[...],
                 preferred_element_type=jnp.float32) + b1_ref[...]
    a1 = bn_relu(a1, g1_ref[...], be1_ref[...])                     # (B*T, 1024) f32

    cp_w2.wait()
    a2 = jnp.dot(a1.astype(jnp.bfloat16), w2_vmem[...],
                 preferred_element_type=jnp.float32) + b2_ref[...]
    a2 = bn_relu(a2, g2_ref[...], be2_ref[...])                     # (B*T, 256) f32

    cp_w3.wait()
    logits = jnp.dot(a2.astype(jnp.bfloat16), w3_vmem[...],
                     preferred_element_type=jnp.float32) + b3_ref[...]
    # padded class lanes carry bias -1e30 -> exp underflows to exactly 0
    m = jnp.max(logits, axis=1, keepdims=True)
    e = jnp.exp(logits - m)
    denom = jnp.sum(e, axis=1, keepdims=True)
    probs = e * pl.reciprocal(denom, approx=True)                   # divide -> EUP slot

    out_ref[...] = probs.reshape(B, T, CP)                          # lane-dense store


# ----------------------------------------------------------------------------
# Wrapper
# ----------------------------------------------------------------------------
def lstm_model_forward(padded_sequence, input_lengths, p):
    """padded_sequence: (B, T, I) batch_first; input_lengths: (B,) descending.

    Returns (probs, hn) where probs is the stacked (B, T, 11) array of class
    probabilities (probs[b] == result[b] of the PyTorch module's list output).
    """
    B, T, _ = padded_sequence.shape
    H = p["whh_t"].shape[0]
    D1 = p["w1_t"].shape[1]
    D2 = p["w2_t"].shape[1]
    C = p["n_classes"]

    x2d = padded_sequence.reshape(B * T, -1)                # metadata-only flatten (rows b*T+t)
    len2d = input_lengths.reshape(B, 1).astype(jnp.int32)

    vmem_spec = pl.BlockSpec(memory_space=pltpu.MemorySpace.VMEM)
    hbm_spec = pl.BlockSpec(memory_space=pl.ANY)            # big head weights: manual DMA

    probs_pad, hn = pl.pallas_call(
        fused_lstm_head_kernel,
        out_shape=(jax.ShapeDtypeStruct((B, T, CLASS_PAD), jnp.float32),
                   jax.ShapeDtypeStruct((B, H), jnp.float32)),
        in_specs=[vmem_spec, vmem_spec,                     # lengths, x
                  vmem_spec, vmem_spec, vmem_spec,          # wih, whh, b_lstm
                  hbm_spec, vmem_spec, vmem_spec, vmem_spec,    # w1 (ANY), b1, g1, be1
                  hbm_spec, vmem_spec, vmem_spec, vmem_spec,    # w2 (ANY), b2, g2, be2
                  hbm_spec, vmem_spec],                         # w3 (ANY), b3_pad
        scratch_shapes=[
            pltpu.VMEM((H, D1), jnp.bfloat16),       # w1 landing buffer
            pltpu.VMEM((D1, D2), jnp.bfloat16),      # w2 landing buffer
            pltpu.VMEM((D2, CLASS_PAD), jnp.bfloat16),  # w3 landing buffer
            pltpu.VMEM((B, T, H), jnp.float32),      # per-step LSTM outputs
            pltpu.SemaphoreType.DMA((3,)),           # one DMA sem per weight
        ],
    )(len2d, x2d,
      p["wih_t"], p["whh_t"], p["b_lstm"],
      p["w1_t"], p["b1"], p["g1"], p["be1"],
      p["w2_t"], p["b2"], p["g2"], p["be2"],
      p["w3_t_pad"], p["b3_pad"])

    return probs_pad[:, :, :C], hn


# ----------------------------------------------------------------------------
# Pure-JAX reference (for correctness check). Uses the same (bf16-stored) head
# weight values as the kernel, but keeps all activations in f32.
# ----------------------------------------------------------------------------
def reference_forward(x, lengths, p):
    B, T, _ = x.shape
    H = p["whh_t"].shape[0]
    h = jnp.zeros((B, H), jnp.float32)
    c = jnp.zeros((B, H), jnp.float32)
    outs = []
    for t in range(T):
        gates = x[:, t, :] @ p["wih_t"] + h @ p["whh_t"] + p["b_lstm"]
        i = jax.nn.sigmoid(gates[:, :H]);     f = jax.nn.sigmoid(gates[:, H:2 * H])
        g = jnp.tanh(gates[:, 2 * H:3 * H]);  o = jax.nn.sigmoid(gates[:, 3 * H:])
        c_u = f * c + i * g
        h_u = o * jnp.tanh(c_u)
        m = (t < lengths)[:, None]
        c = jnp.where(m, c_u, c)
        h = jnp.where(m, h_u, h)
        outs.append(jnp.where(m, h_u, 0.0))
    y = jnp.stack(outs, axis=1)

    def head(z):
        a = (z @ p["w1_t"].astype(jnp.float32)) + p["b1"]
        mu = a.mean(0, keepdims=True); var = ((a - mu) ** 2).mean(0, keepdims=True)
        a = jnp.maximum((a - mu) / jnp.sqrt(var + BN_EPS) * p["g1"] + p["be1"], 0.0)
        a = (a @ p["w2_t"].astype(jnp.float32)) + p["b2"]
        mu = a.mean(0, keepdims=True); var = ((a - mu) ** 2).mean(0, keepdims=True)
        a = jnp.maximum((a - mu) / jnp.sqrt(var + BN_EPS) * p["g2"] + p["be2"], 0.0)
        logits = (a @ p["w3_t"].astype(jnp.float32)) + p["b3"]
        return jax.nn.softmax(logits, axis=1)

    return [head(y[b]) for b in range(B)], h


# ----------------------------------------------------------------------------
if __name__ == "__main__":
    # Small shapes consistent with the module (linear1/2/3 sizes are hardcoded in it).
    B, T, INPUT_SIZE, HIDDEN = 4, 8, 16, 32
    D1, D2, C = 1024, 256, 11

    key = jax.random.PRNGKey(0)
    ks = jax.random.split(key, 16)

    def uni(k, shape, fan_in):
        bound = 1.0 / np.sqrt(fan_in)
        return jax.random.uniform(k, shape, jnp.float32, -bound, bound)

    # LSTM params (PyTorch layout: weight_ih (4H, I), weight_hh (4H, H), gate order i,f,g,o)
    w_ih = uni(ks[0], (4 * HIDDEN, INPUT_SIZE), HIDDEN)
    w_hh = uni(ks[1], (4 * HIDDEN, HIDDEN), HIDDEN)
    b_ih = uni(ks[2], (4 * HIDDEN,), HIDDEN)
    b_hh = uni(ks[3], (4 * HIDDEN,), HIDDEN)
    # Linear params (PyTorch layout: weight (out, in))
    w1 = uni(ks[4], (D1, HIDDEN), HIDDEN); b1 = uni(ks[5], (D1,), HIDDEN)
    w2 = uni(ks[6], (D2, D1), D1);         b2 = uni(ks[7], (D2,), D1)
    w3 = uni(ks[8], (C, D2), D2);          b3 = uni(ks[9], (C,), D2)
    # Non-trivial BN affine params (train mode uses batch stats, so these are just scale/shift)
    g1 = 1.0 + 0.1 * jax.random.normal(ks[11], (1, D1), jnp.float32)
    be1 = 0.1 * jax.random.normal(ks[12], (1, D1), jnp.float32)
    g2 = 1.0 + 0.1 * jax.random.normal(ks[13], (1, D2), jnp.float32)
    be2 = 0.1 * jax.random.normal(ks[14], (1, D2), jnp.float32)

    # Head weights stored in bf16 (halves HBM traffic; MXU-native on v6e/v7x).
    w1_t_bf = w1.T.astype(jnp.bfloat16)
    w2_t_bf = w2.T.astype(jnp.bfloat16)
    w3_t_bf = w3.T.astype(jnp.bfloat16)
    # Pad the classifier to a lane-dense 128-wide output; pad lanes get weight 0 and
    # bias -1e30 so their softmax probability is exactly 0.
    w3_t_pad = jnp.zeros((D2, CLASS_PAD), jnp.bfloat16).at[:, :C].set(w3_t_bf)
    b3_pad = jnp.full((1, CLASS_PAD), -1e30, jnp.float32).at[:, :C].set(b3.reshape(1, C))

    params = dict(
        wih_t=w_ih.T, whh_t=w_hh.T, b_lstm=(b_ih + b_hh).reshape(1, 4 * HIDDEN),
        w1_t=w1_t_bf, b1=b1.reshape(1, D1), g1=g1, be1=be1,
        w2_t=w2_t_bf, b2=b2.reshape(1, D2), g2=g2, be2=be2,
        w3_t=w3_t_bf, b3=b3.reshape(1, C),
        w3_t_pad=w3_t_pad, b3_pad=b3_pad, n_classes=C,
    )

    x = jax.random.normal(ks[10], (B, T, INPUT_SIZE), jnp.float32)
    # pack_padded_sequence (enforce_sorted=True) requires descending lengths.
    lengths = jnp.array([8, 7, 5, 3], dtype=jnp.int32)

    probs, hn = lstm_model_forward(x, lengths, params)
    jax.block_until_ready(probs)
    jax.block_until_ready(hn)

    ref_list, ref_hn = reference_forward(x, lengths, params)
    # LSTM recurrence is pure f32 in both paths -> tight tolerance.
    np.testing.assert_allclose(np.asarray(hn), np.asarray(ref_hn), rtol=1e-4, atol=1e-3)
    # Head uses bf16 dot inputs (f32 accumulation) + approx reciprocal; allow a few
    # 1e-3 on probabilities (semantic bugs would show up as O(1e-1) errors).
    probs_np = np.asarray(probs)
    for b, r_ref in enumerate(ref_list):
        np.testing.assert_allclose(probs_np[b], np.asarray(r_ref), rtol=1e-3, atol=5e-3)

    print("KERNEL_OK")
</pallas_src>

<mosaic_0001>
module attributes {stable_mosaic.version = 11 : i64} {
  func.func @fused_lstm_head_kernel(%arg0: memref<4x1xi32, #tpu.memory_space<vmem>>, %arg1: memref<32x16xf32, #tpu.memory_space<vmem>>, %arg2: memref<16x128xf32, #tpu.memory_space<vmem>>, %arg3: memref<32x128xf32, #tpu.memory_space<vmem>>, %arg4: memref<1x128xf32, #tpu.memory_space<vmem>>, %arg5: memref<32x1024xbf16, #tpu.memory_space<any>>, %arg6: memref<1x1024xf32, #tpu.memory_space<vmem>>, %arg7: memref<1x1024xf32, #tpu.memory_space<vmem>>, %arg8: memref<1x1024xf32, #tpu.memory_space<vmem>>, %arg9: memref<1024x256xbf16, #tpu.memory_space<any>>, %arg10: memref<1x256xf32, #tpu.memory_space<vmem>>, %arg11: memref<1x256xf32, #tpu.memory_space<vmem>>, %arg12: memref<1x256xf32, #tpu.memory_space<vmem>>, %arg13: memref<256x128xbf16, #tpu.memory_space<any>>, %arg14: memref<1x128xf32, #tpu.memory_space<vmem>>, %arg15: memref<4x8x128xf32, #tpu.memory_space<vmem>>, %arg16: memref<4x32xf32, #tpu.memory_space<vmem>>, %arg17: memref<32x1024xbf16, #tpu.memory_space<vmem>>, %arg18: memref<1024x256xbf16, #tpu.memory_space<vmem>>, %arg19: memref<256x128xbf16, #tpu.memory_space<vmem>>, %arg20: memref<4x8x32xf32, #tpu.memory_space<vmem>>, %arg21: memref<3x!tpu.dma_semaphore, #tpu.memory_space<semaphore_mem>>) attributes {dimension_semantics = [], scalar_prefetch = 0 : i64, scratch_operands = 5 : i64, tpu.core_type = #tpu.core_type<tc>} {
    %c0_i32 = arith.constant 0 : i32
    %0 = tpu.memref_slice %arg21[%c0_i32] : memref<3x!tpu.dma_semaphore, #tpu.memory_space<semaphore_mem>> -> memref<1x!tpu.dma_semaphore, #tpu.memory_space<semaphore_mem>>
    %1 = tpu.memref_squeeze %0 : memref<1x!tpu.dma_semaphore, #tpu.memory_space<semaphore_mem>> -> memref<!tpu.dma_semaphore, #tpu.memory_space<semaphore_mem>>
    tpu.enqueue_dma source(%arg5 : memref<32x1024xbf16, #tpu.memory_space<any>>) target(%arg17 : memref<32x1024xbf16, #tpu.memory_space<vmem>>) target_semaphore(%1 : memref<!tpu.dma_semaphore, #tpu.memory_space<semaphore_mem>>)
    %c1_i32 = arith.constant 1 : i32
    %2 = tpu.memref_slice %arg21[%c1_i32] : memref<3x!tpu.dma_semaphore, #tpu.memory_space<semaphore_mem>> -> memref<1x!tpu.dma_semaphore, #tpu.memory_space<semaphore_mem>>
    %3 = tpu.memref_squeeze %2 : memref<1x!tpu.dma_semaphore, #tpu.memory_space<semaphore_mem>> -> memref<!tpu.dma_semaphore, #tpu.memory_space<semaphore_mem>>
    tpu.enqueue_dma source(%arg9 : memref<1024x256xbf16, #tpu.memory_space<any>>) target(%arg18 : memref<1024x256xbf16, #tpu.memory_space<vmem>>) target_semaphore(%3 : memref<!tpu.dma_semaphore, #tpu.memory_space<semaphore_mem>>)
    %c2_i32 = arith.constant 2 : i32
    %4 = tpu.memref_slice %arg21[%c2_i32] : memref<3x!tpu.dma_semaphore, #tpu.memory_space<semaphore_mem>> -> memref<1x!tpu.dma_semaphore, #tpu.memory_space<semaphore_mem>>
    %5 = tpu.memref_squeeze %4 : memref<1x!tpu.dma_semaphore, #tpu.memory_space<semaphore_mem>> -> memref<!tpu.dma_semaphore, #tpu.memory_space<semaphore_mem>>
    tpu.enqueue_dma source(%arg13 : memref<256x128xbf16, #tpu.memory_space<any>>) target(%arg19 : memref<256x128xbf16, #tpu.memory_space<vmem>>) target_semaphore(%5 : memref<!tpu.dma_semaphore, #tpu.memory_space<semaphore_mem>>)
    %c0 = arith.constant 0 : index
    %c0_0 = arith.constant 0 : index
    %6 = vector.load %arg1[%c0, %c0_0] : memref<32x16xf32, #tpu.memory_space<vmem>>, vector<32x16xf32>
    %c0_1 = arith.constant 0 : index
    %c0_2 = arith.constant 0 : index
    %7 = vector.load %arg2[%c0_1, %c0_2] : memref<16x128xf32, #tpu.memory_space<vmem>>, vector<16x128xf32>
    %cst = arith.constant dense<0.000000e+00> : vector<32x128xf32>
    %8 = tpu.matmul %6, %7, %cst {dimension_numbers = #tpu.dot_dimension_numbers<[1], [0], [0], [1], [0, 0, 1, 1], [], []>} : vector<32x16xf32>, vector<16x128xf32>, vector<32x128xf32> -> vector<32x128xf32>
    %c0_3 = arith.constant 0 : index
    %c0_4 = arith.constant 0 : index
    %9 = vector.load %arg4[%c0_3, %c0_4] : memref<1x128xf32, #tpu.memory_space<vmem>>, vector<1x128xf32>
    %10 = vector.broadcast %9 : vector<1x128xf32> to vector<32x128xf32>
    %11 = arith.addf %8, %10 : vector<32x128xf32>
    %12 = vector.shape_cast %11 : vector<32x128xf32> to vector<4x8x128xf32>
    %c0_5 = arith.constant 0 : index
    %c0_6 = arith.constant 0 : index
    %13 = vector.load %arg0[%c0_5, %c0_6] : memref<4x1xi32, #tpu.memory_space<vmem>>, vector<4x1xi32>
    %c0_7 = arith.constant 0 : index
    %c0_8 = arith.constant 0 : index
    %14 = vector.load %arg3[%c0_7, %c0_8] : memref<32x128xf32, #tpu.memory_space<vmem>>, vector<32x128xf32>
    %cst_9 = arith.constant 0.000000e+00 : f32
    %15 = vector.broadcast %cst_9 : f32 to vector<4x32xf32>
    %cst_10 = arith.constant 0.000000e+00 : f32
    %16 = vector.broadcast %cst_10 : f32 to vector<4x32xf32>
    %17 = vector.extract_strided_slice %12 {offsets = [0, 0, 0], sizes = [4, 1, 128], strides = [1, 1, 1]} : vector<4x8x128xf32> to vector<4x1x128xf32>
    %18 = vector.shape_cast %17 : vector<4x1x128xf32> to vector<4x128xf32>
    %cst_11 = arith.constant dense<0.000000e+00> : vector<4x128xf32>
    %19 = tpu.matmul %15, %14, %cst_11 {dimension_numbers = #tpu.dot_dimension_numbers<[1], [0], [0], [1], [0, 0, 1, 1], [], []>} : vector<4x32xf32>, vector<32x128xf32>, vector<4x128xf32> -> vector<4x128xf32>
    %20 = arith.addf %18, %19 : vector<4x128xf32>
    %21 = arith.negf %20 : vector<4x128xf32>
    %22 = math.exp %21 : vector<4x128xf32>
    %cst_12 = arith.constant 1.000000e+00 : f32
    %23 = vector.broadcast %cst_12 : f32 to vector<4x128xf32>
    %24 = arith.addf %23, %22 : vector<4x128xf32>
    %25 = arith.divf %23, %24 : vector<4x128xf32>
    %26 = math.tanh %20 : vector<4x128xf32>
    %27 = vector.extract_strided_slice %25 {offsets = [0, 0], sizes = [4, 32], strides = [1, 1]} : vector<4x128xf32> to vector<4x32xf32>
    %28 = vector.extract_strided_slice %25 {offsets = [0, 32], sizes = [4, 32], strides = [1, 1]} : vector<4x128xf32> to vector<4x32xf32>
    %29 = vector.extract_strided_slice %25 {offsets = [0, 96], sizes = [4, 32], strides = [1, 1]} : vector<4x128xf32> to vector<4x32xf32>
    %30 = vector.extract_strided_slice %26 {offsets = [0, 64], sizes = [4, 32], strides = [1, 1]} : vector<4x128xf32> to vector<4x32xf32>
    %31 = arith.mulf %28, %16 : vector<4x32xf32>
    %32 = arith.mulf %27, %30 : vector<4x32xf32>
    %33 = arith.addf %31, %32 : vector<4x32xf32>
    %34 = math.tanh %33 : vector<4x32xf32>
    %35 = arith.mulf %29, %34 : vector<4x32xf32>
    %c0_i32_13 = arith.constant 0 : i32
    %36 = vector.broadcast %c0_i32_13 : i32 to vector<4x1xi32>
    %37 = arith.cmpi sgt, %13, %36 : vector<4x1xi32>
    %38 = vector.shape_cast %37 : vector<4x1xi1> to vector<4x1xi1>
    %39 = vector.broadcast %38 : vector<4x1xi1> to vector<4x32xi1>
    %40 = arith.select %39, %33, %16 : vector<4x32xi1>, vector<4x32xf32>
    %41 = vector.shape_cast %37 : vector<4x1xi1> to vector<4x1xi1>
    %42 = vector.broadcast %41 : vector<4x1xi1> to vector<4x32xi1>
    %43 = arith.select %42, %35, %15 : vector<4x32xi1>, vector<4x32xf32>
    %cst_14 = arith.constant 0.000000e+00 : f32
    %44 = vector.shape_cast %37 : vector<4x1xi1> to vector<4x1xi1>
    %45 = vector.broadcast %44 : vector<4x1xi1> to vector<4x32xi1>
    %46 = vector.broadcast %cst_14 : f32 to vector<4x32xf32>
    %47 = arith.select %45, %35, %46 : vector<4x32xi1>, vector<4x32xf32>
    %48 = vector.shape_cast %47 : vector<4x32xf32> to vector<4x1x32xf32>
    %c0_15 = arith.constant 0 : index
    %c0_16 = arith.constant 0 : index
    %c0_17 = arith.constant 0 : index
    %49 = vector.load %arg20[%c0_15, %c0_16, %c0_17] : memref<4x8x32xf32, #tpu.memory_space<vmem>>, vector<4x1x32xf32>
    tpu.vector_store %arg20[%c0_15, %c0_16, %c0_17], %48 {strides = array<i32>} : memref<4x8x32xf32, #tpu.memory_space<vmem>>, vector<4x1x32xf32>,
    %50 = vector.extract_strided_slice %12 {offsets = [0, 1, 0], sizes = [4, 1, 128], strides = [1, 1, 1]} : vector<4x8x128xf32> to vector<4x1x128xf32>
    %51 = vector.shape_cast %50 : vector<4x1x128xf32> to vector<4x128xf32>
    %cst_18 = arith.constant dense<0.000000e+00> : vector<4x128xf32>
    %52 = tpu.matmul %43, %14, %cst_18 {dimension_numbers = #tpu.dot_dimension_numbers<[1], [0], [0], [1], [0, 0, 1, 1], [], []>} : vector<4x32xf32>, vector<32x128xf32>, vector<4x128xf32> -> vector<4x128xf32>
    %53 = arith.addf %51, %52 : vector<4x128xf32>
    %54 = arith.negf %53 : vector<4x128xf32>
    %55 = math.exp %54 : vector<4x128xf32>
    %cst_19 = arith.constant 1.000000e+00 : f32
    %56 = vector.broadcast %cst_19 : f32 to vector<4x128xf32>
    %57 = arith.addf %56, %55 : vector<4x128xf32>
    %58 = arith.divf %56, %57 : vector<4x128xf32>
    %59 = math.tanh %53 : vector<4x128xf32>
    %60 = vector.extract_strided_slice %58 {offsets = [0, 0], sizes = [4, 32], strides = [1, 1]} : vector<4x128xf32> to vector<4x32xf32>
    %61 = vector.extract_strided_slice %58 {offsets = [0, 32], sizes = [4, 32], strides = [1, 1]} : vector<4x128xf32> to vector<4x32xf32>
    %62 = vector.extract_strided_slice %58 {offsets = [0, 96], sizes = [4, 32], strides = [1, 1]} : vector<4x128xf32> to vector<4x32xf32>
    %63 = vector.extract_strided_slice %59 {offsets = [0, 64], sizes = [4, 32], strides = [1, 1]} : vector<4x128xf32> to vector<4x32xf32>
    %64 = arith.mulf %61, %40 : vector<4x32xf32>
    %65 = arith.mulf %60, %63 : vector<4x32xf32>
    %66 = arith.addf %64, %65 : vector<4x32xf32>
    %67 = math.tanh %66 : vector<4x32xf32>
    %68 = arith.mulf %62, %67 : vector<4x32xf32>
    %c1_i32_20 = arith.constant 1 : i32
    %69 = vector.broadcast %c1_i32_20 : i32 to vector<4x1xi32>
    %70 = arith.cmpi sgt, %13, %69 : vector<4x1xi32>
    %71 = vector.shape_cast %70 : vector<4x1xi1> to vector<4x1xi1>
    %72 = vector.broadcast %71 : vector<4x1xi1> to vector<4x32xi1>
    %73 = arith.select %72, %66, %40 : vector<4x32xi1>, vector<4x32xf32>
    %74 = vector.shape_cast %70 : vector<4x1xi1> to vector<4x1xi1>
    %75 = vector.broadcast %74 : vector<4x1xi1> to vector<4x32xi1>
    %76 = arith.select %75, %68, %43 : vector<4x32xi1>, vector<4x32xf32>
    %cst_21 = arith.constant 0.000000e+00 : f32
    %77 = vector.shape_cast %70 : vector<4x1xi1> to vector<4x1xi1>
    %78 = vector.broadcast %77 : vector<4x1xi1> to vector<4x32xi1>
    %79 = vector.broadcast %cst_21 : f32 to vector<4x32xf32>
    %80 = arith.select %78, %68, %79 : vector<4x32xi1>, vector<4x32xf32>
    %81 = vector.shape_cast %80 : vector<4x32xf32> to vector<4x1x32xf32>
    %c0_22 = arith.constant 0 : index
    %c1 = arith.constant 1 : index
    %c0_23 = arith.constant 0 : index
    %82 = vector.load %arg20[%c0_22, %c1, %c0_23] : memref<4x8x32xf32, #tpu.memory_space<vmem>>, vector<4x1x32xf32>
    tpu.vector_store %arg20[%c0_22, %c1, %c0_23], %81 {strides = array<i32>} : memref<4x8x32xf32, #tpu.memory_space<vmem>>, vector<4x1x32xf32>,
    %83 = vector.extract_strided_slice %12 {offsets = [0, 2, 0], sizes = [4, 1, 128], strides = [1, 1, 1]} : vector<4x8x128xf32> to vector<4x1x128xf32>
    %84 = vector.shape_cast %83 : vector<4x1x128xf32> to vector<4x128xf32>
    %cst_24 = arith.constant dense<0.000000e+00> : vector<4x128xf32>
    %85 = tpu.matmul %76, %14, %cst_24 {dimension_numbers = #tpu.dot_dimension_numbers<[1], [0], [0], [1], [0, 0, 1, 1], [], []>} : vector<4x32xf32>, vector<32x128xf32>, vector<4x128xf32> -> vector<4x128xf32>
    %86 = arith.addf %84, %85 : vector<4x128xf32>
    %87 = arith.negf %86 : vector<4x128xf32>
    %88 = math.exp %87 : vector<4x128xf32>
    %cst_25 = arith.constant 1.000000e+00 : f32
    %89 = vector.broadcast %cst_25 : f32 to vector<4x128xf32>
    %90 = arith.addf %89, %88 : vector<4x128xf32>
    %91 = arith.divf %89, %90 : vector<4x128xf32>
    %92 = math.tanh %86 : vector<4x128xf32>
    %93 = vector.extract_strided_slice %91 {offsets = [0, 0], sizes = [4, 32], strides = [1, 1]} : vector<4x128xf32> to vector<4x32xf32>
    %94 = vector.extract_strided_slice %91 {offsets = [0, 32], sizes = [4, 32], strides = [1, 1]} : vector<4x128xf32> to vector<4x32xf32>
    %95 = vector.extract_strided_slice %91 {offsets = [0, 96], sizes = [4, 32], strides = [1, 1]} : vector<4x128xf32> to vector<4x32xf32>
    %96 = vector.extract_strided_slice %92 {offsets = [0, 64], sizes = [4, 32], strides = [1, 1]} : vector<4x128xf32> to vector<4x32xf32>
    %97 = arith.mulf %94, %73 : vector<4x32xf32>
    %98 = arith.mulf %93, %96 : vector<4x32xf32>
    %99 = arith.addf %97, %98 : vector<4x32xf32>
    %100 = math.tanh %99 : vector<4x32xf32>
    %101 = arith.mulf %95, %100 : vector<4x32xf32>
    %c2_i32_26 = arith.constant 2 : i32
    %102 = vector.broadcast %c2_i32_26 : i32 to vector<4x1xi32>
    %103 = arith.cmpi sgt, %13, %102 : vector<4x1xi32>
    %104 = vector.shape_cast %103 : vector<4x1xi1> to vector<4x1xi1>
    %105 = vector.broadcast %104 : vector<4x1xi1> to vector<4x32xi1>
    %106 = arith.select %105, %99, %73 : vector<4x32xi1>, vector<4x32xf32>
    %107 = vector.shape_cast %103 : vector<4x1xi1> to vector<4x1xi1>
    %108 = vector.broadcast %107 : vector<4x1xi1> to vector<4x32xi1>
    %109 = arith.select %108, %101, %76 : vector<4x32xi1>, vector<4x32xf32>
    %cst_27 = arith.constant 0.000000e+00 : f32
    %110 = vector.shape_cast %103 : vector<4x1xi1> to vector<4x1xi1>
    %111 = vector.broadcast %110 : vector<4x1xi1> to vector<4x32xi1>
    %112 = vector.broadcast %cst_27 : f32 to vector<4x32xf32>
    %113 = arith.select %111, %101, %112 : vector<4x32xi1>, vector<4x32xf32>
    %114 = vector.shape_cast %113 : vector<4x32xf32> to vector<4x1x32xf32>
    %c0_28 = arith.constant 0 : index
    %c2 = arith.constant 2 : index
    %c0_29 = arith.constant 0 : index
    %115 = vector.load %arg20[%c0_28, %c2, %c0_29] : memref<4x8x32xf32, #tpu.memory_space<vmem>>, vector<4x1x32xf32>
    tpu.vector_store %arg20[%c0_28, %c2, %c0_29], %114 {strides = array<i32>} : memref<4x8x32xf32, #tpu.memory_space<vmem>>, vector<4x1x32xf32>,
    %116 = vector.extract_strided_slice %12 {offsets = [0, 3, 0], sizes = [4, 1, 128], strides = [1, 1, 1]} : vector<4x8x128xf32> to vector<4x1x128xf32>
    %117 = vector.shape_cast %116 : vector<4x1x128xf32> to vector<4x128xf32>
    %cst_30 = arith.constant dense<0.000000e+00> : vector<4x128xf32>
    %118 = tpu.matmul %109, %14, %cst_30 {dimension_numbers = #tpu.dot_dimension_numbers<[1], [0], [0], [1], [0, 0, 1, 1], [], []>} : vector<4x32xf32>, vector<32x128xf32>, vector<4x128xf32> -> vector<4x128xf32>
    %119 = arith.addf %117, %118 : vector<4x128xf32>
    %120 = arith.negf %119 : vector<4x128xf32>
    %121 = math.exp %120 : vector<4x128xf32>
    %cst_31 = arith.constant 1.000000e+00 : f32
    %122 = vector.broadcast %cst_31 : f32 to vector<4x128xf32>
    %123 = arith.addf %122, %121 : vector<4x128xf32>
    %124 = arith.divf %122, %123 : vector<4x128xf32>
    %125 = math.tanh %119 : vector<4x128xf32>
    %126 = vector.extract_strided_slice %124 {offsets = [0, 0], sizes = [4, 32], strides = [1, 1]} : vector<4x128xf32> to vector<4x32xf32>
    %127 = vector.extract_strided_slice %124 {offsets = [0, 32], sizes = [4, 32], strides = [1, 1]} : vector<4x128xf32> to vector<4x32xf32>
    %128 = vector.extract_strided_slice %124 {offsets = [0, 96], sizes = [4, 32], strides = [1, 1]} : vector<4x128xf32> to vector<4x32xf32>
    %129 = vector.extract_strided_slice %125 {offsets = [0, 64], sizes = [4, 32], strides = [1, 1]} : vector<4x128xf32> to vector<4x32xf32>
    %130 = arith.mulf %127, %106 : vector<4x32xf32>
    %131 = arith.mulf %126, %129 : vector<4x32xf32>
    %132 = arith.addf %130, %131 : vector<4x32xf32>
    %133 = math.tanh %132 : vector<4x32xf32>
    %134 = arith.mulf %128, %133 : vector<4x32xf32>
    %c3_i32 = arith.constant 3 : i32
    %135 = vector.broadcast %c3_i32 : i32 to vector<4x1xi32>
    %136 = arith.cmpi sgt, %13, %135 : vector<4x1xi32>
    %137 = vector.shape_cast %136 : vector<4x1xi1> to vector<4x1xi1>
    %138 = vector.broadcast %137 : vector<4x1xi1> to vector<4x32xi1>
    %139 = arith.select %138, %132, %106 : vector<4x32xi1>, vector<4x32xf32>
    %140 = vector.shape_cast %136 : vector<4x1xi1> to vector<4x1xi1>
    %141 = vector.broadcast %140 : vector<4x1xi1> to vector<4x32xi1>
    %142 = arith.select %141, %134, %109 : vector<4x32xi1>, vector<4x32xf32>
    %cst_32 = arith.constant 0.000000e+00 : f32
    %143 = vector.shape_cast %136 : vector<4x1xi1> to vector<4x1xi1>
    %144 = vector.broadcast %143 : vector<4x1xi1> to vector<4x32xi1>
    %145 = vector.broadcast %cst_32 : f32 to vector<4x32xf32>
    %146 = arith.select %144, %134, %145 : vector<4x32xi1>, vector<4x32xf32>
    %147 = vector.shape_cast %146 : vector<4x32xf32> to vector<4x1x32xf32>
    %c0_33 = arith.constant 0 : index
    %c3 = arith.constant 3 : index
    %c0_34 = arith.constant 0 : index
    %148 = vector.load %arg20[%c0_33, %c3, %c0_34] : memref<4x8x32xf32, #tpu.memory_space<vmem>>, vector<4x1x32xf32>
    tpu.vector_store %arg20[%c0_33, %c3, %c0_34], %147 {strides = array<i32>} : memref<4x8x32xf32, #tpu.memory_space<vmem>>, vector<4x1x32xf32>,
    %149 = vector.extract_strided_slice %12 {offsets = [0, 4, 0], sizes = [4, 1, 128], strides = [1, 1, 1]} : vector<4x8x128xf32> to vector<4x1x128xf32>
    %150 = vector.shape_cast %149 : vector<4x1x128xf32> to vector<4x128xf32>
    %cst_35 = arith.constant dense<0.000000e+00> : vector<4x128xf32>
    %151 = tpu.matmul %142, %14, %cst_35 {dimension_numbers = #tpu.dot_dimension_numbers<[1], [0], [0], [1], [0, 0, 1, 1], [], []>} : vector<4x32xf32>, vector<32x128xf32>, vector<4x128xf32> -> vector<4x128xf32>
    %152 = arith.addf %150, %151 : vector<4x128xf32>
    %153 = arith.negf %152 : vector<4x128xf32>
    %154 = math.exp %153 : vector<4x128xf32>
    %cst_36 = arith.constant 1.000000e+00 : f32
    %155 = vector.broadcast %cst_36 : f32 to vector<4x128xf32>
    %156 = arith.addf %155, %154 : vector<4x128xf32>
    %157 = arith.divf %155, %156 : vector<4x128xf32>
    %158 = math.tanh %152 : vector<4x128xf32>
    %159 = vector.extract_strided_slice %157 {offsets = [0, 0], sizes = [4, 32], strides = [1, 1]} : vector<4x128xf32> to vector<4x32xf32>
    %160 = vector.extract_strided_slice %157 {offsets = [0, 32], sizes = [4, 32], strides = [1, 1]} : vector<4x128xf32> to vector<4x32xf32>
    %161 = vector.extract_strided_slice %157 {offsets = [0, 96], sizes = [4, 32], strides = [1, 1]} : vector<4x128xf32> to vector<4x32xf32>
    %162 = vector.extract_strided_slice %158 {offsets = [0, 64], sizes = [4, 32], strides = [1, 1]} : vector<4x128xf32> to vector<4x32xf32>
    %163 = arith.mulf %160, %139 : vector<4x32xf32>
    %164 = arith.mulf %159, %162 : vector<4x32xf32>
    %165 = arith.addf %163, %164 : vector<4x32xf32>
    %166 = math.tanh %165 : vector<4x32xf32>
    %167 = arith.mulf %161, %166 : vector<4x32xf32>
    %c4_i32 = arith.constant 4 : i32
    %168 = vector.broadcast %c4_i32 : i32 to vector<4x1xi32>
    %169 = arith.cmpi sgt, %13, %168 : vector<4x1xi32>
    %170 = vector.shape_cast %169 : vector<4x1xi1> to vector<4x1xi1>
    %171 = vector.broadcast %170 : vector<4x1xi1> to vector<4x32xi1>
    %172 = arith.select %171, %165, %139 : vector<4x32xi1>, vector<4x32xf32>
    %173 = vector.shape_cast %169 : vector<4x1xi1> to vector<4x1xi1>
    %174 = vector.broadcast %173 : vector<4x1xi1> to vector<4x32xi1>
    %175 = arith.select %174, %167, %142 : vector<4x32xi1>, vector<4x32xf32>
    %cst_37 = arith.constant 0.000000e+00 : f32
    %176 = vector.shape_cast %169 : vector<4x1xi1> to vector<4x1xi1>
    %177 = vector.broadcast %176 : vector<4x1xi1> to vector<4x32xi1>
    %178 = vector.broadcast %cst_37 : f32 to vector<4x32xf32>
    %179 = arith.select %177, %167, %178 : vector<4x32xi1>, vector<4x32xf32>
    %180 = vector.shape_cast %179 : vector<4x32xf32> to vector<4x1x32xf32>
    %c0_38 = arith.constant 0 : index
    %c4 = arith.constant 4 : index
    %c0_39 = arith.constant 0 : index
    %181 = vector.load %arg20[%c0_38, %c4, %c0_39] : memref<4x8x32xf32, #tpu.memory_space<vmem>>, vector<4x1x32xf32>
    tpu.vector_store %arg20[%c0_38, %c4, %c0_39], %180 {strides = array<i32>} : memref<4x8x32xf32, #tpu.memory_space<vmem>>, vector<4x1x32xf32>,
    %182 = vector.extract_strided_slice %12 {offsets = [0, 5, 0], sizes = [4, 1, 128], strides = [1, 1, 1]} : vector<4x8x128xf32> to vector<4x1x128xf32>
    %183 = vector.shape_cast %182 : vector<4x1x128xf32> to vector<4x128xf32>
    %cst_40 = arith.constant dense<0.000000e+00> : vector<4x128xf32>
    %184 = tpu.matmul %175, %14, %cst_40 {dimension_numbers = #tpu.dot_dimension_numbers<[1], [0], [0], [1], [0, 0, 1, 1], [], []>} : vector<4x32xf32>, vector<32x128xf32>, vector<4x128xf32> -> vector<4x128xf32>
    %185 = arith.addf %183, %184 : vector<4x128xf32>
    %186 = arith.negf %185 : vector<4x128xf32>
    %187 = math.exp %186 : vector<4x128xf32>
    %cst_41 = arith.constant 1.000000e+00 : f32
    %188 = vector.broadcast %cst_41 : f32 to vector<4x128xf32>
    %189 = arith.addf %188, %187 : vector<4x128xf32>
    %190 = arith.divf %188, %189 : vector<4x128xf32>
    %191 = math.tanh %185 : vector<4x128xf32>
    %192 = vector.extract_strided_slice %190 {offsets = [0, 0], sizes = [4, 32], strides = [1, 1]} : vector<4x128xf32> to vector<4x32xf32>
    %193 = vector.extract_strided_slice %190 {offsets = [0, 32], sizes = [4, 32], strides = [1, 1]} : vector<4x128xf32> to vector<4x32xf32>
    %194 = vector.extract_strided_slice %190 {offsets = [0, 96], sizes = [4, 32], strides = [1, 1]} : vector<4x128xf32> to vector<4x32xf32>
    %195 = vector.extract_strided_slice %191 {offsets = [0, 64], sizes = [4, 32], strides = [1, 1]} : vector<4x128xf32> to vector<4x32xf32>
    %196 = arith.mulf %193, %172 : vector<4x32xf32>
    %197 = arith.mulf %192, %195 : vector<4x32xf32>
    %198 = arith.addf %196, %197 : vector<4x32xf32>
    %199 = math.tanh %198 : vector<4x32xf32>
    %200 = arith.mulf %194, %199 : vector<4x32xf32>
    %c5_i32 = arith.constant 5 : i32
    %201 = vector.broadcast %c5_i32 : i32 to vector<4x1xi32>
    %202 = arith.cmpi sgt, %13, %201 : vector<4x1xi32>
    %203 = vector.shape_cast %202 : vector<4x1xi1> to vector<4x1xi1>
    %204 = vector.broadcast %203 : vector<4x1xi1> to vector<4x32xi1>
    %205 = arith.select %204, %198, %172 : vector<4x32xi1>, vector<4x32xf32>
    %206 = vector.shape_cast %202 : vector<4x1xi1> to vector<4x1xi1>
    %207 = vector.broadcast %206 : vector<4x1xi1> to vector<4x32xi1>
    %208 = arith.select %207, %200, %175 : vector<4x32xi1>, vector<4x32xf32>
    %cst_42 = arith.constant 0.000000e+00 : f32
    %209 = vector.shape_cast %202 : vector<4x1xi1> to vector<4x1xi1>
    %210 = vector.broadcast %209 : vector<4x1xi1> to vector<4x32xi1>
    %211 = vector.broadcast %cst_42 : f32 to vector<4x32xf32>
    %212 = arith.select %210, %200, %211 : vector<4x32xi1>, vector<4x32xf32>
    %213 = vector.shape_cast %212 : vector<4x32xf32> to vector<4x1x32xf32>
    %c0_43 = arith.constant 0 : index
    %c5 = arith.constant 5 : index
    %c0_44 = arith.constant 0 : index
    %214 = vector.load %arg20[%c0_43, %c5, %c0_44] : memref<4x8x32xf32, #tpu.memory_space<vmem>>, vector<4x1x32xf32>
    tpu.vector_store %arg20[%c0_43, %c5, %c0_44], %213 {strides = array<i32>} : memref<4x8x32xf32, #tpu.memory_space<vmem>>, vector<4x1x32xf32>,
    %215 = vector.extract_strided_slice %12 {offsets = [0, 6, 0], sizes = [4, 1, 128], strides = [1, 1, 1]} : vector<4x8x128xf32> to vector<4x1x128xf32>
    %216 = vector.shape_cast %215 : vector<4x1x128xf32> to vector<4x128xf32>
    %cst_45 = arith.constant dense<0.000000e+00> : vector<4x128xf32>
    %217 = tpu.matmul %208, %14, %cst_45 {dimension_numbers = #tpu.dot_dimension_numbers<[1], [0], [0], [1], [0, 0, 1, 1], [], []>} : vector<4x32xf32>, vector<32x128xf32>, vector<4x128xf32> -> vector<4x128xf32>
    %218 = arith.addf %216, %217 : vector<4x128xf32>
    %219 = arith.negf %218 : vector<4x128xf32>
    %220 = math.exp %219 : vector<4x128xf32>
    %cst_46 = arith.constant 1.000000e+00 : f32
    %221 = vector.broadcast %cst_46 : f32 to vector<4x128xf32>
    %222 = arith.addf %221, %220 : vector<4x128xf32>
    %223 = arith.divf %221, %222 : vector<4x128xf32>
    %224 = math.tanh %218 : vector<4x128xf32>
    %225 = vector.extract_strided_slice %223 {offsets = [0, 0], sizes = [4, 32], strides = [1, 1]} : vector<4x128xf32> to vector<4x32xf32>
    %226 = vector.extract_strided_slice %223 {offsets = [0, 32], sizes = [4, 32], strides = [1, 1]} : vector<4x128xf32> to vector<4x32xf32>
    %227 = vector.extract_strided_slice %223 {offsets = [0, 96], sizes = [4, 32], strides = [1, 1]} : vector<4x128xf32> to vector<4x32xf32>
    %228 = vector.extract_strided_slice %224 {offsets = [0, 64], sizes = [4, 32], strides = [1, 1]} : vector<4x128xf32> to vector<4x32xf32>
    %229 = arith.mulf %226, %205 : vector<4x32xf32>
    %230 = arith.mulf %225, %228 : vector<4x32xf32>
    %231 = arith.addf %229, %230 : vector<4x32xf32>
    %232 = math.tanh %231 : vector<4x32xf32>
    %233 = arith.mulf %227, %232 : vector<4x32xf32>
    %c6_i32 = arith.constant 6 : i32
    %234 = vector.broadcast %c6_i32 : i32 to vector<4x1xi32>
    %235 = arith.cmpi sgt, %13, %234 : vector<4x1xi32>
    %236 = vector.shape_cast %235 : vector<4x1xi1> to vector<4x1xi1>
    %237 = vector.broadcast %236 : vector<4x1xi1> to vector<4x32xi1>
    %238 = arith.select %237, %231, %205 : vector<4x32xi1>, vector<4x32xf32>
    %239 = vector.shape_cast %235 : vector<4x1xi1> to vector<4x1xi1>
    %240 = vector.broadcast %239 : vector<4x1xi1> to vector<4x32xi1>
    %241 = arith.select %240, %233, %208 : vector<4x32xi1>, vector<4x32xf32>
    %cst_47 = arith.constant 0.000000e+00 : f32
    %242 = vector.shape_cast %235 : vector<4x1xi1> to vector<4x1xi1>
    %243 = vector.broadcast %242 : vector<4x1xi1> to vector<4x32xi1>
    %244 = vector.broadcast %cst_47 : f32 to vector<4x32xf32>
    %245 = arith.select %243, %233, %244 : vector<4x32xi1>, vector<4x32xf32>
    %246 = vector.shape_cast %245 : vector<4x32xf32> to vector<4x1x32xf32>
    %c0_48 = arith.constant 0 : index
    %c6 = arith.constant 6 : index
    %c0_49 = arith.constant 0 : index
    %247 = vector.load %arg20[%c0_48, %c6, %c0_49] : memref<4x8x32xf32, #tpu.memory_space<vmem>>, vector<4x1x32xf32>
    tpu.vector_store %arg20[%c0_48, %c6, %c0_49], %246 {strides = array<i32>} : memref<4x8x32xf32, #tpu.memory_space<vmem>>, vector<4x1x32xf32>,
    %248 = vector.extract_strided_slice %12 {offsets = [0, 7, 0], sizes = [4, 1, 128], strides = [1, 1, 1]} : vector<4x8x128xf32> to vector<4x1x128xf32>
    %249 = vector.shape_cast %248 : vector<4x1x128xf32> to vector<4x128xf32>
    %cst_50 = arith.constant dense<0.000000e+00> : vector<4x128xf32>
    %250 = tpu.matmul %241, %14, %cst_50 {dimension_numbers = #tpu.dot_dimension_numbers<[1], [0], [0], [1], [0, 0, 1, 1], [], []>} : vector<4x32xf32>, vector<32x128xf32>, vector<4x128xf32> -> vector<4x128xf32>
    %251 = arith.addf %249, %250 : vector<4x128xf32>
    %252 = arith.negf %251 : vector<4x128xf32>
    %253 = math.exp %252 : vector<4x128xf32>
    %cst_51 = arith.constant 1.000000e+00 : f32
    %254 = vector.broadcast %cst_51 : f32 to vector<4x128xf32>
    %255 = arith.addf %254, %253 : vector<4x128xf32>
    %256 = arith.divf %254, %255 : vector<4x128xf32>
    %257 = math.tanh %251 : vector<4x128xf32>
    %258 = vector.extract_strided_slice %256 {offsets = [0, 0], sizes = [4, 32], strides = [1, 1]} : vector<4x128xf32> to vector<4x32xf32>
    %259 = vector.extract_strided_slice %256 {offsets = [0, 32], sizes = [4, 32], strides = [1, 1]} : vector<4x128xf32> to vector<4x32xf32>
    %260 = vector.extract_strided_slice %256 {offsets = [0, 96], sizes = [4, 32], strides = [1, 1]} : vector<4x128xf32> to vector<4x32xf32>
    %261 = vector.extract_strided_slice %257 {offsets = [0, 64], sizes = [4, 32], strides = [1, 1]} : vector<4x128xf32> to vector<4x32xf32>
    %262 = arith.mulf %259, %238 : vector<4x32xf32>
    %263 = arith.mulf %258, %261 : vector<4x32xf32>
    %264 = arith.addf %262, %263 : vector<4x32xf32>
    %265 = math.tanh %264 : vector<4x32xf32>
    %266 = arith.mulf %260, %265 : vector<4x32xf32>
    %c7_i32 = arith.constant 7 : i32
    %267 = vector.broadcast %c7_i32 : i32 to vector<4x1xi32>
    %268 = arith.cmpi sgt, %13, %267 : vector<4x1xi32>
    %269 = vector.shape_cast %268 : vector<4x1xi1> to vector<4x1xi1>
    %270 = vector.broadcast %269 : vector<4x1xi1> to vector<4x32xi1>
    %271 = arith.select %270, %266, %241 : vector<4x32xi1>, vector<4x32xf32>
    %cst_52 = arith.constant 0.000000e+00 : f32
    %272 = vector.shape_cast %268 : vector<4x1xi1> to vector<4x1xi1>
    %273 = vector.broadcast %272 : vector<4x1xi1> to vector<4x32xi1>
    %274 = vector.broadcast %cst_52 : f32 to vector<4x32xf32>
    %275 = arith.select %273, %266, %274 : vector<4x32xi1>, vector<4x32xf32>
    %276 = vector.shape_cast %275 : vector<4x32xf32> to vector<4x1x32xf32>
    %c0_53 = arith.constant 0 : index
    %c7 = arith.constant 7 : index
    %c0_54 = arith.constant 0 : index
    %277 = vector.load %arg20[%c0_53, %c7, %c0_54] : memref<4x8x32xf32, #tpu.memory_space<vmem>>, vector<4x1x32xf32>
    tpu.vector_store %arg20[%c0_53, %c7, %c0_54], %276 {strides = array<i32>} : memref<4x8x32xf32, #tpu.memory_space<vmem>>, vector<4x1x32xf32>,
    %c0_55 = arith.constant 0 : index
    %c0_56 = arith.constant 0 : index
    %278 = vector.load %arg16[%c0_55, %c0_56] : memref<4x32xf32, #tpu.memory_space<vmem>>, vector<4x32xf32>
    tpu.vector_store %arg16[%c0_55, %c0_56], %271 {strides = array<i32>} : memref<4x32xf32, #tpu.memory_space<vmem>>, vector<4x32xf32>,
    %c0_57 = arith.constant 0 : index
    %c0_58 = arith.constant 0 : index
    %c0_59 = arith.constant 0 : index
    %279 = vector.load %arg20[%c0_57, %c0_58, %c0_59] : memref<4x8x32xf32, #tpu.memory_space<vmem>>, vector<4x8x32xf32>
    %280 = vector.shape_cast %279 : vector<4x8x32xf32> to vector<32x32xf32>
    %c0_i32_60 = arith.constant 0 : i32
    %281 = tpu.memref_slice %arg21[%c0_i32_60] : memref<3x!tpu.dma_semaphore, #tpu.memory_space<semaphore_mem>> -> memref<1x!tpu.dma_semaphore, #tpu.memory_space<semaphore_mem>>
    %282 = tpu.memref_squeeze %281 : memref<1x!tpu.dma_semaphore, #tpu.memory_space<semaphore_mem>> -> memref<!tpu.dma_semaphore, #tpu.memory_space<semaphore_mem>>
    tpu.wait_dma2 semaphore(%282 : memref<!tpu.dma_semaphore, #tpu.memory_space<semaphore_mem>>) src(%arg5 : memref<32x1024xbf16, #tpu.memory_space<any>>) dst(%arg17 : memref<32x1024xbf16, #tpu.memory_space<vmem>>)
    %283 = arith.truncf %280 : vector<32x32xf32> to vector<32x32xbf16>
    %c0_61 = arith.constant 0 : index
    %c0_62 = arith.constant 0 : index
    %284 = vector.load %arg17[%c0_61, %c0_62] : memref<32x1024xbf16, #tpu.memory_space<vmem>>, vector<32x1024xbf16>
    %cst_63 = arith.constant dense<0.000000e+00> : vector<32x1024xf32>
    %285 = tpu.matmul %283, %284, %cst_63 {dimension_numbers = #tpu.dot_dimension_numbers<[1], [0], [0], [1], [0, 0, 1, 1], [], []>} : vector<32x32xbf16>, vector<32x1024xbf16>, vector<32x1024xf32> -> vector<32x1024xf32>
    %c0_64 = arith.constant 0 : index
    %c0_65 = arith.constant 0 : index
    %286 = vector.load %arg6[%c0_64, %c0_65] : memref<1x1024xf32, #tpu.memory_space<vmem>>, vector<1x1024xf32>
    %287 = vector.broadcast %286 : vector<1x1024xf32> to vector<32x1024xf32>
    %288 = arith.addf %285, %287 : vector<32x1024xf32>
    %c0_66 = arith.constant 0 : index
    %c0_67 = arith.constant 0 : index
    %289 = vector.load %arg7[%c0_66, %c0_67] : memref<1x1024xf32, #tpu.memory_space<vmem>>, vector<1x1024xf32>
    %c0_68 = arith.constant 0 : index
    %c0_69 = arith.constant 0 : index
    %290 = vector.load %arg8[%c0_68, %c0_69] : memref<1x1024xf32, #tpu.memory_space<vmem>>, vector<1x1024xf32>
    %291 = vector.shape_cast %288 : vector<32x1024xf32> to vector<4x8x1024xf32>
    %cst_70 = arith.constant dense<0.000000e+00> : vector<4x1024xf32>
    %292 = vector.multi_reduction <add>, %291, %cst_70 [1] : vector<4x8x1024xf32> to vector<4x1024xf32>
    %293 = vector.shape_cast %292 : vector<4x1024xf32> to vector<4x1x1024xf32>
    %cst_71 = arith.constant 1.250000e-01 : f32
    %294 = vector.broadcast %cst_71 : f32 to vector<4x1x1024xf32>
    %295 = arith.mulf %293, %294 : vector<4x1x1024xf32>
    %296 = arith.mulf %291, %291 : vector<4x8x1024xf32>
    %cst_72 = arith.constant dense<0.000000e+00> : vector<4x1024xf32>
    %297 = vector.multi_reduction <add>, %296, %cst_72 [1] : vector<4x8x1024xf32> to vector<4x1024xf32>
    %298 = vector.shape_cast %297 : vector<4x1024xf32> to vector<4x1x1024xf32>
    %cst_73 = arith.constant 1.250000e-01 : f32
    %299 = vector.broadcast %cst_73 : f32 to vector<4x1x1024xf32>
    %300 = arith.mulf %298, %299 : vector<4x1x1024xf32>
    %301 = arith.mulf %295, %295 : vector<4x1x1024xf32>
    %302 = arith.subf %300, %301 : vector<4x1x1024xf32>
    %cst_74 = arith.constant 9.99999974E-6 : f32
    %303 = vector.broadcast %cst_74 : f32 to vector<4x1x1024xf32>
    %304 = arith.addf %302, %303 : vector<4x1x1024xf32>
    %305 = math.rsqrt %304 : vector<4x1x1024xf32>
    %306 = vector.shape_cast %289 : vector<1x1024xf32> to vector<1x1x1024xf32>
    %307 = vector.broadcast %306 : vector<1x1x1024xf32> to vector<4x1x1024xf32>
    %308 = arith.mulf %307, %305 : vector<4x1x1024xf32>
    %309 = arith.mulf %295, %308 : vector<4x1x1024xf32>
    %310 = vector.shape_cast %290 : vector<1x1024xf32> to vector<1x1x1024xf32>
    %311 = vector.broadcast %310 : vector<1x1x1024xf32> to vector<4x1x1024xf32>
    %312 = arith.subf %311, %309 : vector<4x1x1024xf32>
    %313 = vector.broadcast %308 : vector<4x1x1024xf32> to vector<4x8x1024xf32>
    %314 = arith.mulf %291, %313 : vector<4x8x1024xf32>
    %315 = vector.broadcast %312 : vector<4x1x1024xf32> to vector<4x8x1024xf32>
    %316 = arith.addf %314, %315 : vector<4x8x1024xf32>
    %cst_75 = arith.constant 0.000000e+00 : f32
    %317 = vector.broadcast %cst_75 : f32 to vector<4x8x1024xf32>
    %318 = arith.maximumf %316, %317 : vector<4x8x1024xf32>
    %319 = vector.shape_cast %318 : vector<4x8x1024xf32> to vector<32x1024xf32>
    %c1_i32_76 = arith.constant 1 : i32
    %320 = tpu.memref_slice %arg21[%c1_i32_76] : memref<3x!tpu.dma_semaphore, #tpu.memory_space<semaphore_mem>> -> memref<1x!tpu.dma_semaphore, #tpu.memory_space<semaphore_mem>>
    %321 = tpu.memref_squeeze %320 : memref<1x!tpu.dma_semaphore, #tpu.memory_space<semaphore_mem>> -> memref<!tpu.dma_semaphore, #tpu.memory_space<semaphore_mem>>
    tpu.wait_dma2 semaphore(%321 : memref<!tpu.dma_semaphore, #tpu.memory_space<semaphore_mem>>) src(%arg9 : memref<1024x256xbf16, #tpu.memory_space<any>>) dst(%arg18 : memref<1024x256xbf16, #tpu.memory_space<vmem>>)
    %322 = arith.truncf %319 : vector<32x1024xf32> to vector<32x1024xbf16>
    %c0_77 = arith.constant 0 : index
    %c0_78 = arith.constant 0 : index
    %323 = vector.load %arg18[%c0_77, %c0_78] : memref<1024x256xbf16, #tpu.memory_space<vmem>>, vector<1024x256xbf16>
    %cst_79 = arith.constant dense<0.000000e+00> : vector<32x256xf32>
    %324 = tpu.matmul %322, %323, %cst_79 {dimension_numbers = #tpu.dot_dimension_numbers<[1], [0], [0], [1], [0, 0, 1, 1], [], []>} : vector<32x1024xbf16>, vector<1024x256xbf16>, vector<32x256xf32> -> vector<32x256xf32>
    %c0_80 = arith.constant 0 : index
    %c0_81 = arith.constant 0 : index
    %325 = vector.load %arg10[%c0_80, %c0_81] : memref<1x256xf32, #tpu.memory_space<vmem>>, vector<1x256xf32>
    %326 = vector.broadcast %325 : vector<1x256xf32> to vector<32x256xf32>
    %327 = arith.addf %324, %326 : vector<32x256xf32>
    %c0_82 = arith.constant 0 : index
    %c0_83 = arith.constant 0 : index
    %328 = vector.load %arg11[%c0_82, %c0_83] : memref<1x256xf32, #tpu.memory_space<vmem>>, vector<1x256xf32>
    %c0_84 = arith.constant 0 : index
    %c0_85 = arith.constant 0 : index
    %329 = vector.load %arg12[%c0_84, %c0_85] : memref<1x256xf32, #tpu.memory_space<vmem>>, vector<1x256xf32>
    %330 = vector.shape_cast %327 : vector<32x256xf32> to vector<4x8x256xf32>
    %cst_86 = arith.constant dense<0.000000e+00> : vector<4x256xf32>
    %331 = vector.multi_reduction <add>, %330, %cst_86 [1] : vector<4x8x256xf32> to vector<4x256xf32>
    %332 = vector.shape_cast %331 : vector<4x256xf32> to vector<4x1x256xf32>
    %cst_87 = arith.constant 1.250000e-01 : f32
    %333 = vector.broadcast %cst_87 : f32 to vector<4x1x256xf32>
    %334 = arith.mulf %332, %333 : vector<4x1x256xf32>
    %335 = arith.mulf %330, %330 : vector<4x8x256xf32>
    %cst_88 = arith.constant dense<0.000000e+00> : vector<4x256xf32>
    %336 = vector.multi_reduction <add>, %335, %cst_88 [1] : vector<4x8x256xf32> to vector<4x256xf32>
    %337 = vector.shape_cast %336 : vector<4x256xf32> to vector<4x1x256xf32>
    %cst_89 = arith.constant 1.250000e-01 : f32
    %338 = vector.broadcast %cst_89 : f32 to vector<4x1x256xf32>
    %339 = arith.mulf %337, %338 : vector<4x1x256xf32>
    %340 = arith.mulf %334, %334 : vector<4x1x256xf32>
    %341 = arith.subf %339, %340 : vector<4x1x256xf32>
    %cst_90 = arith.constant 9.99999974E-6 : f32
    %342 = vector.broadcast %cst_90 : f32 to vector<4x1x256xf32>
    %343 = arith.addf %341, %342 : vector<4x1x256xf32>
    %344 = math.rsqrt %343 : vector<4x1x256xf32>
    %345 = vector.shape_cast %328 : vector<1x256xf32> to vector<1x1x256xf32>
    %346 = vector.broadcast %345 : vector<1x1x256xf32> to vector<4x1x256xf32>
    %347 = arith.mulf %346, %344 : vector<4x1x256xf32>
    %348 = arith.mulf %334, %347 : vector<4x1x256xf32>
    %349 = vector.shape_cast %329 : vector<1x256xf32> to vector<1x1x256xf32>
    %350 = vector.broadcast %349 : vector<1x1x256xf32> to vector<4x1x256xf32>
    %351 = arith.subf %350, %348 : vector<4x1x256xf32>
    %352 = vector.broadcast %347 : vector<4x1x256xf32> to vector<4x8x256xf32>
    %353 = arith.mulf %330, %352 : vector<4x8x256xf32>
    %354 = vector.broadcast %351 : vector<4x1x256xf32> to vector<4x8x256xf32>
    %355 = arith.addf %353, %354 : vector<4x8x256xf32>
    %cst_91 = arith.constant 0.000000e+00 : f32
    %356 = vector.broadcast %cst_91 : f32 to vector<4x8x256xf32>
    %357 = arith.maximumf %355, %356 : vector<4x8x256xf32>
    %358 = vector.shape_cast %357 : vector<4x8x256xf32> to vector<32x256xf32>
    %c2_i32_92 = arith.constant 2 : i32
    %359 = tpu.memref_slice %arg21[%c2_i32_92] : memref<3x!tpu.dma_semaphore, #tpu.memory_space<semaphore_mem>> -> memref<1x!tpu.dma_semaphore, #tpu.memory_space<semaphore_mem>>
    %360 = tpu.memref_squeeze %359 : memref<1x!tpu.dma_semaphore, #tpu.memory_space<semaphore_mem>> -> memref<!tpu.dma_semaphore, #tpu.memory_space<semaphore_mem>>
    tpu.wait_dma2 semaphore(%360 : memref<!tpu.dma_semaphore, #tpu.memory_space<semaphore_mem>>) src(%arg13 : memref<256x128xbf16, #tpu.memory_space<any>>) dst(%arg19 : memref<256x128xbf16, #tpu.memory_space<vmem>>)
    %361 = arith.truncf %358 : vector<32x256xf32> to vector<32x256xbf16>
    %c0_93 = arith.constant 0 : index
    %c0_94 = arith.constant 0 : index
    %362 = vector.load %arg19[%c0_93, %c0_94] : memref<256x128xbf16, #tpu.memory_space<vmem>>, vector<256x128xbf16>
    %cst_95 = arith.constant dense<0.000000e+00> : vector<32x128xf32>
    %363 = tpu.matmul %361, %362, %cst_95 {dimension_numbers = #tpu.dot_dimension_numbers<[1], [0], [0], [1], [0, 0, 1, 1], [], []>} : vector<32x256xbf16>, vector<256x128xbf16>, vector<32x128xf32> -> vector<32x128xf32>
    %c0_96 = arith.constant 0 : index
    %c0_97 = arith.constant 0 : index
    %364 = vector.load %arg14[%c0_96, %c0_97] : memref<1x128xf32, #tpu.memory_space<vmem>>, vector<1x128xf32>
    %365 = vector.broadcast %364 : vector<1x128xf32> to vector<32x128xf32>
    %366 = arith.addf %363, %365 : vector<32x128xf32>
    %cst_98 = arith.constant dense<0xFF800000> : vector<32xf32>
    %367 = vector.multi_reduction <maximumf>, %366, %cst_98 [1] : vector<32x128xf32> to vector<32xf32>
    %368 = vector.shape_cast %367 : vector<32xf32> to vector<32x1xf32>
    %369 = vector.broadcast %368 : vector<32x1xf32> to vector<32x128xf32>
    %370 = arith.subf %366, %369 : vector<32x128xf32>
    %371 = math.exp %370 : vector<32x128xf32>
    %cst_99 = arith.constant dense<0.000000e+00> : vector<32xf32>
    %372 = vector.multi_reduction <add>, %371, %cst_99 [1] : vector<32x128xf32> to vector<32xf32>
    %373 = vector.shape_cast %372 : vector<32xf32> to vector<32x1xf32>
    %374 = tpu.reciprocal %373 {approx = true} : vector<32x1xf32> -> vector<32x1xf32>
    %375 = vector.broadcast %374 : vector<32x1xf32> to vector<32x128xf32>
    %376 = arith.mulf %371, %375 : vector<32x128xf32>
    %377 = vector.shape_cast %376 : vector<32x128xf32> to vector<4x8x128xf32>
    %c0_100 = arith.constant 0 : index
    %c0_101 = arith.constant 0 : index
    %c0_102 = arith.constant 0 : index
    %378 = vector.load %arg15[%c0_100, %c0_101, %c0_102] : memref<4x8x128xf32, #tpu.memory_space<vmem>>, vector<4x8x128xf32>
    tpu.vector_store %arg15[%c0_100, %c0_101, %c0_102], %377 {strides = array<i32>} : memref<4x8x128xf32, #tpu.memory_space<vmem>>, vector<4x8x128xf32>,
    return
  }
}

</mosaic_0001>

<llo_original>
// kernel: tpu_custom_call.1
$region0: #{tpu_custom_call.1}
  #allocation0 [shape = 'u32[]', space=smem, size = 0x4, offset = 0x4, fixed_abs, tag = 'smem constant byte address 0x4 - core index']
  #allocation1 [shape = 'u32[144,128]{1,0:T(1,128)}', space=vmem, size = 0x12000, scoped, tag = 'internal scratch']
  #allocation2 [shape = 'bf16[32,1024]{1,0:T(8,128)(2,1)}', space=vmem, size = 0x10000, scoped, tag = 'scratch operand']
  #allocation3 [shape = 'bf16[1024,256]{1,0:T(8,128)(2,1)}', space=vmem, size = 0x80000, scoped, tag = 'scratch operand']
  #allocation4 [shape = 'bf16[256,128]{1,0:T(8,128)(2,1)}', space=vmem, size = 0x10000, scoped, tag = 'scratch operand']
  #allocation5 [shape = 'f32[4,8,32]{2,1,0:T(8,128)}', space=vmem, size = 0x4000, scoped, tag = 'scratch operand']
  #allocation6 [shape = 's32[3]{0}', space=sflag, size = 0xc, scoped, tag = 'scratch operand']
  #allocation13 [shape = 's32[]', space=sflag, size = 0x4, offset = 0, fixed_abs, tag = 'sflag constant byte address 0x0 - dummy sync flag']
  #allocation14 [shape = 's32[]', space=sflag, size = 0x4, offset = 0, fixed_abs, tag = 'sflag constant byte address 0x0 - dummy sync flag']
  #allocation15 [shape = 'u32[]', space=smem, size = 0x4, offset = 0x44, fixed_abs, tag = 'smem constant byte address 0x44 - assertion arg 0']
  #allocation16 [shape = 'u32[]', space=smem, size = 0x4, offset = 0x48, fixed_abs, tag = 'smem constant byte address 0x48 - assertion arg 1']
  #allocation17 [shape = 's32[]', space=sflag, size = 0x4, offset = 0, fixed_abs, tag = 'sflag constant byte address 0x0 - dummy sync flag']
  #allocation18 [shape = 's32[]', space=sflag, size = 0x4, offset = 0, fixed_abs, tag = 'sflag constant byte address 0x0 - dummy sync flag']
  #allocation19 [shape = 's32[]', space=sflag, size = 0x4, offset = 0, fixed_abs, tag = 'sflag constant byte address 0x0 - dummy sync flag']
  #allocation20 [shape = 's32[]', space=sflag, size = 0x4, offset = 0, fixed_abs, tag = 'sflag constant byte address 0x0 - dummy sync flag']
  %s0 = inlined_call_operand.vmem [shape: s32[4,1], index: 0, kind: input, shape index: {}]
  %s1 = inlined_call_operand.vmem [shape: f32[32,16], index: 1, kind: input, shape index: {}]
  %s2 = inlined_call_operand.vmem [shape: f32[16,128], index: 2, kind: input, shape index: {}]
  %s3 = inlined_call_operand.vmem [shape: f32[32,128], index: 3, kind: input, shape index: {}]
  %s4 = inlined_call_operand.vmem [shape: f32[1,128], index: 4, kind: input, shape index: {}]
  %s5 = inlined_call_operand.hbm [shape: bf16[32,1024], index: 5, kind: input, shape index: {}]
  %s6 = inlined_call_operand.vmem [shape: f32[1,1024], index: 6, kind: input, shape index: {}]
  %s7 = inlined_call_operand.vmem [shape: f32[1,1024], index: 7, kind: input, shape index: {}]
  %s8 = inlined_call_operand.hbm [shape: f32[1,1024], index: 8, kind: input, shape index: {}]
  %s9 = inlined_call_operand.hbm [shape: bf16[1024,256], index: 9, kind: input, shape index: {}]
  %s10 = inlined_call_operand.vmem [shape: f32[1,256], index: 10, kind: input, shape index: {}]
  %s11 = inlined_call_operand.vmem [shape: f32[1,256], index: 11, kind: input, shape index: {}]
  %s12 = inlined_call_operand.vmem [shape: f32[1,256], index: 12, kind: input, shape index: {}]
  %s13 = inlined_call_operand.hbm [shape: bf16[256,128], index: 13, kind: input, shape index: {}]
  %s14 = inlined_call_operand.vmem [shape: f32[1,128], index: 14, kind: input, shape index: {}]
  %s15 = inlined_call_operand.hbm [shape: f32[4,8,128], index: 15, kind: output, shape index: {0}]
  %s16 = inlined_call_operand.hbm [shape: f32[4,32], index: 16, kind: output, shape index: {1}]
  %17 = xla_tuple %s15, %s16
  %s18 = sld [smem:[#allocation0]]
  $region82: #{tpu_custom_call.1} parent=0
    _
  %s20 = ssub.s32 1, %s18
  %s21 = scalar_select 0, %s20, %s18
  $region1: #{tpu_custom_call.1} parent=0
    #allocation7 [shape = 'u8[4096]{0}', space=vmem, size = 0x1000, scoped, tag = 'input window, operand 8, single buffered']
    #allocation8 [shape = 's32[1]{0}', space=sflag, size = 0x4, scoped, tag = 'scoped memory for tpu_custom_call.1']
    #allocation9 [shape = 's32[1]{0}', space=sflag, size = 0x4, scoped, tag = 'scoped memory for tpu_custom_call.1']
    #allocation10 [shape = 'u8[16384]{0}', space=vmem, size = 0x4000, scoped, tag = 'output window, operand 0, single buffered']
    #allocation11 [shape = 'u8[2048]{0}', space=vmem, size = 0x800, scoped, tag = 'output window, operand 1, single buffered']
    #allocation12 [shape = 's32[1]{0}', space=sflag, size = 0x4, scoped, tag = 'scoped memory for tpu_custom_call.1']
    %22 = vsyncpa [#allocation8], 0
    %23 = vsyncpa [#allocation9], 0
    %24 = vsyncpa [#allocation12], 0
    // Predicated region
    $region2: #{tpu_custom_call.1} parent=1 // pred_check
      _
    $region3: #{tpu_custom_call.1} parent=1 // pred_check_branch
      %26 = sbr.rel (0) target = $region5
    $region4: #{tpu_custom_call.1} parent=1 // pred_region
      _
    $region5: #{tpu_custom_call.1} parent=1 // pred_fallthru
      _
    // Predicated region
    $region6: #{tpu_custom_call.1} parent=1 // pred_check
      _
    $region7: #{tpu_custom_call.1} parent=1 // pred_check_branch
      %28 = sbr.rel (0) target = $region9
    $region8: #{tpu_custom_call.1} parent=1 // pred_region
      _
    $region9: #{tpu_custom_call.1} parent=1 // pred_fallthru
      _
    // Predicated region
    $region10: #{tpu_custom_call.1} parent=1 // pred_check
      _
    $region11: #{tpu_custom_call.1} parent=1 // pred_check_branch
      %30 = sbr.rel (0) target = $region13
    $region12: #{tpu_custom_call.1} parent=1 // pred_region
      _
    $region13: #{tpu_custom_call.1} parent=1 // pred_fallthru
      _
    // Predicated region
    $region14: #{tpu_custom_call.1} parent=1 // pred_check
      _
    $region15: #{tpu_custom_call.1} parent=1 // pred_check_branch
      %32 = sbr.rel (0) target = $region17
    $region16: #{tpu_custom_call.1} parent=1 // pred_region
      _
    $region17: #{tpu_custom_call.1} parent=1 // pred_fallthru
      _
    // Predicated region
    $region18: #{tpu_custom_call.1} parent=1 // pred_check
      _
    $region19: #{tpu_custom_call.1} parent=1 // pred_check_branch
      %34 = sbr.rel (0) target = $region21
    $region20: #{tpu_custom_call.1} parent=1 // pred_region
      _
    $region21: #{tpu_custom_call.1} parent=1 // pred_fallthru
      _
    // Predicated region
    $region22: #{tpu_custom_call.1} parent=1 // pred_check
      _
    $region23: #{tpu_custom_call.1} parent=1 // pred_check_branch
      %36 = sbr.rel (0) target = $region25
    $region24: #{tpu_custom_call.1} parent=1 // pred_region
      _
    $region25: #{tpu_custom_call.1} parent=1 // pred_fallthru
      _
    // Predicated region
    $region26: #{tpu_custom_call.1} parent=1 // pred_check
      _
    $region27: #{tpu_custom_call.1} parent=1 // pred_check_branch
      %38 = sbr.rel (0) target = $region29
    $region28: #{tpu_custom_call.1} parent=1 // pred_region
      _
    $region29: #{tpu_custom_call.1} parent=1 // pred_fallthru
      _
    // Predicated region
    $region30: #{tpu_custom_call.1} parent=1 // pred_check
      _
    $region31: #{tpu_custom_call.1} parent=1 // pred_check_branch
      %40 = sbr.rel (0) target = $region33
    $region32: #{tpu_custom_call.1} parent=1 // pred_region
      %s42 = ssub.s32 128, 128
      %43 = vsyncadd [#allocation8], %s42
      %s45 = sshll.u32 [#allocation7], 4
      %s46 = int_to_ptr.vmem [resolvable:$true] %s45
      %48 = dma.hbm_to_vmem [thread:$0]  %s8, 128, %s46, [#allocation8]
    $region33: #{tpu_custom_call.1} parent=1 // pred_fallthru
      _
    // Predicated region
    $region34: #{tpu_custom_call.1} parent=1 // pred_check
      _
    $region35: #{tpu_custom_call.1} parent=1 // pred_check_branch
      %50 = sbr.rel (0) target = $region37
    $region36: #{tpu_custom_call.1} parent=1 // pred_region
      _
    $region37: #{tpu_custom_call.1} parent=1 // pred_fallthru
      _
    // Predicated region
    $region38: #{tpu_custom_call.1} parent=1 // pred_check
      _
    $region39: #{tpu_custom_call.1} parent=1 // pred_check_branch
      %52 = sbr.rel (0) target = $region41
    $region40: #{tpu_custom_call.1} parent=1 // pred_region
      _
    $region41: #{tpu_custom_call.1} parent=1 // pred_fallthru
      _
    // Predicated region
    $region42: #{tpu_custom_call.1} parent=1 // pred_check
      _
    $region43: #{tpu_custom_call.1} parent=1 // pred_check_branch
      %54 = sbr.rel (0) target = $region45
    $region44: #{tpu_custom_call.1} parent=1 // pred_region
      _
    $region45: #{tpu_custom_call.1} parent=1 // pred_fallthru
      _
    // Predicated region
    $region46: #{tpu_custom_call.1} parent=1 // pred_check
      _
    $region47: #{tpu_custom_call.1} parent=1 // pred_check_branch
      %56 = sbr.rel (0) target = $region49
    $region48: #{tpu_custom_call.1} parent=1 // pred_region
      _
    $region49: #{tpu_custom_call.1} parent=1 // pred_fallthru
      _
    // Predicated region
    $region50: #{tpu_custom_call.1} parent=1 // pred_check
      _
    $region51: #{tpu_custom_call.1} parent=1 // pred_check_branch
      %58 = sbr.rel (0) target = $region53
    $region52: #{tpu_custom_call.1} parent=1 // pred_region
      %59 = dma.done [#allocation8], 128
    $region53: #{tpu_custom_call.1} parent=1 // pred_fallthru
      _
    // Predicated region
    $region54: #{tpu_custom_call.1} parent=1 // pred_check
      _
    $region55: #{tpu_custom_call.1} parent=1 // pred_check_branch
      %62 = sbr.rel target = $region57
    $region56: #{tpu_custom_call.1} parent=1 // pred_region
      %63 = sst [smem:[#allocation15]] [#allocation14]
      %64 = sst [smem:[#allocation16]] [#allocation13]
    $region57: #{tpu_custom_call.1} parent=1 // pred_fallthru
      _
    %66 = shalt.err (0)
    %s68 = sshll.u32 [#allocation2], 4
    %s69 = int_to_ptr.vmem [resolvable:$true] %s68
    %71 = dma.hbm_to_vmem [thread:$0]  %s5, 2048, %s69, [#allocation6]
    %s72 = scalar_lea.sflag [#allocation6], 1
    // Predicated region
    $region58: #{tpu_custom_call.1} parent=1 // pred_check
      _
    $region59: #{tpu_custom_call.1} parent=1 // pred_check_branch
      %74 = sbr.rel target = $region61
    $region60: #{tpu_custom_call.1} parent=1 // pred_region
      %75 = sst [smem:[#allocation15]] [#allocation18]
      %76 = sst [smem:[#allocation16]] [#allocation17]
    $region61: #{tpu_custom_call.1} parent=1 // pred_fallthru
      _
    %78 = shalt.err (0)
    %s80 = sshll.u32 [#allocation3], 4
    %s81 = int_to_ptr.vmem [resolvable:$true] %s80
    %83 = dma.hbm_to_vmem [thread:$0]  %s9, 16384, %s81, %s72
    %s84 = scalar_lea.sflag [#allocation6], 2
    // Predicated region
    $region62: #{tpu_custom_call.1} parent=1 // pred_check
      _
    $region63: #{tpu_custom_call.1} parent=1 // pred_check_branch
      %86 = sbr.rel target = $region65
    $region64: #{tpu_custom_call.1} parent=1 // pred_region
      %87 = sst [smem:[#allocation15]] [#allocation20]
      %88 = sst [smem:[#allocation16]] [#allocation19]
    $region65: #{tpu_custom_call.1} parent=1 // pred_fallthru
      _
    %90 = shalt.err (0)
    %s92 = sshll.u32 [#allocation4], 4
    %s93 = int_to_ptr.vmem [resolvable:$true] %s92
    %95 = dma.hbm_to_vmem [thread:$0]  %s13, 2048, %s93, %s84
    %v96 = vld [vmem:[%s1] sm:$0xff]
    %v97 = vld [vmem:[%s1 + $0x8] sm:$0xff]
    %v98 = vld [vmem:[%s1 + $0x10] sm:$0xff]
    %v99 = vld [vmem:[%s1 + $0x18] sm:$0xff]
    %v100 = vld [vmem:[%s2] sm:$0xff]
    %v101 = vld [vmem:[%s2 + $0x8] sm:$0xff]
    %v102 = vld [vmem:[%s4] sm:$0x1]
    %v104 = vlaneseq
    %v105 = vshrl.u32 %v104, 7
    %v106 = vsub.s32 0, %v105
    %v107 = vrot.slane %v102, %v106
    %vm109 = vcmask 130048
    %v111 = vsel %vm109, %v96, 0
    %v114 = vsel %vm109, %v97, 0
    %v117 = vsel %vm109, %v98, 0
    %v120 = vsel %vm109, %v99, 0
    %122 = vmatprep.subr.mxu0 0.0
    %123 = vmatpush1.msra.mxu0 0.0
    %124 = vmatprep.subr.mxu0 0.0
    %125 = vmatpush1.msra.mxu0 0.0
    %126 = vmatprep.subr.mxu0 0.0
    %127 = vmatpush1.msra.mxu0 0.0
    %128 = vmatprep.subr.mxu0 0.0
    %129 = vmatpush1.msra.mxu0 0.0
    %130 = vmatprep.subr.mxu0 0.0
    %131 = vmatpush1.msra.mxu0 0.0
    %132 = vmatprep.subr.mxu0 0.0
    %133 = vmatpush1.msra.mxu0 0.0
    %134 = vmatprep.subr.mxu0 0.0
    %135 = vmatpush1.msra.mxu0 0.0
    %136 = vmatprep.subr.mxu0 0.0
    %137 = vmatpush1.msra.mxu0 0.0
    %138 = vmatprep.subr.mxu0 0.0
    %139 = vmatpush1.msra.mxu0 0.0
    %140 = vmatprep.subr.mxu0 0.0
    %141 = vmatpush1.msra.mxu0 0.0
    %142 = vmatprep.subr.mxu0 0.0
    %143 = vmatpush1.msra.mxu0 0.0
    %144 = vmatprep.subr.mxu0 0.0
    %145 = vmatpush1.msra.mxu0 0.0
    %146 = vmatprep.subr.mxu0 0.0
    %147 = vmatpush1.msra.mxu0 0.0
    %148 = vmatprep.subr.mxu0 0.0
    %149 = vmatpush1.msra.mxu0 0.0
    %150 = vmatprep.subr.mxu0 0.0
    %151 = vmatpush1.msra.mxu0 %v101
    %152 = vmatprep.subr.mxu0 0.0
    %153 = vmatpush1.msra.mxu0 %v100
    %154 = vmatprep.subr.mxu0 0.0
    %155 = vmatpush2.msra.mxu0 0.0
    %156 = vmatprep.subr.mxu0 0.0
    %157 = vmatpush2.msra.mxu0 0.0
    %158 = vmatprep.subr.mxu0 0.0
    %159 = vmatpush2.msra.mxu0 0.0
    %160 = vmatprep.subr.mxu0 0.0
    %161 = vmatpush2.msra.mxu0 0.0
    %162 = vmatprep.subr.mxu0 0.0
    %163 = vmatpush2.msra.mxu0 0.0
    %164 = vmatprep.subr.mxu0 0.0
    %165 = vmatpush2.msra.mxu0 0.0
    %166 = vmatprep.subr.mxu0 0.0
    %167 = vmatpush2.msra.mxu0 0.0
    %168 = vmatprep.subr.mxu0 0.0
    %169 = vmatpush2.msra.mxu0 0.0
    %170 = vmatprep.subr.mxu0 0.0
    %171 = vmatpush2.msra.mxu0 0.0
    %172 = vmatprep.subr.mxu0 0.0
    %173 = vmatpush2.msra.mxu0 0.0
    %174 = vmatprep.subr.mxu0 0.0
    %175 = vmatpush2.msra.mxu0 0.0
    %176 = vmatprep.subr.mxu0 0.0
    %177 = vmatpush2.msra.mxu0 0.0
    %178 = vmatprep.subr.mxu0 0.0
    %179 = vmatpush2.msra.mxu0 0.0
    %180 = vmatprep.subr.mxu0 0.0
    %181 = vmatpush2.msra.mxu0 0.0
    %182 = vmatprep.subr.mxu0 0.0
    %183 = vmatpush2.msra.mxu0 0.0
    %184 = vmatprep.subr.mxu0 0.0
    %185 = vmatpush2.msra.mxu0 0.0
    %186 = vmatprep.mubr.f32.mxu0 0.0
    %187 = vmatmul.mubr.f32.gmra.mxu0 %v111
    %v188 = vpop.f32.mrf.mxu0
    %v189 = vadd.f32 %v107, %v188
    %v190 = vpop.f32.mrf.mxu0
    %191 = vmatprep.mubr.f32.mxu0 0.0
    %192 = vmatmul.mubr.f32.gmra.mxu0 %v114
    %v193 = vpop.f32.mrf.mxu0
    %v194 = vadd.f32 %v107, %v193
    %v195 = vpop.f32.mrf.mxu0
    %196 = vmatprep.mubr.f32.mxu0 0.0
    %197 = vmatmul.mubr.f32.gmra.mxu0 %v117
    %v198 = vpop.f32.mrf.mxu0
    %v199 = vadd.f32 %v107, %v198
    %v200 = vpop.f32.mrf.mxu0
    %201 = vmatprep.mubr.f32.mxu0 0.0
    %202 = vmatmul.mubr.f32.gmra.mxu0 %v120
    %v203 = vpop.f32.mrf.mxu0
    %v204 = vadd.f32 %v107, %v203
    %v205 = vpop.f32.mrf.mxu0
    %206 = vdwg.mxu0
    %v207 = vld [vmem:[%s0] sm:$0xf]
    %v208 = vld [vmem:[%s3] sm:$0xff]
    %v209 = vld [vmem:[%s3 + $0x8] sm:$0xff]
    %v210 = vld [vmem:[%s3 + $0x10] sm:$0xff]
    %v211 = vld [vmem:[%s3 + $0x18] sm:$0xff]
    %vm212 = vcmask 261120
    %v214 = vsel %vm212, 0.0, 0
    %216 = vmatprep.subr.mxu0 0.0
    %217 = vmatpush1.msra.mxu0 0.0
    %218 = vmatprep.subr.mxu0 0.0
    %219 = vmatpush1.msra.mxu0 0.0
    %220 = vmatprep.subr.mxu0 0.0
    %221 = vmatpush1.msra.mxu0 0.0
    %222 = vmatprep.subr.mxu0 0.0
    %223 = vmatpush1.msra.mxu0 0.0
    %224 = vmatprep.subr.mxu0 0.0
    %225 = vmatpush1.msra.mxu0 0.0
    %226 = vmatprep.subr.mxu0 0.0
    %227 = vmatpush1.msra.mxu0 0.0
    %228 = vmatprep.subr.mxu0 0.0
    %229 = vmatpush1.msra.mxu0 0.0
    %230 = vmatprep.subr.mxu0 0.0
    %231 = vmatpush1.msra.mxu0 0.0
    %232 = vmatprep.subr.mxu0 0.0
    %233 = vmatpush1.msra.mxu0 0.0
    %234 = vmatprep.subr.mxu0 0.0
    %235 = vmatpush1.msra.mxu0 0.0
    %236 = vmatprep.subr.mxu0 0.0
    %237 = vmatpush1.msra.mxu0 0.0
    %238 = vmatprep.subr.mxu0 0.0
    %239 = vmatpush1.msra.mxu0 0.0
    %240 = vmatprep.subr.mxu0 0.0
    %241 = vmatpush1.msra.mxu0 %v211
    %242 = vmatprep.subr.mxu0 0.0
    %243 = vmatpush1.msra.mxu0 %v210
    %244 = vmatprep.subr.mxu0 0.0
    %245 = vmatpush1.msra.mxu0 %v209
    %246 = vmatprep.subr.mxu0 0.0
    %247 = vmatpush1.msra.mxu0 %v208
    %248 = vmatprep.subr.mxu0 0.0
    %249 = vmatpush2.msra.mxu0 0.0
    %250 = vmatprep.subr.mxu0 0.0
    %251 = vmatpush2.msra.mxu0 0.0
    %252 = vmatprep.subr.mxu0 0.0
    %253 = vmatpush2.msra.mxu0 0.0
    %254 = vmatprep.subr.mxu0 0.0
    %255 = vmatpush2.msra.mxu0 0.0
    %256 = vmatprep.subr.mxu0 0.0
    %257 = vmatpush2.msra.mxu0 0.0
    %258 = vmatprep.subr.mxu0 0.0
    %259 = vmatpush2.msra.mxu0 0.0
    %260 = vmatprep.subr.mxu0 0.0
    %261 = vmatpush2.msra.mxu0 0.0
    %262 = vmatprep.subr.mxu0 0.0
    %263 = vmatpush2.msra.mxu0 0.0
    %264 = vmatprep.subr.mxu0 0.0
    %265 = vmatpush2.msra.mxu0 0.0
    %266 = vmatprep.subr.mxu0 0.0
    %267 = vmatpush2.msra.mxu0 0.0
    %268 = vmatprep.subr.mxu0 0.0
    %269 = vmatpush2.msra.mxu0 0.0
    %270 = vmatprep.subr.mxu0 0.0
    %271 = vmatpush2.msra.mxu0 0.0
    %272 = vmatprep.subr.mxu0 0.0
    %273 = vmatpush2.msra.mxu0 0.0
    %274 = vmatprep.subr.mxu0 0.0
    %275 = vmatpush2.msra.mxu0 0.0
    %276 = vmatprep.subr.mxu0 0.0
    %277 = vmatpush2.msra.mxu0 0.0
    %278 = vmatprep.subr.mxu0 0.0
    %279 = vmatpush2.msra.mxu0 0.0
    %280 = vmatprep.mubr.f32.mxu0 0.0
    %281 = vmatmul.mubr.f32.gmra.mxu0 %v214
    %v282 = vpop.f32.mrf.mxu0
    %v283 = vadd.f32 0.0, %v282
    %v284 = vpop.f32.mrf.mxu0
    %285 = vdwg.mxu0
    %v287 = vrot.slane %v283, 1
    %v288 = vrot.slane %v283, 2
    %v289 = vrot.slane %v283, 3
    %v294 = vadd.f32 %v189, %v283
    %v295 = vadd.f32 %v194, %v287
    %v296 = vadd.f32 %v199, %v288
    %v297 = vadd.f32 %v204, %v289
    %v298 = vxor.u32 %v294, 2147483648
    %v299 = vxor.u32 %v295, 2147483648
    %v300 = vxor.u32 %v296, 2147483648
    %v301 = vxor.u32 %v297, 2147483648
    %v302 = vmul.f32 %v298, 1.442695
    %v303 = vpow.pop %v302
    %v304 = vmul.f32 %v299, 1.442695
    %v305 = vpow.pop %v304
    %v306 = vmul.f32 %v300, 1.442695
    %v307 = vpow.pop %v306
    %v308 = vmul.f32 %v301, 1.442695
    %v309 = vpow.pop %v308
    %v310 = vadd.f32 %v303, 1.0
    %v311 = vadd.f32 %v305, 1.0
    %v312 = vadd.f32 %v307, 1.0
    %v313 = vadd.f32 %v309, 1.0
    %v314 = vrcp.pop %v310
    %v315 = vmul.f32 1.0, %v314
    %v316 = vrcp.pop %v311
    %v317 = vmul.f32 1.0, %v316
    %v318 = vrcp.pop %v312
    %v319 = vmul.f32 1.0, %v318
    %v320 = vrcp.pop %v313
    %v321 = vmul.f32 1.0, %v320
    %v322 = vtanh.pop %v294
    %v323 = vtanh.pop %v295
    %v324 = vtanh.pop %v296
    %v325 = vtanh.pop %v297
    %v326 = vmul.f32 %v315, 0.0
    %v327 = vmul.f32 %v317, 0.0
    %v328 = vmul.f32 %v319, 0.0
    %v329 = vmul.f32 %v321, 0.0
    %334 = vrot.lane.b32.xlu0 %v322, 64
    %v335 = vpop.permute.xlu0 %334
    %336 = vrot.lane.b32.xlu0 %v323, 64
    %v337 = vpop.permute.xlu0 %336
    %338 = vrot.lane.b32.xlu0 %v324, 64
    %v339 = vpop.permute.xlu0 %338
    %340 = vrot.lane.b32.xlu0 %v325, 64
    %v341 = vpop.permute.xlu0 %340
    %v346 = vmul.f32 %v315, %v335
    %v347 = vmul.f32 %v317, %v337
    %v348 = vmul.f32 %v319, %v339
    %v349 = vmul.f32 %v321, %v341
    %354 = vrot.lane.b32.xlu0 %v346, 32
    %v355 = vpop.permute.xlu0 %354
    %356 = vrot.lane.b32.xlu0 %v347, 32
    %v357 = vpop.permute.xlu0 %356
    %358 = vrot.lane.b32.xlu0 %v348, 32
    %v359 = vpop.permute.xlu0 %358
    %360 = vrot.lane.b32.xlu0 %v349, 32
    %v361 = vpop.permute.xlu0 %360
    %v366 = vadd.f32 %v326, %v355
    %v367 = vadd.f32 %v327, %v357
    %v368 = vadd.f32 %v328, %v359
    %v369 = vadd.f32 %v329, %v361
    %v370 = vtanh.pop %v366
    %v371 = vtanh.pop %v367
    %v372 = vtanh.pop %v368
    %v373 = vtanh.pop %v369
    %378 = vrot.lane.b32.xlu0 %v370, 64
    %v379 = vpop.permute.xlu0 %378
    %380 = vrot.lane.b32.xlu0 %v371, 64
    %v381 = vpop.permute.xlu0 %380
    %382 = vrot.lane.b32.xlu0 %v372, 64
    %v383 = vpop.permute.xlu0 %382
    %384 = vrot.lane.b32.xlu0 %v373, 64
    %v385 = vpop.permute.xlu0 %384
    %v390 = vmul.f32 %v315, %v379
    %v391 = vmul.f32 %v317, %v381
    %v392 = vmul.f32 %v319, %v383
    %v393 = vmul.f32 %v321, %v385
    %vm394 = vcmp.gt.s32.totalorder %v207, 0
    %v395 = vsel %vm394, 1, 0
    %396 = vset.pattern.permute.xlu0 0
    %397 = vperm.xlu0 %396, %v395
    %v398 = vpop.permute.xlu0 %397
    %vm399 = vcmp.eq.s32.totalorder %v398, 1
    %v404 = vrot.slane %v367, 7
    %vm405 = vcmask 1041409
    %v406 = vsel %vm405, %v404, %v366
    %v407 = vrot.slane %v368, 6
    %vm408 = vcmask 1042434
    %v409 = vsel %vm408, %v407, %v406
    %v410 = vrot.slane %v369, 5
    %vm411 = vcmask 1043459
    %v412 = vsel %vm411, %v410, %v409
    %413 = vrot.lane.b32.xlu0 %v412, 96
    %v414 = vpop.permute.xlu0 %413
    %v416 = vsel %vm399, %v414, 0.0
    %v421 = vrot.slane %v391, 7
    %v422 = vsel %vm405, %v421, %v390
    %v423 = vrot.slane %v392, 6
    %v424 = vsel %vm408, %v423, %v422
    %v425 = vrot.slane %v393, 5
    %v426 = vsel %vm411, %v425, %v424
    %427 = vrot.lane.b32.xlu0 %v426, 32
    %v428 = vpop.permute.xlu0 %427
    %v430 = vsel %vm399, %v428, 0.0
    %v433 = vunpack.c.l.s4 1966171168
    %v434 = vunpack.c.0.s8 %v433
    %v435 = vlaneseq
    %v436 = vshrl.u32 %v435, 7
    %v437 = vsub.s32 %v434, %v436
    %v438 = vrot.slane %v430, %v437
    %v439 = vcombine.high %v438, %v438
    %v441 = vunpack.c.l.s4 1966171168
    %v442 = vunpack.c.0.s8 %v441
    %v443 = vlaneseq
    %v444 = vshrl.u32 %v443, 7
    %v445 = vsub.s32 %v442, %v444
    %v446 = vrot.slane %v438, %v445
    %v448 = vunpack.c.l.s4 1966171168
    %v449 = vunpack.c.0.s8 %v448
    %v450 = vlaneseq
    %v451 = vshrl.u32 %v450, 7
    %v452 = vsub.s32 %v449, %v451
    %v453 = vrot.slane %v439, %v452
    %v454 = vcombine.high %v446, %v446
    %v455 = vcombine.high %v453, %v453
    %vm460 = vcmask 253952
    %461 = vst.msk [vmem:[#allocation5] sm:$0x1] %vm460, %v446
    %462 = vst.msk [vmem:[#allocation5 + $0x8] sm:$0x1] %vm460, %v453
    %463 = vst.msk [vmem:[#allocation5 + $0x10] sm:$0x1] %vm460, %v454
    %464 = vst.msk [vmem:[#allocation5 + $0x18] sm:$0x1] %vm460, %v455
    %v465 = vsel %vm212, %v430, 0
    %467 = vmatprep.subr.mxu0 0.0
    %468 = vmatpush1.msra.mxu0 0.0
    %469 = vmatprep.subr.mxu0 0.0
    %470 = vmatpush1.msra.mxu0 0.0
    %471 = vmatprep.subr.mxu0 0.0
    %472 = vmatpush1.msra.mxu0 0.0
    %473 = vmatprep.subr.mxu0 0.0
    %474 = vmatpush1.msra.mxu0 0.0
    %475 = vmatprep.subr.mxu0 0.0
    %476 = vmatpush1.msra.mxu0 0.0
    %477 = vmatprep.subr.mxu0 0.0
    %478 = vmatpush1.msra.mxu0 0.0
    %479 = vmatprep.subr.mxu0 0.0
    %480 = vmatpush1.msra.mxu0 0.0
    %481 = vmatprep.subr.mxu0 0.0
    %482 = vmatpush1.msra.mxu0 0.0
    %483 = vmatprep.subr.mxu0 0.0
    %484 = vmatpush1.msra.mxu0 0.0
    %485 = vmatprep.subr.mxu0 0.0
    %486 = vmatpush1.msra.mxu0 0.0
    %487 = vmatprep.subr.mxu0 0.0
    %488 = vmatpush1.msra.mxu0 0.0
    %489 = vmatprep.subr.mxu0 0.0
    %490 = vmatpush1.msra.mxu0 0.0
    %491 = vmatprep.subr.mxu0 0.0
    %492 = vmatpush1.msra.mxu0 %v211
    %493 = vmatprep.subr.mxu0 0.0
    %494 = vmatpush1.msra.mxu0 %v210
    %495 = vmatprep.subr.mxu0 0.0
    %496 = vmatpush1.msra.mxu0 %v209
    %497 = vmatprep.subr.mxu0 0.0
    %498 = vmatpush1.msra.mxu0 %v208
    %499 = vmatprep.subr.mxu0 0.0
    %500 = vmatpush2.msra.mxu0 0.0
    %501 = vmatprep.subr.mxu0 0.0
    %502 = vmatpush2.msra.mxu0 0.0
    %503 = vmatprep.subr.mxu0 0.0
    %504 = vmatpush2.msra.mxu0 0.0
    %505 = vmatprep.subr.mxu0 0.0
    %506 = vmatpush2.msra.mxu0 0.0
    %507 = vmatprep.subr.mxu0 0.0
    %508 = vmatpush2.msra.mxu0 0.0
    %509 = vmatprep.subr.mxu0 0.0
    %510 = vmatpush2.msra.mxu0 0.0
    %511 = vmatprep.subr.mxu0 0.0
    %512 = vmatpush2.msra.mxu0 0.0
    %513 = vmatprep.subr.mxu0 0.0
    %514 = vmatpush2.msra.mxu0 0.0
    %515 = vmatprep.subr.mxu0 0.0
    %516 = vmatpush2.msra.mxu0 0.0
    %517 = vmatprep.subr.mxu0 0.0
    %518 = vmatpush2.msra.mxu0 0.0
    %519 = vmatprep.subr.mxu0 0.0
    %520 = vmatpush2.msra.mxu0 0.0
    %521 = vmatprep.subr.mxu0 0.0
    %522 = vmatpush2.msra.mxu0 0.0
    %523 = vmatprep.subr.mxu0 0.0
    %524 = vmatpush2.msra.mxu0 0.0
    %525 = vmatprep.subr.mxu0 0.0
    %526 = vmatpush2.msra.mxu0 0.0
    %527 = vmatprep.subr.mxu0 0.0
    %528 = vmatpush2.msra.mxu0 0.0
    %529 = vmatprep.subr.mxu0 0.0
    %530 = vmatpush2.msra.mxu0 0.0
    %531 = vmatprep.mubr.f32.mxu0 0.0
    %532 = vmatmul.mubr.f32.gmra.mxu0 %v465
    %v533 = vpop.f32.mrf.mxu0
    %v534 = vadd.f32 0.0, %v533
    %v535 = vpop.f32.mrf.mxu0
    %536 = vdwg.mxu0
    %v538 = vrot.slane %v534, 7
    %v539 = vrot.slane %v534, 1
    %v540 = vrot.slane %v534, 2
    %v545 = vadd.f32 %v189, %v538
    %v546 = vadd.f32 %v194, %v534
    %v547 = vadd.f32 %v199, %v539
    %v548 = vadd.f32 %v204, %v540
    %v549 = vxor.u32 %v545, 2147483648
    %v550 = vxor.u32 %v546, 2147483648
    %v551 = vxor.u32 %v547, 2147483648
    %v552 = vxor.u32 %v548, 2147483648
    %v553 = vmul.f32 %v549, 1.442695
    %v554 = vpow.pop %v553
    %v555 = vmul.f32 %v550, 1.442695
    %v556 = vpow.pop %v555
    %v557 = vmul.f32 %v551, 1.442695
    %v558 = vpow.pop %v557
    %v559 = vmul.f32 %v552, 1.442695
    %v560 = vpow.pop %v559
    %v561 = vadd.f32 %v554, 1.0
    %v562 = vadd.f32 %v556, 1.0
    %v563 = vadd.f32 %v558, 1.0
    %v564 = vadd.f32 %v560, 1.0
    %v565 = vrcp.pop %v561
    %v566 = vmul.f32 1.0, %v565
    %v567 = vrcp.pop %v562
    %v568 = vmul.f32 1.0, %v567
    %v569 = vrcp.pop %v563
    %v570 = vmul.f32 1.0, %v569
    %v571 = vrcp.pop %v564
    %v572 = vmul.f32 1.0, %v571
    %v573 = vtanh.pop %v545
    %v574 = vtanh.pop %v546
    %v575 = vtanh.pop %v547
    %v576 = vtanh.pop %v548
    %v578 = vrot.slane %v416, 7
    %v579 = vrot.slane %v416, 1
    %v580 = vrot.slane %v416, 2
    %581 = vrot.lane.b32.xlu0 %v578, 32
    %v582 = vpop.permute.xlu0 %581
    %583 = vrot.lane.b32.xlu0 %v416, 32
    %v584 = vpop.permute.xlu0 %583
    %585 = vrot.lane.b32.xlu0 %v579, 32
    %v586 = vpop.permute.xlu0 %585
    %587 = vrot.lane.b32.xlu0 %v580, 32
    %v588 = vpop.permute.xlu0 %587
    %v593 = vmul.f32 %v566, %v582
    %v594 = vmul.f32 %v568, %v584
    %v595 = vmul.f32 %v570, %v586
    %v596 = vmul.f32 %v572, %v588
    %601 = vrot.lane.b32.xlu0 %v573, 64
    %v602 = vpop.permute.xlu0 %601
    %603 = vrot.lane.b32.xlu0 %v574, 64
    %v604 = vpop.permute.xlu0 %603
    %605 = vrot.lane.b32.xlu0 %v575, 64
    %v606 = vpop.permute.xlu0 %605
    %607 = vrot.lane.b32.xlu0 %v576, 64
    %v608 = vpop.permute.xlu0 %607
    %v613 = vmul.f32 %v566, %v602
    %v614 = vmul.f32 %v568, %v604
    %v615 = vmul.f32 %v570, %v606
    %v616 = vmul.f32 %v572, %v608
    %621 = vrot.lane.b32.xlu0 %v613, 32
    %v622 = vpop.permute.xlu0 %621
    %623 = vrot.lane.b32.xlu0 %v614, 32
    %v624 = vpop.permute.xlu0 %623
    %625 = vrot.lane.b32.xlu0 %v615, 32
    %v626 = vpop.permute.xlu0 %625
    %627 = vrot.lane.b32.xlu0 %v616, 32
    %v628 = vpop.permute.xlu0 %627
    %v633 = vadd.f32 %v593, %v622
    %v634 = vadd.f32 %v594, %v624
    %v635 = vadd.f32 %v595, %v626
    %v636 = vadd.f32 %v596, %v628
    %v637 = vtanh.pop %v633
    %v638 = vtanh.pop %v634
    %v639 = vtanh.pop %v635
    %v640 = vtanh.pop %v636
    %645 = vrot.lane.b32.xlu0 %v637, 64
    %v646 = vpop.permute.xlu0 %645
    %647 = vrot.lane.b32.xlu0 %v638, 64
    %v648 = vpop.permute.xlu0 %647
    %649 = vrot.lane.b32.xlu0 %v639, 64
    %v650 = vpop.permute.xlu0 %649
    %651 = vrot.lane.b32.xlu0 %v640, 64
    %v652 = vpop.permute.xlu0 %651
    %v657 = vmul.f32 %v566, %v646
    %v658 = vmul.f32 %v568, %v648
    %v659 = vmul.f32 %v570, %v650
    %v660 = vmul.f32 %v572, %v652
    %vm661 = vcmp.gt.s32.totalorder %v207, 1
    %v662 = vsel %vm661, 1, 0
    %663 = vset.pattern.permute.xlu0 0
    %664 = vperm.xlu0 %663, %v662
    %v665 = vpop.permute.xlu0 %664
    %vm666 = vcmp.eq.s32.totalorder %v665, 1
    %v671 = vrot.slane %v633, 1
    %v672 = vsel %vm405, %v634, %v671
    %v673 = vrot.slane %v635, 7
    %v674 = vsel %vm408, %v673, %v672
    %v675 = vrot.slane %v636, 6
    %v676 = vsel %vm411, %v675, %v674
    %677 = vrot.lane.b32.xlu0 %v676, 96
    %v678 = vpop.permute.xlu0 %677
    %v680 = vsel %vm666, %v678, %v416
    %v685 = vrot.slane %v657, 1
    %v686 = vsel %vm405, %v658, %v685
    %v687 = vrot.slane %v659, 7
    %v688 = vsel %vm408, %v687, %v686
    %v689 = vrot.slane %v660, 6
    %v690 = vsel %vm411, %v689, %v688
    %691 = vrot.lane.b32.xlu0 %v690, 32
    %v692 = vpop.permute.xlu0 %691
    %v694 = vsel %vm666, %v692, %v430
    %v695 = vsel %vm666, %v692, 0.0
    %v698 = vunpack.c.l.s4 1966171168
    %v699 = vunpack.c.0.s8 %v698
    %v700 = vlaneseq
    %v701 = vshrl.u32 %v700, 7
    %v702 = vsub.s32 %v699, %v701
    %v703 = vrot.slane %v695, %v702
    %v704 = vcombine.high %v703, %v703
    %v706 = vunpack.c.l.s4 1966171168
    %v707 = vunpack.c.0.s8 %v706
    %v708 = vlaneseq
    %v709 = vshrl.u32 %v708, 7
    %v710 = vsub.s32 %v707, %v709
    %v711 = vrot.slane %v703, %v710
    %v713 = vunpack.c.l.s4 1966171168
    %v714 = vunpack.c.0.s8 %v713
    %v715 = vlaneseq
    %v716 = vshrl.u32 %v715, 7
    %v717 = vsub.s32 %v714, %v716
    %v718 = vrot.slane %v704, %v717
    %v719 = vcombine.high %v711, %v711
    %v720 = vcombine.high %v718, %v718
    %725 = vst.msk [vmem:[#allocation5 + $0x1] sm:$0x1] %vm460, %v711
    %726 = vst.msk [vmem:[#allocation5 + $0x9] sm:$0x1] %vm460, %v718
    %727 = vst.msk [vmem:[#allocation5 + $0x11] sm:$0x1] %vm460, %v719
    %728 = vst.msk [vmem:[#allocation5 + $0x19] sm:$0x1] %vm460, %v720
    %v730 = vsel %vm212, %v694, 0
    %732 = vmatprep.subr.mxu0 0.0
    %733 = vmatpush1.msra.mxu0 0.0
    %734 = vmatprep.subr.mxu0 0.0
    %735 = vmatpush1.msra.mxu0 0.0
    %736 = vmatprep.subr.mxu0 0.0
    %737 = vmatpush1.msra.mxu0 0.0
    %738 = vmatprep.subr.mxu0 0.0
    %739 = vmatpush1.msra.mxu0 0.0
    %740 = vmatprep.subr.mxu0 0.0
    %741 = vmatpush1.msra.mxu0 0.0
    %742 = vmatprep.subr.mxu0 0.0
    %743 = vmatpush1.msra.mxu0 0.0
    %744 = vmatprep.subr.mxu0 0.0
    %745 = vmatpush1.msra.mxu0 0.0
    %746 = vmatprep.subr.mxu0 0.0
    %747 = vmatpush1.msra.mxu0 0.0
    %748 = vmatprep.subr.mxu0 0.0
    %749 = vmatpush1.msra.mxu0 0.0
    %750 = vmatprep.subr.mxu0 0.0
    %751 = vmatpush1.msra.mxu0 0.0
    %752 = vmatprep.subr.mxu0 0.0
    %753 = vmatpush1.msra.mxu0 0.0
    %754 = vmatprep.subr.mxu0 0.0
    %755 = vmatpush1.msra.mxu0 0.0
    %756 = vmatprep.subr.mxu0 0.0
    %757 = vmatpush1.msra.mxu0 %v211
    %758 = vmatprep.subr.mxu0 0.0
    %759 = vmatpush1.msra.mxu0 %v210
    %760 = vmatprep.subr.mxu0 0.0
    %761 = vmatpush1.msra.mxu0 %v209
    %762 = vmatprep.subr.mxu0 0.0
    %763 = vmatpush1.msra.mxu0 %v208
    %764 = vmatprep.subr.mxu0 0.0
    %765 = vmatpush2.msra.mxu0 0.0
    %766 = vmatprep.subr.mxu0 0.0
    %767 = vmatpush2.msra.mxu0 0.0
    %768 = vmatprep.subr.mxu0 0.0
    %769 = vmatpush2.msra.mxu0 0.0
    %770 = vmatprep.subr.mxu0 0.0
    %771 = vmatpush2.msra.mxu0 0.0
    %772 = vmatprep.subr.mxu0 0.0
    %773 = vmatpush2.msra.mxu0 0.0
    %774 = vmatprep.subr.mxu0 0.0
    %775 = vmatpush2.msra.mxu0 0.0
    %776 = vmatprep.subr.mxu0 0.0
    %777 = vmatpush2.msra.mxu0 0.0
    %778 = vmatprep.subr.mxu0 0.0
    %779 = vmatpush2.msra.mxu0 0.0
    %780 = vmatprep.subr.mxu0 0.0
    %781 = vmatpush2.msra.mxu0 0.0
    %782 = vmatprep.subr.mxu0 0.0
    %783 = vmatpush2.msra.mxu0 0.0
    %784 = vmatprep.subr.mxu0 0.0
    %785 = vmatpush2.msra.mxu0 0.0
    %786 = vmatprep.subr.mxu0 0.0
    %787 = vmatpush2.msra.mxu0 0.0
    %788 = vmatprep.subr.mxu0 0.0
    %789 = vmatpush2.msra.mxu0 0.0
    %790 = vmatprep.subr.mxu0 0.0
    %791 = vmatpush2.msra.mxu0 0.0
    %792 = vmatprep.subr.mxu0 0.0
    %793 = vmatpush2.msra.mxu0 0.0
    %794 = vmatprep.subr.mxu0 0.0
    %795 = vmatpush2.msra.mxu0 0.0
    %796 = vmatprep.mubr.f32.mxu0 0.0
    %797 = vmatmul.mubr.f32.gmra.mxu0 %v730
    %v798 = vpop.f32.mrf.mxu0
    %v799 = vadd.f32 0.0, %v798
    %v800 = vpop.f32.mrf.mxu0
    %801 = vdwg.mxu0
    %v803 = vrot.slane %v799, 6
    %v804 = vrot.slane %v799, 7
    %v805 = vrot.slane %v799, 1
    %v810 = vadd.f32 %v189, %v803
    %v811 = vadd.f32 %v194, %v804
    %v812 = vadd.f32 %v199, %v799
    %v813 = vadd.f32 %v204, %v805
    %v814 = vxor.u32 %v810, 2147483648
    %v815 = vxor.u32 %v811, 2147483648
    %v816 = vxor.u32 %v812, 2147483648
    %v817 = vxor.u32 %v813, 2147483648
    %v818 = vmul.f32 %v814, 1.442695
    %v819 = vpow.pop %v818
    %v820 = vmul.f32 %v815, 1.442695
    %v821 = vpow.pop %v820
    %v822 = vmul.f32 %v816, 1.442695
    %v823 = vpow.pop %v822
    %v824 = vmul.f32 %v817, 1.442695
    %v825 = vpow.pop %v824
    %v826 = vadd.f32 %v819, 1.0
    %v827 = vadd.f32 %v821, 1.0
    %v828 = vadd.f32 %v823, 1.0
    %v829 = vadd.f32 %v825, 1.0
    %v830 = vrcp.pop %v826
    %v831 = vmul.f32 1.0, %v830
    %v832 = vrcp.pop %v827
    %v833 = vmul.f32 1.0, %v832
    %v834 = vrcp.pop %v828
    %v835 = vmul.f32 1.0, %v834
    %v836 = vrcp.pop %v829
    %v837 = vmul.f32 1.0, %v836
    %v838 = vtanh.pop %v810
    %v839 = vtanh.pop %v811
    %v840 = vtanh.pop %v812
    %v841 = vtanh.pop %v813
    %v843 = vrot.slane %v680, 6
    %v844 = vrot.slane %v680, 7
    %v845 = vrot.slane %v680, 1
    %846 = vrot.lane.b32.xlu0 %v843, 32
    %v847 = vpop.permute.xlu0 %846
    %848 = vrot.lane.b32.xlu0 %v844, 32
    %v849 = vpop.permute.xlu0 %848
    %850 = vrot.lane.b32.xlu0 %v680, 32
    %v851 = vpop.permute.xlu0 %850
    %852 = vrot.lane.b32.xlu0 %v845, 32
    %v853 = vpop.permute.xlu0 %852
    %v858 = vmul.f32 %v831, %v847
    %v859 = vmul.f32 %v833, %v849
    %v860 = vmul.f32 %v835, %v851
    %v861 = vmul.f32 %v837, %v853
    %866 = vrot.lane.b32.xlu0 %v838, 64
    %v867 = vpop.permute.xlu0 %866
    %868 = vrot.lane.b32.xlu0 %v839, 64
    %v869 = vpop.permute.xlu0 %868
    %870 = vrot.lane.b32.xlu0 %v840, 64
    %v871 = vpop.permute.xlu0 %870
    %872 = vrot.lane.b32.xlu0 %v841, 64
    %v873 = vpop.permute.xlu0 %872
    %v878 = vmul.f32 %v831, %v867
    %v879 = vmul.f32 %v833, %v869
    %v880 = vmul.f32 %v835, %v871
    %v881 = vmul.f32 %v837, %v873
    %886 = vrot.lane.b32.xlu0 %v878, 32
    %v887 = vpop.permute.xlu0 %886
    %888 = vrot.lane.b32.xlu0 %v879, 32
    %v889 = vpop.permute.xlu0 %888
    %890 = vrot.lane.b32.xlu0 %v880, 32
    %v891 = vpop.permute.xlu0 %890
    %892 = vrot.lane.b32.xlu0 %v881, 32
    %v893 = vpop.permute.xlu0 %892
    %v898 = vadd.f32 %v858, %v887
    %v899 = vadd.f32 %v859, %v889
    %v900 = vadd.f32 %v860, %v891
    %v901 = vadd.f32 %v861, %v893
    %v902 = vtanh.pop %v898
    %v903 = vtanh.pop %v899
    %v904 = vtanh.pop %v900
    %v905 = vtanh.pop %v901
    %910 = vrot.lane.b32.xlu0 %v902, 64
    %v911 = vpop.permute.xlu0 %910
    %912 = vrot.lane.b32.xlu0 %v903, 64
    %v913 = vpop.permute.xlu0 %912
    %914 = vrot.lane.b32.xlu0 %v904, 64
    %v915 = vpop.permute.xlu0 %914
    %916 = vrot.lane.b32.xlu0 %v905, 64
    %v917 = vpop.permute.xlu0 %916
    %v922 = vmul.f32 %v831, %v911
    %v923 = vmul.f32 %v833, %v913
    %v924 = vmul.f32 %v835, %v915
    %v925 = vmul.f32 %v837, %v917
    %vm926 = vcmp.gt.s32.totalorder %v207, 2
    %v927 = vsel %vm926, 1, 0
    %928 = vset.pattern.permute.xlu0 0
    %929 = vperm.xlu0 %928, %v927
    %v930 = vpop.permute.xlu0 %929
    %vm931 = vcmp.eq.s32.totalorder %v930, 1
    %v936 = vrot.slane %v898, 2
    %v937 = vrot.slane %v899, 1
    %v938 = vsel %vm405, %v937, %v936
    %v939 = vsel %vm408, %v900, %v938
    %v940 = vrot.slane %v901, 7
    %v941 = vsel %vm411, %v940, %v939
    %942 = vrot.lane.b32.xlu0 %v941, 96
    %v943 = vpop.permute.xlu0 %942
    %v945 = vsel %vm931, %v943, %v680
    %v950 = vrot.slane %v922, 2
    %v951 = vrot.slane %v923, 1
    %v952 = vsel %vm405, %v951, %v950
    %v953 = vsel %vm408, %v924, %v952
    %v954 = vrot.slane %v925, 7
    %v955 = vsel %vm411, %v954, %v953
    %956 = vrot.lane.b32.xlu0 %v955, 32
    %v957 = vpop.permute.xlu0 %956
    %v959 = vsel %vm931, %v957, %v694
    %v960 = vsel %vm931, %v957, 0.0
    %v963 = vunpack.c.l.s4 1966171168
    %v964 = vunpack.c.0.s8 %v963
    %v965 = vlaneseq
    %v966 = vshrl.u32 %v965, 7
    %v967 = vsub.s32 %v964, %v966
    %v968 = vrot.slane %v960, %v967
    %v969 = vcombine.high %v968, %v968
    %v971 = vunpack.c.l.s4 1966171168
    %v972 = vunpack.c.0.s8 %v971
    %v973 = vlaneseq
    %v974 = vshrl.u32 %v973, 7
    %v975 = vsub.s32 %v972, %v974
    %v976 = vrot.slane %v968, %v975
    %v978 = vunpack.c.l.s4 1966171168
    %v979 = vunpack.c.0.s8 %v978
    %v980 = vlaneseq
    %v981 = vshrl.u32 %v980, 7
    %v982 = vsub.s32 %v979, %v981
    %v983 = vrot.slane %v969, %v982
    %v984 = vcombine.high %v976, %v976
    %v985 = vcombine.high %v983, %v983
    %990 = vst.msk [vmem:[#allocation5 + $0x2] sm:$0x1] %vm460, %v976
    %991 = vst.msk [vmem:[#allocation5 + $0xa] sm:$0x1] %vm460, %v983
    %992 = vst.msk [vmem:[#allocation5 + $0x12] sm:$0x1] %vm460, %v984
    %993 = vst.msk [vmem:[#allocation5 + $0x1a] sm:$0x1] %vm460, %v985
    %v995 = vsel %vm212, %v959, 0
    %997 = vmatprep.subr.mxu0 0.0
    %998 = vmatpush1.msra.mxu0 0.0
    %999 = vmatprep.subr.mxu0 0.0
    %1000 = vmatpush1.msra.mxu0 0.0
    %1001 = vmatprep.subr.mxu0 0.0
    %1002 = vmatpush1.msra.mxu0 0.0
    %1003 = vmatprep.subr.mxu0 0.0
    %1004 = vmatpush1.msra.mxu0 0.0
    %1005 = vmatprep.subr.mxu0 0.0
    %1006 = vmatpush1.msra.mxu0 0.0
    %1007 = vmatprep.subr.mxu0 0.0
    %1008 = vmatpush1.msra.mxu0 0.0
    %1009 = vmatprep.subr.mxu0 0.0
    %1010 = vmatpush1.msra.mxu0 0.0
    %1011 = vmatprep.subr.mxu0 0.0
    %1012 = vmatpush1.msra.mxu0 0.0
    %1013 = vmatprep.subr.mxu0 0.0
    %1014 = vmatpush1.msra.mxu0 0.0
    %1015 = vmatprep.subr.mxu0 0.0
    %1016 = vmatpush1.msra.mxu0 0.0
    %1017 = vmatprep.subr.mxu0 0.0
    %1018 = vmatpush1.msra.mxu0 0.0
    %1019 = vmatprep.subr.mxu0 0.0
    %1020 = vmatpush1.msra.mxu0 0.0
    %1021 = vmatprep.subr.mxu0 0.0
    %1022 = vmatpush1.msra.mxu0 %v211
    %1023 = vmatprep.subr.mxu0 0.0
    %1024 = vmatpush1.msra.mxu0 %v210
    %1025 = vmatprep.subr.mxu0 0.0
    %1026 = vmatpush1.msra.mxu0 %v209
    %1027 = vmatprep.subr.mxu0 0.0
    %1028 = vmatpush1.msra.mxu0 %v208
    %1029 = vmatprep.subr.mxu0 0.0
    %1030 = vmatpush2.msra.mxu0 0.0
    %1031 = vmatprep.subr.mxu0 0.0
    %1032 = vmatpush2.msra.mxu0 0.0
    %1033 = vmatprep.subr.mxu0 0.0
    %1034 = vmatpush2.msra.mxu0 0.0
    %1035 = vmatprep.subr.mxu0 0.0
    %1036 = vmatpush2.msra.mxu0 0.0
    %1037 = vmatprep.subr.mxu0 0.0
    %1038 = vmatpush2.msra.mxu0 0.0
    %1039 = vmatprep.subr.mxu0 0.0
    %1040 = vmatpush2.msra.mxu0 0.0
    %1041 = vmatprep.subr.mxu0 0.0
    %1042 = vmatpush2.msra.mxu0 0.0
    %1043 = vmatprep.subr.mxu0 0.0
    %1044 = vmatpush2.msra.mxu0 0.0
    %1045 = vmatprep.subr.mxu0 0.0
    %1046 = vmatpush2.msra.mxu0 0.0
    %1047 = vmatprep.subr.mxu0 0.0
    %1048 = vmatpush2.msra.mxu0 0.0
    %1049 = vmatprep.subr.mxu0 0.0
    %1050 = vmatpush2.msra.mxu0 0.0
    %1051 = vmatprep.subr.mxu0 0.0
    %1052 = vmatpush2.msra.mxu0 0.0
    %1053 = vmatprep.subr.mxu0 0.0
    %1054 = vmatpush2.msra.mxu0 0.0
    %1055 = vmatprep.subr.mxu0 0.0
    %1056 = vmatpush2.msra.mxu0 0.0
    %1057 = vmatprep.subr.mxu0 0.0
    %1058 = vmatpush2.msra.mxu0 0.0
    %1059 = vmatprep.subr.mxu0 0.0
    %1060 = vmatpush2.msra.mxu0 0.0
    %1061 = vmatprep.mubr.f32.mxu0 0.0
    %1062 = vmatmul.mubr.f32.gmra.mxu0 %v995
    %v1063 = vpop.f32.mrf.mxu0
    %v1064 = vadd.f32 0.0, %v1063
    %v1065 = vpop.f32.mrf.mxu0
    %1066 = vdwg.mxu0
    %v1068 = vrot.slane %v1064, 5
    %v1069 = vrot.slane %v1064, 6
    %v1070 = vrot.slane %v1064, 7
    %v1075 = vadd.f32 %v189, %v1068
    %v1076 = vadd.f32 %v194, %v1069
    %v1077 = vadd.f32 %v199, %v1070
    %v1078 = vadd.f32 %v204, %v1064
    %v1079 = vxor.u32 %v1075, 2147483648
    %v1080 = vxor.u32 %v1076, 2147483648
    %v1081 = vxor.u32 %v1077, 2147483648
    %v1082 = vxor.u32 %v1078, 2147483648
    %v1083 = vmul.f32 %v1079, 1.442695
    %v1084 = vpow.pop %v1083
    %v1085 = vmul.f32 %v1080, 1.442695
    %v1086 = vpow.pop %v1085
    %v1087 = vmul.f32 %v1081, 1.442695
    %v1088 = vpow.pop %v1087
    %v1089 = vmul.f32 %v1082, 1.442695
    %v1090 = vpow.pop %v1089
    %v1091 = vadd.f32 %v1084, 1.0
    %v1092 = vadd.f32 %v1086, 1.0
    %v1093 = vadd.f32 %v1088, 1.0
    %v1094 = vadd.f32 %v1090, 1.0
    %v1095 = vrcp.pop %v1091
    %v1096 = vmul.f32 1.0, %v1095
    %v1097 = vrcp.pop %v1092
    %v1098 = vmul.f32 1.0, %v1097
    %v1099 = vrcp.pop %v1093
    %v1100 = vmul.f32 1.0, %v1099
    %v1101 = vrcp.pop %v1094
    %v1102 = vmul.f32 1.0, %v1101
    %v1103 = vtanh.pop %v1075
    %v1104 = vtanh.pop %v1076
    %v1105 = vtanh.pop %v1077
    %v1106 = vtanh.pop %v1078
    %v1108 = vrot.slane %v945, 5
    %v1109 = vrot.slane %v945, 6
    %v1110 = vrot.slane %v945, 7
    %1111 = vrot.lane.b32.xlu0 %v1108, 32
    %v1112 = vpop.permute.xlu0 %1111
    %1113 = vrot.lane.b32.xlu0 %v1109, 32
    %v1114 = vpop.permute.xlu0 %1113
    %1115 = vrot.lane.b32.xlu0 %v1110, 32
    %v1116 = vpop.permute.xlu0 %1115
    %1117 = vrot.lane.b32.xlu0 %v945, 32
    %v1118 = vpop.permute.xlu0 %1117
    %v1123 = vmul.f32 %v1096, %v1112
    %v1124 = vmul.f32 %v1098, %v1114
    %v1125 = vmul.f32 %v1100, %v1116
    %v1126 = vmul.f32 %v1102, %v1118
    %1131 = vrot.lane.b32.xlu0 %v1103, 64
    %v1132 = vpop.permute.xlu0 %1131
    %1133 = vrot.lane.b32.xlu0 %v1104, 64
    %v1134 = vpop.permute.xlu0 %1133
    %1135 = vrot.lane.b32.xlu0 %v1105, 64
    %v1136 = vpop.permute.xlu0 %1135
    %1137 = vrot.lane.b32.xlu0 %v1106, 64
    %v1138 = vpop.permute.xlu0 %1137
    %v1143 = vmul.f32 %v1096, %v1132
    %v1144 = vmul.f32 %v1098, %v1134
    %v1145 = vmul.f32 %v1100, %v1136
    %v1146 = vmul.f32 %v1102, %v1138
    %1151 = vrot.lane.b32.xlu0 %v1143, 32
    %v1152 = vpop.permute.xlu0 %1151
    %1153 = vrot.lane.b32.xlu0 %v1144, 32
    %v1154 = vpop.permute.xlu0 %1153
    %1155 = vrot.lane.b32.xlu0 %v1145, 32
    %v1156 = vpop.permute.xlu0 %1155
    %1157 = vrot.lane.b32.xlu0 %v1146, 32
    %v1158 = vpop.permute.xlu0 %1157
    %v1163 = vadd.f32 %v1123, %v1152
    %v1164 = vadd.f32 %v1124, %v1154
    %v1165 = vadd.f32 %v1125, %v1156
    %v1166 = vadd.f32 %v1126, %v1158
    %v1167 = vtanh.pop %v1163
    %v1168 = vtanh.pop %v1164
    %v1169 = vtanh.pop %v1165
    %v1170 = vtanh.pop %v1166
    %1175 = vrot.lane.b32.xlu0 %v1167, 64
    %v1176 = vpop.permute.xlu0 %1175
    %1177 = vrot.lane.b32.xlu0 %v1168, 64
    %v1178 = vpop.permute.xlu0 %1177
    %1179 = vrot.lane.b32.xlu0 %v1169, 64
    %v1180 = vpop.permute.xlu0 %1179
    %1181 = vrot.lane.b32.xlu0 %v1170, 64
    %v1182 = vpop.permute.xlu0 %1181
    %v1187 = vmul.f32 %v1096, %v1176
    %v1188 = vmul.f32 %v1098, %v1178
    %v1189 = vmul.f32 %v1100, %v1180
    %v1190 = vmul.f32 %v1102, %v1182
    %vm1191 = vcmp.gt.s32.totalorder %v207, 3
    %v1192 = vsel %vm1191, 1, 0
    %1193 = vset.pattern.permute.xlu0 0
    %1194 = vperm.xlu0 %1193, %v1192
    %v1195 = vpop.permute.xlu0 %1194
    %vm1196 = vcmp.eq.s32.totalorder %v1195, 1
    %v1201 = vrot.slane %v1163, 3
    %v1202 = vrot.slane %v1164, 2
    %v1203 = vsel %vm405, %v1202, %v1201
    %v1204 = vrot.slane %v1165, 1
    %v1205 = vsel %vm408, %v1204, %v1203
    %v1206 = vsel %vm411, %v1166, %v1205
    %1207 = vrot.lane.b32.xlu0 %v1206, 96
    %v1208 = vpop.permute.xlu0 %1207
    %v1210 = vsel %vm1196, %v1208, %v945
    %v1215 = vrot.slane %v1187, 3
    %v1216 = vrot.slane %v1188, 2
    %v1217 = vsel %vm405, %v1216, %v1215
    %v1218 = vrot.slane %v1189, 1
    %v1219 = vsel %vm408, %v1218, %v1217
    %v1220 = vsel %vm411, %v1190, %v1219
    %1221 = vrot.lane.b32.xlu0 %v1220, 32
    %v1222 = vpop.permute.xlu0 %1221
    %v1224 = vsel %vm1196, %v1222, %v959
    %v1225 = vsel %vm1196, %v1222, 0.0
    %v1228 = vunpack.c.l.s4 1966171168
    %v1229 = vunpack.c.0.s8 %v1228
    %v1230 = vlaneseq
    %v1231 = vshrl.u32 %v1230, 7
    %v1232 = vsub.s32 %v1229, %v1231
    %v1233 = vrot.slane %v1225, %v1232
    %v1234 = vcombine.high %v1233, %v1233
    %v1236 = vunpack.c.l.s4 1966171168
    %v1237 = vunpack.c.0.s8 %v1236
    %v1238 = vlaneseq
    %v1239 = vshrl.u32 %v1238, 7
    %v1240 = vsub.s32 %v1237, %v1239
    %v1241 = vrot.slane %v1233, %v1240
    %v1243 = vunpack.c.l.s4 1966171168
    %v1244 = vunpack.c.0.s8 %v1243
    %v1245 = vlaneseq
    %v1246 = vshrl.u32 %v1245, 7
    %v1247 = vsub.s32 %v1244, %v1246
    %v1248 = vrot.slane %v1234, %v1247
    %v1249 = vcombine.high %v1241, %v1241
    %v1250 = vcombine.high %v1248, %v1248
    %1255 = vst.msk [vmem:[#allocation5 + $0x3] sm:$0x1] %vm460, %v1241
    %1256 = vst.msk [vmem:[#allocation5 + $0xb] sm:$0x1] %vm460, %v1248
    %1257 = vst.msk [vmem:[#allocation5 + $0x13] sm:$0x1] %vm460, %v1249
    %1258 = vst.msk [vmem:[#allocation5 + $0x1b] sm:$0x1] %vm460, %v1250
    %v1260 = vsel %vm212, %v1224, 0
    %1262 = vmatprep.subr.mxu0 0.0
    %1263 = vmatpush1.msra.mxu0 0.0
    %1264 = vmatprep.subr.mxu0 0.0
    %1265 = vmatpush1.msra.mxu0 0.0
    %1266 = vmatprep.subr.mxu0 0.0
    %1267 = vmatpush1.msra.mxu0 0.0
    %1268 = vmatprep.subr.mxu0 0.0
    %1269 = vmatpush1.msra.mxu0 0.0
    %1270 = vmatprep.subr.mxu0 0.0
    %1271 = vmatpush1.msra.mxu0 0.0
    %1272 = vmatprep.subr.mxu0 0.0
    %1273 = vmatpush1.msra.mxu0 0.0
    %1274 = vmatprep.subr.mxu0 0.0
    %1275 = vmatpush1.msra.mxu0 0.0
    %1276 = vmatprep.subr.mxu0 0.0
    %1277 = vmatpush1.msra.mxu0 0.0
    %1278 = vmatprep.subr.mxu0 0.0
    %1279 = vmatpush1.msra.mxu0 0.0
    %1280 = vmatprep.subr.mxu0 0.0
    %1281 = vmatpush1.msra.mxu0 0.0
    %1282 = vmatprep.subr.mxu0 0.0
    %1283 = vmatpush1.msra.mxu0 0.0
    %1284 = vmatprep.subr.mxu0 0.0
    %1285 = vmatpush1.msra.mxu0 0.0
    %1286 = vmatprep.subr.mxu0 0.0
    %1287 = vmatpush1.msra.mxu0 %v211
    %1288 = vmatprep.subr.mxu0 0.0
    %1289 = vmatpush1.msra.mxu0 %v210
    %1290 = vmatprep.subr.mxu0 0.0
    %1291 = vmatpush1.msra.mxu0 %v209
    %1292 = vmatprep.subr.mxu0 0.0
    %1293 = vmatpush1.msra.mxu0 %v208
    %1294 = vmatprep.subr.mxu0 0.0
    %1295 = vmatpush2.msra.mxu0 0.0
    %1296 = vmatprep.subr.mxu0 0.0
    %1297 = vmatpush2.msra.mxu0 0.0
    %1298 = vmatprep.subr.mxu0 0.0
    %1299 = vmatpush2.msra.mxu0 0.0
    %1300 = vmatprep.subr.mxu0 0.0
    %1301 = vmatpush2.msra.mxu0 0.0
    %1302 = vmatprep.subr.mxu0 0.0
    %1303 = vmatpush2.msra.mxu0 0.0
    %1304 = vmatprep.subr.mxu0 0.0
    %1305 = vmatpush2.msra.mxu0 0.0
    %1306 = vmatprep.subr.mxu0 0.0
    %1307 = vmatpush2.msra.mxu0 0.0
    %1308 = vmatprep.subr.mxu0 0.0
    %1309 = vmatpush2.msra.mxu0 0.0
    %1310 = vmatprep.subr.mxu0 0.0
    %1311 = vmatpush2.msra.mxu0 0.0
    %1312 = vmatprep.subr.mxu0 0.0
    %1313 = vmatpush2.msra.mxu0 0.0
    %1314 = vmatprep.subr.mxu0 0.0
    %1315 = vmatpush2.msra.mxu0 0.0
    %1316 = vmatprep.subr.mxu0 0.0
    %1317 = vmatpush2.msra.mxu0 0.0
    %1318 = vmatprep.subr.mxu0 0.0
    %1319 = vmatpush2.msra.mxu0 0.0
    %1320 = vmatprep.subr.mxu0 0.0
    %1321 = vmatpush2.msra.mxu0 0.0
    %1322 = vmatprep.subr.mxu0 0.0
    %1323 = vmatpush2.msra.mxu0 0.0
    %1324 = vmatprep.subr.mxu0 0.0
    %1325 = vmatpush2.msra.mxu0 0.0
    %1326 = vmatprep.mubr.f32.mxu0 0.0
    %1327 = vmatmul.mubr.f32.gmra.mxu0 %v1260
    %v1328 = vpop.f32.mrf.mxu0
    %v1329 = vadd.f32 0.0, %v1328
    %v1330 = vpop.f32.mrf.mxu0
    %1331 = vdwg.mxu0
    %v1333 = vrot.slane %v1329, 4
    %v1334 = vrot.slane %v1329, 5
    %v1335 = vrot.slane %v1329, 6
    %v1336 = vrot.slane %v1329, 7
    %v1341 = vadd.f32 %v189, %v1333
    %v1342 = vadd.f32 %v194, %v1334
    %v1343 = vadd.f32 %v199, %v1335
    %v1344 = vadd.f32 %v204, %v1336
    %v1345 = vxor.u32 %v1341, 2147483648
    %v1346 = vxor.u32 %v1342, 2147483648
    %v1347 = vxor.u32 %v1343, 2147483648
    %v1348 = vxor.u32 %v1344, 2147483648
    %v1349 = vmul.f32 %v1345, 1.442695
    %v1350 = vpow.pop %v1349
    %v1351 = vmul.f32 %v1346, 1.442695
    %v1352 = vpow.pop %v1351
    %v1353 = vmul.f32 %v1347, 1.442695
    %v1354 = vpow.pop %v1353
    %v1355 = vmul.f32 %v1348, 1.442695
    %v1356 = vpow.pop %v1355
    %v1357 = vadd.f32 %v1350, 1.0
    %v1358 = vadd.f32 %v1352, 1.0
    %v1359 = vadd.f32 %v1354, 1.0
    %v1360 = vadd.f32 %v1356, 1.0
    %v1361 = vrcp.pop %v1357
    %v1362 = vmul.f32 1.0, %v1361
    %v1363 = vrcp.pop %v1358
    %v1364 = vmul.f32 1.0, %v1363
    %v1365 = vrcp.pop %v1359
    %v1366 = vmul.f32 1.0, %v1365
    %v1367 = vrcp.pop %v1360
    %v1368 = vmul.f32 1.0, %v1367
    %v1369 = vtanh.pop %v1341
    %v1370 = vtanh.pop %v1342
    %v1371 = vtanh.pop %v1343
    %v1372 = vtanh.pop %v1344
    %v1374 = vrot.slane %v1210, 4
    %v1375 = vrot.slane %v1210, 5
    %v1376 = vrot.slane %v1210, 6
    %v1377 = vrot.slane %v1210, 7
    %1378 = vrot.lane.b32.xlu0 %v1374, 32
    %v1379 = vpop.permute.xlu0 %1378
    %1380 = vrot.lane.b32.xlu0 %v1375, 32
    %v1381 = vpop.permute.xlu0 %1380
    %1382 = vrot.lane.b32.xlu0 %v1376, 32
    %v1383 = vpop.permute.xlu0 %1382
    %1384 = vrot.lane.b32.xlu0 %v1377, 32
    %v1385 = vpop.permute.xlu0 %1384
    %v1390 = vmul.f32 %v1362, %v1379
    %v1391 = vmul.f32 %v1364, %v1381
    %v1392 = vmul.f32 %v1366, %v1383
    %v1393 = vmul.f32 %v1368, %v1385
    %1398 = vrot.lane.b32.xlu0 %v1369, 64
    %v1399 = vpop.permute.xlu0 %1398
    %1400 = vrot.lane.b32.xlu0 %v1370, 64
    %v1401 = vpop.permute.xlu0 %1400
    %1402 = vrot.lane.b32.xlu0 %v1371, 64
    %v1403 = vpop.permute.xlu0 %1402
    %1404 = vrot.lane.b32.xlu0 %v1372, 64
    %v1405 = vpop.permute.xlu0 %1404
    %v1410 = vmul.f32 %v1362, %v1399
    %v1411 = vmul.f32 %v1364, %v1401
    %v1412 = vmul.f32 %v1366, %v1403
    %v1413 = vmul.f32 %v1368, %v1405
    %1418 = vrot.lane.b32.xlu0 %v1410, 32
    %v1419 = vpop.permute.xlu0 %1418
    %1420 = vrot.lane.b32.xlu0 %v1411, 32
    %v1421 = vpop.permute.xlu0 %1420
    %1422 = vrot.lane.b32.xlu0 %v1412, 32
    %v1423 = vpop.permute.xlu0 %1422
    %1424 = vrot.lane.b32.xlu0 %v1413, 32
    %v1425 = vpop.permute.xlu0 %1424
    %v1430 = vadd.f32 %v1390, %v1419
    %v1431 = vadd.f32 %v1391, %v1421
    %v1432 = vadd.f32 %v1392, %v1423
    %v1433 = vadd.f32 %v1393, %v1425
    %v1434 = vtanh.pop %v1430
    %v1435 = vtanh.pop %v1431
    %v1436 = vtanh.pop %v1432
    %v1437 = vtanh.pop %v1433
    %1442 = vrot.lane.b32.xlu0 %v1434, 64
    %v1443 = vpop.permute.xlu0 %1442
    %1444 = vrot.lane.b32.xlu0 %v1435, 64
    %v1445 = vpop.permute.xlu0 %1444
    %1446 = vrot.lane.b32.xlu0 %v1436, 64
    %v1447 = vpop.permute.xlu0 %1446
    %1448 = vrot.lane.b32.xlu0 %v1437, 64
    %v1449 = vpop.permute.xlu0 %1448
    %v1454 = vmul.f32 %v1362, %v1443
    %v1455 = vmul.f32 %v1364, %v1445
    %v1456 = vmul.f32 %v1366, %v1447
    %v1457 = vmul.f32 %v1368, %v1449
    %vm1458 = vcmp.gt.s32.totalorder %v207, 4
    %v1459 = vsel %vm1458, 1, 0
    %1460 = vset.pattern.permute.xlu0 0
    %1461 = vperm.xlu0 %1460, %v1459
    %v1462 = vpop.permute.xlu0 %1461
    %vm1463 = vcmp.eq.s32.totalorder %v1462, 1
    %v1468 = vrot.slane %v1430, 4
    %v1469 = vrot.slane %v1431, 3
    %v1470 = vsel %vm405, %v1469, %v1468
    %v1471 = vrot.slane %v1432, 2
    %v1472 = vsel %vm408, %v1471, %v1470
    %v1473 = vrot.slane %v1433, 1
    %v1474 = vsel %vm411, %v1473, %v1472
    %1475 = vrot.lane.b32.xlu0 %v1474, 96
    %v1476 = vpop.permute.xlu0 %1475
    %v1478 = vsel %vm1463, %v1476, %v1210
    %v1483 = vrot.slane %v1454, 4
    %v1484 = vrot.slane %v1455, 3
    %v1485 = vsel %vm405, %v1484, %v1483
    %v1486 = vrot.slane %v1456, 2
    %v1487 = vsel %vm408, %v1486, %v1485
    %v1488 = vrot.slane %v1457, 1
    %v1489 = vsel %vm411, %v1488, %v1487
    %1490 = vrot.lane.b32.xlu0 %v1489, 32
    %v1491 = vpop.permute.xlu0 %1490
    %v1493 = vsel %vm1463, %v1491, %v1224
    %v1494 = vsel %vm1463, %v1491, 0.0
    %v1497 = vunpack.c.l.s4 1966171168
    %v1498 = vunpack.c.0.s8 %v1497
    %v1499 = vlaneseq
    %v1500 = vshrl.u32 %v1499, 7
    %v1501 = vsub.s32 %v1498, %v1500
    %v1502 = vrot.slane %v1494, %v1501
    %v1503 = vcombine.high %v1502, %v1502
    %v1505 = vunpack.c.l.s4 1966171168
    %v1506 = vunpack.c.0.s8 %v1505
    %v1507 = vlaneseq
    %v1508 = vshrl.u32 %v1507, 7
    %v1509 = vsub.s32 %v1506, %v1508
    %v1510 = vrot.slane %v1502, %v1509
    %v1512 = vunpack.c.l.s4 1966171168
    %v1513 = vunpack.c.0.s8 %v1512
    %v1514 = vlaneseq
    %v1515 = vshrl.u32 %v1514, 7
    %v1516 = vsub.s32 %v1513, %v1515
    %v1517 = vrot.slane %v1503, %v1516
    %v1518 = vcombine.high %v1510, %v1510
    %v1519 = vcombine.high %v1517, %v1517
    %1524 = vst.msk [vmem:[#allocation5 + $0x4] sm:$0x1] %vm460, %v1510
    %1525 = vst.msk [vmem:[#allocation5 + $0xc] sm:$0x1] %vm460, %v1517
    %1526 = vst.msk [vmem:[#allocation5 + $0x14] sm:$0x1] %vm460, %v1518
    %1527 = vst.msk [vmem:[#allocation5 + $0x1c] sm:$0x1] %vm460, %v1519
    %v1529 = vsel %vm212, %v1493, 0
    %1531 = vmatprep.subr.mxu0 0.0
    %1532 = vmatpush1.msra.mxu0 0.0
    %1533 = vmatprep.subr.mxu0 0.0
    %1534 = vmatpush1.msra.mxu0 0.0
    %1535 = vmatprep.subr.mxu0 0.0
    %1536 = vmatpush1.msra.mxu0 0.0
    %1537 = vmatprep.subr.mxu0 0.0
    %1538 = vmatpush1.msra.mxu0 0.0
    %1539 = vmatprep.subr.mxu0 0.0
    %1540 = vmatpush1.msra.mxu0 0.0
    %1541 = vmatprep.subr.mxu0 0.0
    %1542 = vmatpush1.msra.mxu0 0.0
    %1543 = vmatprep.subr.mxu0 0.0
    %1544 = vmatpush1.msra.mxu0 0.0
    %1545 = vmatprep.subr.mxu0 0.0
    %1546 = vmatpush1.msra.mxu0 0.0
    %1547 = vmatprep.subr.mxu0 0.0
    %1548 = vmatpush1.msra.mxu0 0.0
    %1549 = vmatprep.subr.mxu0 0.0
    %1550 = vmatpush1.msra.mxu0 0.0
    %1551 = vmatprep.subr.mxu0 0.0
    %1552 = vmatpush1.msra.mxu0 0.0
    %1553 = vmatprep.subr.mxu0 0.0
    %1554 = vmatpush1.msra.mxu0 0.0
    %1555 = vmatprep.subr.mxu0 0.0
    %1556 = vmatpush1.msra.mxu0 %v211
    %1557 = vmatprep.subr.mxu0 0.0
    %1558 = vmatpush1.msra.mxu0 %v210
    %1559 = vmatprep.subr.mxu0 0.0
    %1560 = vmatpush1.msra.mxu0 %v209
    %1561 = vmatprep.subr.mxu0 0.0
    %1562 = vmatpush1.msra.mxu0 %v208
    %1563 = vmatprep.subr.mxu0 0.0
    %1564 = vmatpush2.msra.mxu0 0.0
    %1565 = vmatprep.subr.mxu0 0.0
    %1566 = vmatpush2.msra.mxu0 0.0
    %1567 = vmatprep.subr.mxu0 0.0
    %1568 = vmatpush2.msra.mxu0 0.0
    %1569 = vmatprep.subr.mxu0 0.0
    %1570 = vmatpush2.msra.mxu0 0.0
    %1571 = vmatprep.subr.mxu0 0.0
    %1572 = vmatpush2.msra.mxu0 0.0
    %1573 = vmatprep.subr.mxu0 0.0
    %1574 = vmatpush2.msra.mxu0 0.0
    %1575 = vmatprep.subr.mxu0 0.0
    %1576 = vmatpush2.msra.mxu0 0.0
    %1577 = vmatprep.subr.mxu0 0.0
    %1578 = vmatpush2.msra.mxu0 0.0
    %1579 = vmatprep.subr.mxu0 0.0
    %1580 = vmatpush2.msra.mxu0 0.0
    %1581 = vmatprep.subr.mxu0 0.0
    %1582 = vmatpush2.msra.mxu0 0.0
    %1583 = vmatprep.subr.mxu0 0.0
    %1584 = vmatpush2.msra.mxu0 0.0
    %1585 = vmatprep.subr.mxu0 0.0
    %1586 = vmatpush2.msra.mxu0 0.0
    %1587 = vmatprep.subr.mxu0 0.0
    %1588 = vmatpush2.msra.mxu0 0.0
    %1589 = vmatprep.subr.mxu0 0.0
    %1590 = vmatpush2.msra.mxu0 0.0
    %1591 = vmatprep.subr.mxu0 0.0
    %1592 = vmatpush2.msra.mxu0 0.0
    %1593 = vmatprep.subr.mxu0 0.0
    %1594 = vmatpush2.msra.mxu0 0.0
    %1595 = vmatprep.mubr.f32.mxu0 0.0
    %1596 = vmatmul.mubr.f32.gmra.mxu0 %v1529
    %v1597 = vpop.f32.mrf.mxu0
    %v1598 = vadd.f32 0.0, %v1597
    %v1599 = vpop.f32.mrf.mxu0
    %1600 = vdwg.mxu0
    %v1602 = vrot.slane %v1598, 3
    %v1603 = vrot.slane %v1598, 4
    %v1604 = vrot.slane %v1598, 5
    %v1605 = vrot.slane %v1598, 6
    %v1610 = vadd.f32 %v189, %v1602
    %v1611 = vadd.f32 %v194, %v1603
    %v1612 = vadd.f32 %v199, %v1604
    %v1613 = vadd.f32 %v204, %v1605
    %v1614 = vxor.u32 %v1610, 2147483648
    %v1615 = vxor.u32 %v1611, 2147483648
    %v1616 = vxor.u32 %v1612, 2147483648
    %v1617 = vxor.u32 %v1613, 2147483648
    %v1618 = vmul.f32 %v1614, 1.442695
    %v1619 = vpow.pop %v1618
    %v1620 = vmul.f32 %v1615, 1.442695
    %v1621 = vpow.pop %v1620
    %v1622 = vmul.f32 %v1616, 1.442695
    %v1623 = vpow.pop %v1622
    %v1624 = vmul.f32 %v1617, 1.442695
    %v1625 = vpow.pop %v1624
    %v1626 = vadd.f32 %v1619, 1.0
    %v1627 = vadd.f32 %v1621, 1.0
    %v1628 = vadd.f32 %v1623, 1.0
    %v1629 = vadd.f32 %v1625, 1.0
    %v1630 = vrcp.pop %v1626
    %v1631 = vmul.f32 1.0, %v1630
    %v1632 = vrcp.pop %v1627
    %v1633 = vmul.f32 1.0, %v1632
    %v1634 = vrcp.pop %v1628
    %v1635 = vmul.f32 1.0, %v1634
    %v1636 = vrcp.pop %v1629
    %v1637 = vmul.f32 1.0, %v1636
    %v1638 = vtanh.pop %v1610
    %v1639 = vtanh.pop %v1611
    %v1640 = vtanh.pop %v1612
    %v1641 = vtanh.pop %v1613
    %v1643 = vrot.slane %v1478, 3
    %v1644 = vrot.slane %v1478, 4
    %v1645 = vrot.slane %v1478, 5
    %v1646 = vrot.slane %v1478, 6
    %1647 = vrot.lane.b32.xlu0 %v1643, 32
    %v1648 = vpop.permute.xlu0 %1647
    %1649 = vrot.lane.b32.xlu0 %v1644, 32
    %v1650 = vpop.permute.xlu0 %1649
    %1651 = vrot.lane.b32.xlu0 %v1645, 32
    %v1652 = vpop.permute.xlu0 %1651
    %1653 = vrot.lane.b32.xlu0 %v1646, 32
    %v1654 = vpop.permute.xlu0 %1653
    %v1659 = vmul.f32 %v1631, %v1648
    %v1660 = vmul.f32 %v1633, %v1650
    %v1661 = vmul.f32 %v1635, %v1652
    %v1662 = vmul.f32 %v1637, %v1654
    %1667 = vrot.lane.b32.xlu0 %v1638, 64
    %v1668 = vpop.permute.xlu0 %1667
    %1669 = vrot.lane.b32.xlu0 %v1639, 64
    %v1670 = vpop.permute.xlu0 %1669
    %1671 = vrot.lane.b32.xlu0 %v1640, 64
    %v1672 = vpop.permute.xlu0 %1671
    %1673 = vrot.lane.b32.xlu0 %v1641, 64
    %v1674 = vpop.permute.xlu0 %1673
    %v1679 = vmul.f32 %v1631, %v1668
    %v1680 = vmul.f32 %v1633, %v1670
    %v1681 = vmul.f32 %v1635, %v1672
    %v1682 = vmul.f32 %v1637, %v1674
    %1687 = vrot.lane.b32.xlu0 %v1679, 32
    %v1688 = vpop.permute.xlu0 %1687
    %1689 = vrot.lane.b32.xlu0 %v1680, 32
    %v1690 = vpop.permute.xlu0 %1689
    %1691 = vrot.lane.b32.xlu0 %v1681, 32
    %v1692 = vpop.permute.xlu0 %1691
    %1693 = vrot.lane.b32.xlu0 %v1682, 32
    %v1694 = vpop.permute.xlu0 %1693
    %v1699 = vadd.f32 %v1659, %v1688
    %v1700 = vadd.f32 %v1660, %v1690
    %v1701 = vadd.f32 %v1661, %v1692
    %v1702 = vadd.f32 %v1662, %v1694
    %v1703 = vtanh.pop %v1699
    %v1704 = vtanh.pop %v1700
    %v1705 = vtanh.pop %v1701
    %v1706 = vtanh.pop %v1702
    %1711 = vrot.lane.b32.xlu0 %v1703, 64
    %v1712 = vpop.permute.xlu0 %1711
    %1713 = vrot.lane.b32.xlu0 %v1704, 64
    %v1714 = vpop.permute.xlu0 %1713
    %1715 = vrot.lane.b32.xlu0 %v1705, 64
    %v1716 = vpop.permute.xlu0 %1715
    %1717 = vrot.lane.b32.xlu0 %v1706, 64
    %v1718 = vpop.permute.xlu0 %1717
    %v1723 = vmul.f32 %v1631, %v1712
    %v1724 = vmul.f32 %v1633, %v1714
    %v1725 = vmul.f32 %v1635, %v1716
    %v1726 = vmul.f32 %v1637, %v1718
    %vm1727 = vcmp.gt.s32.totalorder %v207, 5
    %v1728 = vsel %vm1727, 1, 0
    %1729 = vset.pattern.permute.xlu0 0
    %1730 = vperm.xlu0 %1729, %v1728
    %v1731 = vpop.permute.xlu0 %1730
    %vm1732 = vcmp.eq.s32.totalorder %v1731, 1
    %v1737 = vrot.slane %v1699, 5
    %v1738 = vrot.slane %v1700, 4
    %v1739 = vsel %vm405, %v1738, %v1737
    %v1740 = vrot.slane %v1701, 3
    %v1741 = vsel %vm408, %v1740, %v1739
    %v1742 = vrot.slane %v1702, 2
    %v1743 = vsel %vm411, %v1742, %v1741
    %1744 = vrot.lane.b32.xlu0 %v1743, 96
    %v1745 = vpop.permute.xlu0 %1744
    %v1747 = vsel %vm1732, %v1745, %v1478
    %v1752 = vrot.slane %v1723, 5
    %v1753 = vrot.slane %v1724, 4
    %v1754 = vsel %vm405, %v1753, %v1752
    %v1755 = vrot.slane %v1725, 3
    %v1756 = vsel %vm408, %v1755, %v1754
    %v1757 = vrot.slane %v1726, 2
    %v1758 = vsel %vm411, %v1757, %v1756
    %1759 = vrot.lane.b32.xlu0 %v1758, 32
    %v1760 = vpop.permute.xlu0 %1759
    %v1762 = vsel %vm1732, %v1760, %v1493
    %v1763 = vsel %vm1732, %v1760, 0.0
    %v1766 = vunpack.c.l.s4 1966171168
    %v1767 = vunpack.c.0.s8 %v1766
    %v1768 = vlaneseq
    %v1769 = vshrl.u32 %v1768, 7
    %v1770 = vsub.s32 %v1767, %v1769
    %v1771 = vrot.slane %v1763, %v1770
    %v1772 = vcombine.high %v1771, %v1771
    %v1774 = vunpack.c.l.s4 1966171168
    %v1775 = vunpack.c.0.s8 %v1774
    %v1776 = vlaneseq
    %v1777 = vshrl.u32 %v1776, 7
    %v1778 = vsub.s32 %v1775, %v1777
    %v1779 = vrot.slane %v1771, %v1778
    %v1781 = vunpack.c.l.s4 1966171168
    %v1782 = vunpack.c.0.s8 %v1781
    %v1783 = vlaneseq
    %v1784 = vshrl.u32 %v1783, 7
    %v1785 = vsub.s32 %v1782, %v1784
    %v1786 = vrot.slane %v1772, %v1785
    %v1787 = vcombine.high %v1779, %v1779
    %v1788 = vcombine.high %v1786, %v1786
    %1793 = vst.msk [vmem:[#allocation5 + $0x5] sm:$0x1] %vm460, %v1779
    %1794 = vst.msk [vmem:[#allocation5 + $0xd] sm:$0x1] %vm460, %v1786
    %1795 = vst.msk [vmem:[#allocation5 + $0x15] sm:$0x1] %vm460, %v1787
    %1796 = vst.msk [vmem:[#allocation5 + $0x1d] sm:$0x1] %vm460, %v1788
    %v1798 = vsel %vm212, %v1762, 0
    %1800 = vmatprep.subr.mxu0 0.0
    %1801 = vmatpush1.msra.mxu0 0.0
    %1802 = vmatprep.subr.mxu0 0.0
    %1803 = vmatpush1.msra.mxu0 0.0
    %1804 = vmatprep.subr.mxu0 0.0
    %1805 = vmatpush1.msra.mxu0 0.0
    %1806 = vmatprep.subr.mxu0 0.0
    %1807 = vmatpush1.msra.mxu0 0.0
    %1808 = vmatprep.subr.mxu0 0.0
    %1809 = vmatpush1.msra.mxu0 0.0
    %1810 = vmatprep.subr.mxu0 0.0
    %1811 = vmatpush1.msra.mxu0 0.0
    %1812 = vmatprep.subr.mxu0 0.0
    %1813 = vmatpush1.msra.mxu0 0.0
    %1814 = vmatprep.subr.mxu0 0.0
    %1815 = vmatpush1.msra.mxu0 0.0
    %1816 = vmatprep.subr.mxu0 0.0
    %1817 = vmatpush1.msra.mxu0 0.0
    %1818 = vmatprep.subr.mxu0 0.0
    %1819 = vmatpush1.msra.mxu0 0.0
    %1820 = vmatprep.subr.mxu0 0.0
    %1821 = vmatpush1.msra.mxu0 0.0
    %1822 = vmatprep.subr.mxu0 0.0
    %1823 = vmatpush1.msra.mxu0 0.0
    %1824 = vmatprep.subr.mxu0 0.0
    %1825 = vmatpush1.msra.mxu0 %v211
    %1826 = vmatprep.subr.mxu0 0.0
    %1827 = vmatpush1.msra.mxu0 %v210
    %1828 = vmatprep.subr.mxu0 0.0
    %1829 = vmatpush1.msra.mxu0 %v209
    %1830 = vmatprep.subr.mxu0 0.0
    %1831 = vmatpush1.msra.mxu0 %v208
    %1832 = vmatprep.subr.mxu0 0.0
    %1833 = vmatpush2.msra.mxu0 0.0
    %1834 = vmatprep.subr.mxu0 0.0
    %1835 = vmatpush2.msra.mxu0 0.0
    %1836 = vmatprep.subr.mxu0 0.0
    %1837 = vmatpush2.msra.mxu0 0.0
    %1838 = vmatprep.subr.mxu0 0.0
    %1839 = vmatpush2.msra.mxu0 0.0
    %1840 = vmatprep.subr.mxu0 0.0
    %1841 = vmatpush2.msra.mxu0 0.0
    %1842 = vmatprep.subr.mxu0 0.0
    %1843 = vmatpush2.msra.mxu0 0.0
    %1844 = vmatprep.subr.mxu0 0.0
    %1845 = vmatpush2.msra.mxu0 0.0
    %1846 = vmatprep.subr.mxu0 0.0
    %1847 = vmatpush2.msra.mxu0 0.0
    %1848 = vmatprep.subr.mxu0 0.0
    %1849 = vmatpush2.msra.mxu0 0.0
    %1850 = vmatprep.subr.mxu0 0.0
    %1851 = vmatpush2.msra.mxu0 0.0
    %1852 = vmatprep.subr.mxu0 0.0
    %1853 = vmatpush2.msra.mxu0 0.0
    %1854 = vmatprep.subr.mxu0 0.0
    %1855 = vmatpush2.msra.mxu0 0.0
    %1856 = vmatprep.subr.mxu0 0.0
    %1857 = vmatpush2.msra.mxu0 0.0
    %1858 = vmatprep.subr.mxu0 0.0
    %1859 = vmatpush2.msra.mxu0 0.0
    %1860 = vmatprep.subr.mxu0 0.0
    %1861 = vmatpush2.msra.mxu0 0.0
    %1862 = vmatprep.subr.mxu0 0.0
    %1863 = vmatpush2.msra.mxu0 0.0
    %1864 = vmatprep.mubr.f32.mxu0 0.0
    %1865 = vmatmul.mubr.f32.gmra.mxu0 %v1798
    %v1866 = vpop.f32.mrf.mxu0
    %v1867 = vadd.f32 0.0, %v1866
    %v1868 = vpop.f32.mrf.mxu0
    %1869 = vdwg.mxu0
    %v1871 = vrot.slane %v1867, 2
    %v1872 = vrot.slane %v1867, 3
    %v1873 = vrot.slane %v1867, 4
    %v1874 = vrot.slane %v1867, 5
    %v1879 = vadd.f32 %v189, %v1871
    %v1880 = vadd.f32 %v194, %v1872
    %v1881 = vadd.f32 %v199, %v1873
    %v1882 = vadd.f32 %v204, %v1874
    %v1883 = vxor.u32 %v1879, 2147483648
    %v1884 = vxor.u32 %v1880, 2147483648
    %v1885 = vxor.u32 %v1881, 2147483648
    %v1886 = vxor.u32 %v1882, 2147483648
    %v1887 = vmul.f32 %v1883, 1.442695
    %v1888 = vpow.pop %v1887
    %v1889 = vmul.f32 %v1884, 1.442695
    %v1890 = vpow.pop %v1889
    %v1891 = vmul.f32 %v1885, 1.442695
    %v1892 = vpow.pop %v1891
    %v1893 = vmul.f32 %v1886, 1.442695
    %v1894 = vpow.pop %v1893
    %v1895 = vadd.f32 %v1888, 1.0
    %v1896 = vadd.f32 %v1890, 1.0
    %v1897 = vadd.f32 %v1892, 1.0
    %v1898 = vadd.f32 %v1894, 1.0
    %v1899 = vrcp.pop %v1895
    %v1900 = vmul.f32 1.0, %v1899
    %v1901 = vrcp.pop %v1896
    %v1902 = vmul.f32 1.0, %v1901
    %v1903 = vrcp.pop %v1897
    %v1904 = vmul.f32 1.0, %v1903
    %v1905 = vrcp.pop %v1898
    %v1906 = vmul.f32 1.0, %v1905
    %v1907 = vtanh.pop %v1879
    %v1908 = vtanh.pop %v1880
    %v1909 = vtanh.pop %v1881
    %v1910 = vtanh.pop %v1882
    %v1912 = vrot.slane %v1747, 2
    %v1913 = vrot.slane %v1747, 3
    %v1914 = vrot.slane %v1747, 4
    %v1915 = vrot.slane %v1747, 5
    %1916 = vrot.lane.b32.xlu0 %v1912, 32
    %v1917 = vpop.permute.xlu0 %1916
    %1918 = vrot.lane.b32.xlu0 %v1913, 32
    %v1919 = vpop.permute.xlu0 %1918
    %1920 = vrot.lane.b32.xlu0 %v1914, 32
    %v1921 = vpop.permute.xlu0 %1920
    %1922 = vrot.lane.b32.xlu0 %v1915, 32
    %v1923 = vpop.permute.xlu0 %1922
    %v1928 = vmul.f32 %v1900, %v1917
    %v1929 = vmul.f32 %v1902, %v1919
    %v1930 = vmul.f32 %v1904, %v1921
    %v1931 = vmul.f32 %v1906, %v1923
    %1936 = vrot.lane.b32.xlu0 %v1907, 64
    %v1937 = vpop.permute.xlu0 %1936
    %1938 = vrot.lane.b32.xlu0 %v1908, 64
    %v1939 = vpop.permute.xlu0 %1938
    %1940 = vrot.lane.b32.xlu0 %v1909, 64
    %v1941 = vpop.permute.xlu0 %1940
    %1942 = vrot.lane.b32.xlu0 %v1910, 64
    %v1943 = vpop.permute.xlu0 %1942
    %v1948 = vmul.f32 %v1900, %v1937
    %v1949 = vmul.f32 %v1902, %v1939
    %v1950 = vmul.f32 %v1904, %v1941
    %v1951 = vmul.f32 %v1906, %v1943
    %1956 = vrot.lane.b32.xlu0 %v1948, 32
    %v1957 = vpop.permute.xlu0 %1956
    %1958 = vrot.lane.b32.xlu0 %v1949, 32
    %v1959 = vpop.permute.xlu0 %1958
    %1960 = vrot.lane.b32.xlu0 %v1950, 32
    %v1961 = vpop.permute.xlu0 %1960
    %1962 = vrot.lane.b32.xlu0 %v1951, 32
    %v1963 = vpop.permute.xlu0 %1962
    %v1968 = vadd.f32 %v1928, %v1957
    %v1969 = vadd.f32 %v1929, %v1959
    %v1970 = vadd.f32 %v1930, %v1961
    %v1971 = vadd.f32 %v1931, %v1963
    %v1972 = vtanh.pop %v1968
    %v1973 = vtanh.pop %v1969
    %v1974 = vtanh.pop %v1970
    %v1975 = vtanh.pop %v1971
    %1980 = vrot.lane.b32.xlu0 %v1972, 64
    %v1981 = vpop.permute.xlu0 %1980
    %1982 = vrot.lane.b32.xlu0 %v1973, 64
    %v1983 = vpop.permute.xlu0 %1982
    %1984 = vrot.lane.b32.xlu0 %v1974, 64
    %v1985 = vpop.permute.xlu0 %1984
    %1986 = vrot.lane.b32.xlu0 %v1975, 64
    %v1987 = vpop.permute.xlu0 %1986
    %v1992 = vmul.f32 %v1900, %v1981
    %v1993 = vmul.f32 %v1902, %v1983
    %v1994 = vmul.f32 %v1904, %v1985
    %v1995 = vmul.f32 %v1906, %v1987
    %vm1996 = vcmp.gt.s32.totalorder %v207, 6
    %v1997 = vsel %vm1996, 1, 0
    %1998 = vset.pattern.permute.xlu0 0
    %1999 = vperm.xlu0 %1998, %v1997
    %v2000 = vpop.permute.xlu0 %1999
    %vm2001 = vcmp.eq.s32.totalorder %v2000, 1
    %v2006 = vrot.slane %v1968, 6
    %v2007 = vrot.slane %v1969, 5
    %v2008 = vsel %vm405, %v2007, %v2006
    %v2009 = vrot.slane %v1970, 4
    %v2010 = vsel %vm408, %v2009, %v2008
    %v2011 = vrot.slane %v1971, 3
    %v2012 = vsel %vm411, %v2011, %v2010
    %2013 = vrot.lane.b32.xlu0 %v2012, 96
    %v2014 = vpop.permute.xlu0 %2013
    %v2016 = vsel %vm2001, %v2014, %v1747
    %v2021 = vrot.slane %v1992, 6
    %v2022 = vrot.slane %v1993, 5
    %v2023 = vsel %vm405, %v2022, %v2021
    %v2024 = vrot.slane %v1994, 4
    %v2025 = vsel %vm408, %v2024, %v2023
    %v2026 = vrot.slane %v1995, 3
    %v2027 = vsel %vm411, %v2026, %v2025
    %2028 = vrot.lane.b32.xlu0 %v2027, 32
    %v2029 = vpop.permute.xlu0 %2028
    %v2031 = vsel %vm2001, %v2029, %v1762
    %v2032 = vsel %vm2001, %v2029, 0.0
    %v2035 = vunpack.c.l.s4 1966171168
    %v2036 = vunpack.c.0.s8 %v2035
    %v2037 = vlaneseq
    %v2038 = vshrl.u32 %v2037, 7
    %v2039 = vsub.s32 %v2036, %v2038
    %v2040 = vrot.slane %v2032, %v2039
    %v2041 = vcombine.high %v2040, %v2040
    %v2043 = vunpack.c.l.s4 1966171168
    %v2044 = vunpack.c.0.s8 %v2043
    %v2045 = vlaneseq
    %v2046 = vshrl.u32 %v2045, 7
    %v2047 = vsub.s32 %v2044, %v2046
    %v2048 = vrot.slane %v2040, %v2047
    %v2050 = vunpack.c.l.s4 1966171168
    %v2051 = vunpack.c.0.s8 %v2050
    %v2052 = vlaneseq
    %v2053 = vshrl.u32 %v2052, 7
    %v2054 = vsub.s32 %v2051, %v2053
    %v2055 = vrot.slane %v2041, %v2054
    %v2056 = vcombine.high %v2048, %v2048
    %v2057 = vcombine.high %v2055, %v2055
    %2062 = vst.msk [vmem:[#allocation5 + $0x6] sm:$0x1] %vm460, %v2048
    %2063 = vst.msk [vmem:[#allocation5 + $0xe] sm:$0x1] %vm460, %v2055
    %2064 = vst.msk [vmem:[#allocation5 + $0x16] sm:$0x1] %vm460, %v2056
    %2065 = vst.msk [vmem:[#allocation5 + $0x1e] sm:$0x1] %vm460, %v2057
    %v2067 = vsel %vm212, %v2031, 0
    %2069 = vmatprep.subr.mxu0 0.0
    %2070 = vmatpush1.msra.mxu0 0.0
    %2071 = vmatprep.subr.mxu0 0.0
    %2072 = vmatpush1.msra.mxu0 0.0
    %2073 = vmatprep.subr.mxu0 0.0
    %2074 = vmatpush1.msra.mxu0 0.0
    %2075 = vmatprep.subr.mxu0 0.0
    %2076 = vmatpush1.msra.mxu0 0.0
    %2077 = vmatprep.subr.mxu0 0.0
    %2078 = vmatpush1.msra.mxu0 0.0
    %2079 = vmatprep.subr.mxu0 0.0
    %2080 = vmatpush1.msra.mxu0 0.0
    %2081 = vmatprep.subr.mxu0 0.0
    %2082 = vmatpush1.msra.mxu0 0.0
    %2083 = vmatprep.subr.mxu0 0.0
    %2084 = vmatpush1.msra.mxu0 0.0
    %2085 = vmatprep.subr.mxu0 0.0
    %2086 = vmatpush1.msra.mxu0 0.0
    %2087 = vmatprep.subr.mxu0 0.0
    %2088 = vmatpush1.msra.mxu0 0.0
    %2089 = vmatprep.subr.mxu0 0.0
    %2090 = vmatpush1.msra.mxu0 0.0
    %2091 = vmatprep.subr.mxu0 0.0
    %2092 = vmatpush1.msra.mxu0 0.0
    %2093 = vmatprep.subr.mxu0 0.0
    %2094 = vmatpush1.msra.mxu0 %v211
    %2095 = vmatprep.subr.mxu0 0.0
    %2096 = vmatpush1.msra.mxu0 %v210
    %2097 = vmatprep.subr.mxu0 0.0
    %2098 = vmatpush1.msra.mxu0 %v209
    %2099 = vmatprep.subr.mxu0 0.0
    %2100 = vmatpush1.msra.mxu0 %v208
    %2101 = vmatprep.subr.mxu0 0.0
    %2102 = vmatpush2.msra.mxu0 0.0
    %2103 = vmatprep.subr.mxu0 0.0
    %2104 = vmatpush2.msra.mxu0 0.0
    %2105 = vmatprep.subr.mxu0 0.0
    %2106 = vmatpush2.msra.mxu0 0.0
    %2107 = vmatprep.subr.mxu0 0.0
    %2108 = vmatpush2.msra.mxu0 0.0
    %2109 = vmatprep.subr.mxu0 0.0
    %2110 = vmatpush2.msra.mxu0 0.0
    %2111 = vmatprep.subr.mxu0 0.0
    %2112 = vmatpush2.msra.mxu0 0.0
    %2113 = vmatprep.subr.mxu0 0.0
    %2114 = vmatpush2.msra.mxu0 0.0
    %2115 = vmatprep.subr.mxu0 0.0
    %2116 = vmatpush2.msra.mxu0 0.0
    %2117 = vmatprep.subr.mxu0 0.0
    %2118 = vmatpush2.msra.mxu0 0.0
    %2119 = vmatprep.subr.mxu0 0.0
    %2120 = vmatpush2.msra.mxu0 0.0
    %2121 = vmatprep.subr.mxu0 0.0
    %2122 = vmatpush2.msra.mxu0 0.0
    %2123 = vmatprep.subr.mxu0 0.0
    %2124 = vmatpush2.msra.mxu0 0.0
    %2125 = vmatprep.subr.mxu0 0.0
    %2126 = vmatpush2.msra.mxu0 0.0
    %2127 = vmatprep.subr.mxu0 0.0
    %2128 = vmatpush2.msra.mxu0 0.0
    %2129 = vmatprep.subr.mxu0 0.0
    %2130 = vmatpush2.msra.mxu0 0.0
    %2131 = vmatprep.subr.mxu0 0.0
    %2132 = vmatpush2.msra.mxu0 0.0
    %2133 = vmatprep.mubr.f32.mxu0 0.0
    %2134 = vmatmul.mubr.f32.gmra.mxu0 %v2067
    %v2135 = vpop.f32.mrf.mxu0
    %v2136 = vadd.f32 0.0, %v2135
    %v2137 = vpop.f32.mrf.mxu0
    %2138 = vdwg.mxu0
    %v2140 = vrot.slane %v2136, 1
    %v2141 = vrot.slane %v2136, 2
    %v2142 = vrot.slane %v2136, 3
    %v2143 = vrot.slane %v2136, 4
    %v2148 = vadd.f32 %v189, %v2140
    %v2149 = vadd.f32 %v194, %v2141
    %v2150 = vadd.f32 %v199, %v2142
    %v2151 = vadd.f32 %v204, %v2143
    %v2152 = vxor.u32 %v2148, 2147483648
    %v2153 = vxor.u32 %v2149, 2147483648
    %v2154 = vxor.u32 %v2150, 2147483648
    %v2155 = vxor.u32 %v2151, 2147483648
    %v2156 = vmul.f32 %v2152, 1.442695
    %v2157 = vpow.pop %v2156
    %v2158 = vmul.f32 %v2153, 1.442695
    %v2159 = vpow.pop %v2158
    %v2160 = vmul.f32 %v2154, 1.442695
    %v2161 = vpow.pop %v2160
    %v2162 = vmul.f32 %v2155, 1.442695
    %v2163 = vpow.pop %v2162
    %v2164 = vadd.f32 %v2157, 1.0
    %v2165 = vadd.f32 %v2159, 1.0
    %v2166 = vadd.f32 %v2161, 1.0
    %v2167 = vadd.f32 %v2163, 1.0
    %v2168 = vrcp.pop %v2164
    %v2169 = vmul.f32 1.0, %v2168
    %v2170 = vrcp.pop %v2165
    %v2171 = vmul.f32 1.0, %v2170
    %v2172 = vrcp.pop %v2166
    %v2173 = vmul.f32 1.0, %v2172
    %v2174 = vrcp.pop %v2167
    %v2175 = vmul.f32 1.0, %v2174
    %v2176 = vtanh.pop %v2148
    %v2177 = vtanh.pop %v2149
    %v2178 = vtanh.pop %v2150
    %v2179 = vtanh.pop %v2151
    %v2181 = vrot.slane %v2016, 1
    %v2182 = vrot.slane %v2016, 2
    %v2183 = vrot.slane %v2016, 3
    %v2184 = vrot.slane %v2016, 4
    %2185 = vrot.lane.b32.xlu0 %v2181, 32
    %v2186 = vpop.permute.xlu0 %2185
    %2187 = vrot.lane.b32.xlu0 %v2182, 32
    %v2188 = vpop.permute.xlu0 %2187
    %2189 = vrot.lane.b32.xlu0 %v2183, 32
    %v2190 = vpop.permute.xlu0 %2189
    %2191 = vrot.lane.b32.xlu0 %v2184, 32
    %v2192 = vpop.permute.xlu0 %2191
    %v2197 = vmul.f32 %v2169, %v2186
    %v2198 = vmul.f32 %v2171, %v2188
    %v2199 = vmul.f32 %v2173, %v2190
    %v2200 = vmul.f32 %v2175, %v2192
    %2205 = vrot.lane.b32.xlu0 %v2176, 64
    %v2206 = vpop.permute.xlu0 %2205
    %2207 = vrot.lane.b32.xlu0 %v2177, 64
    %v2208 = vpop.permute.xlu0 %2207
    %2209 = vrot.lane.b32.xlu0 %v2178, 64
    %v2210 = vpop.permute.xlu0 %2209
    %2211 = vrot.lane.b32.xlu0 %v2179, 64
    %v2212 = vpop.permute.xlu0 %2211
    %v2217 = vmul.f32 %v2169, %v2206
    %v2218 = vmul.f32 %v2171, %v2208
    %v2219 = vmul.f32 %v2173, %v2210
    %v2220 = vmul.f32 %v2175, %v2212
    %2225 = vrot.lane.b32.xlu0 %v2217, 32
    %v2226 = vpop.permute.xlu0 %2225
    %2227 = vrot.lane.b32.xlu0 %v2218, 32
    %v2228 = vpop.permute.xlu0 %2227
    %2229 = vrot.lane.b32.xlu0 %v2219, 32
    %v2230 = vpop.permute.xlu0 %2229
    %2231 = vrot.lane.b32.xlu0 %v2220, 32
    %v2232 = vpop.permute.xlu0 %2231
    %v2237 = vadd.f32 %v2197, %v2226
    %v2238 = vadd.f32 %v2198, %v2228
    %v2239 = vadd.f32 %v2199, %v2230
    %v2240 = vadd.f32 %v2200, %v2232
    %v2241 = vtanh.pop %v2237
    %v2242 = vtanh.pop %v2238
    %v2243 = vtanh.pop %v2239
    %v2244 = vtanh.pop %v2240
    %2249 = vrot.lane.b32.xlu0 %v2241, 64
    %v2250 = vpop.permute.xlu0 %2249
    %2251 = vrot.lane.b32.xlu0 %v2242, 64
    %v2252 = vpop.permute.xlu0 %2251
    %2253 = vrot.lane.b32.xlu0 %v2243, 64
    %v2254 = vpop.permute.xlu0 %2253
    %2255 = vrot.lane.b32.xlu0 %v2244, 64
    %v2256 = vpop.permute.xlu0 %2255
    %v2261 = vmul.f32 %v2169, %v2250
    %v2262 = vmul.f32 %v2171, %v2252
    %v2263 = vmul.f32 %v2173, %v2254
    %v2264 = vmul.f32 %v2175, %v2256
    %vm2265 = vcmp.gt.s32.totalorder %v207, 7
    %v2266 = vsel %vm2265, 1, 0
    %2267 = vset.pattern.permute.xlu0 0
    %2268 = vperm.xlu0 %2267, %v2266
    %v2269 = vpop.permute.xlu0 %2268
    %vm2270 = vcmp.eq.s32.totalorder %v2269, 1
    %v2275 = vrot.slane %v2261, 7
    %v2276 = vrot.slane %v2262, 6
    %v2277 = vsel %vm405, %v2276, %v2275
    %v2278 = vrot.slane %v2263, 5
    %v2279 = vsel %vm408, %v2278, %v2277
    %v2280 = vrot.slane %v2264, 4
    %v2281 = vsel %vm411, %v2280, %v2279
    %2282 = vrot.lane.b32.xlu0 %v2281, 32
    %v2283 = vpop.permute.xlu0 %2282
    %v2285 = vsel %vm2270, %v2283, %v2031
    %v2286 = vsel %vm2270, %v2283, 0.0
    %v2289 = vunpack.c.l.s4 1966171168
    %v2290 = vunpack.c.0.s8 %v2289
    %v2291 = vlaneseq
    %v2292 = vshrl.u32 %v2291, 7
    %v2293 = vsub.s32 %v2290, %v2292
    %v2294 = vrot.slane %v2286, %v2293
    %v2295 = vcombine.high %v2294, %v2294
    %v2297 = vunpack.c.l.s4 1966171168
    %v2298 = vunpack.c.0.s8 %v2297
    %v2299 = vlaneseq
    %v2300 = vshrl.u32 %v2299, 7
    %v2301 = vsub.s32 %v2298, %v2300
    %v2302 = vrot.slane %v2294, %v2301
    %v2304 = vunpack.c.l.s4 1966171168
    %v2305 = vunpack.c.0.s8 %v2304
    %v2306 = vlaneseq
    %v2307 = vshrl.u32 %v2306, 7
    %v2308 = vsub.s32 %v2305, %v2307
    %v2309 = vrot.slane %v2295, %v2308
    %v2310 = vcombine.high %v2302, %v2302
    %v2311 = vcombine.high %v2309, %v2309
    %2316 = vst.msk [vmem:[#allocation5 + $0x7] sm:$0x1] %vm460, %v2302
    %2317 = vst.msk [vmem:[#allocation5 + $0xf] sm:$0x1] %vm460, %v2309
    %2318 = vst.msk [vmem:[#allocation5 + $0x17] sm:$0x1] %vm460, %v2310
    %2319 = vst.msk [vmem:[#allocation5 + $0x1f] sm:$0x1] %vm460, %v2311
    %vm2320 = vcmask 257024
    %2321 = vst.msk [vmem:[#allocation11] sm:$0xf] %vm2320, %v2285
    %v2322 = vld [vmem:[#allocation5] sm:$0xff]
    %v2323 = vld [vmem:[#allocation5 + $0x8] sm:$0xff]
    %v2324 = vld [vmem:[#allocation5 + $0x10] sm:$0xff]
    %v2325 = vld [vmem:[#allocation5 + $0x18] sm:$0xff]
    %s2326 = smul.u32 4, 4
    %s2327 = smul.u32 %s2326, 8
    %s2328 = sshll.u32 %s2327, 4
    %2329 = dma.done [#allocation6], %s2328
    %v2330 = vpack.c.bf16 %v2323, %v2322
    %v2331 = vpack.c.bf16 %v2325, %v2324
    %v2332 = vld [vmem:[#allocation2] sm:$0xff]
    %v2333 = vld [vmem:[#allocation2 + $0x8] sm:$0xff]
    %v2334 = vld [vmem:[#allocation2 + $0x10] sm:$0xff]
    %v2335 = vld [vmem:[#allocation2 + $0x18] sm:$0xff]
    %v2336 = vld [vmem:[#allocation2 + $0x20] sm:$0xff]
    %v2337 = vld [vmem:[#allocation2 + $0x28] sm:$0xff]
    %v2338 = vld [vmem:[#allocation2 + $0x30] sm:$0xff]
    %v2339 = vld [vmem:[#allocation2 + $0x38] sm:$0xff]
    %v2340 = vld [vmem:[#allocation2 + $0x40] sm:$0xff]
    %v2341 = vld [vmem:[#allocation2 + $0x48] sm:$0xff]
    %v2342 = vld [vmem:[#allocation2 + $0x50] sm:$0xff]
    %v2343 = vld [vmem:[#allocation2 + $0x58] sm:$0xff]
    %v2344 = vld [vmem:[#allocation2 + $0x60] sm:$0xff]
    %v2345 = vld [vmem:[#allocation2 + $0x68] sm:$0xff]
    %v2346 = vld [vmem:[#allocation2 + $0x70] sm:$0xff]
    %v2347 = vld [vmem:[#allocation2 + $0x78] sm:$0xff]
    %v2348 = vld [vmem:[%s6] sm:$0xff]
    %v2350 = vlaneseq
    %v2351 = vshrl.u32 %v2350, 7
    %v2352 = vsub.s32 0, %v2351
    %v2353 = vrot.slane %v2348, %v2352
    %v2354 = vlaneseq
    %v2355 = vshrl.u32 %v2354, 7
    %v2356 = vsub.s32 1, %v2355
    %v2357 = vrot.slane %v2348, %v2356
    %v2358 = vlaneseq
    %v2359 = vshrl.u32 %v2358, 7
    %v2360 = vsub.s32 2, %v2359
    %v2361 = vrot.slane %v2348, %v2360
    %v2362 = vlaneseq
    %v2363 = vshrl.u32 %v2362, 7
    %v2364 = vsub.s32 3, %v2363
    %v2365 = vrot.slane %v2348, %v2364
    %v2366 = vlaneseq
    %v2367 = vshrl.u32 %v2366, 7
    %v2368 = vsub.s32 4, %v2367
    %v2369 = vrot.slane %v2348, %v2368
    %v2370 = vlaneseq
    %v2371 = vshrl.u32 %v2370, 7
    %v2372 = vsub.s32 5, %v2371
    %v2373 = vrot.slane %v2348, %v2372
    %v2374 = vlaneseq
    %v2375 = vshrl.u32 %v2374, 7
    %v2376 = vsub.s32 6, %v2375
    %v2377 = vrot.slane %v2348, %v2376
    %v2378 = vlaneseq
    %v2379 = vshrl.u32 %v2378, 7
    %v2380 = vsub.s32 7, %v2379
    %v2381 = vrot.slane %v2348, %v2380
    %v2406 = vunpack.c.l.b16 %v2332
    %v2407 = vunpack.c.h.b16 %v2332
    %v2408 = vunpack.c.l.b16 %v2333
    %v2409 = vunpack.c.h.b16 %v2333
    %v2410 = vunpack.c.l.b16 %v2334
    %v2411 = vunpack.c.h.b16 %v2334
    %v2412 = vunpack.c.l.b16 %v2335
    %v2413 = vunpack.c.h.b16 %v2335
    %v2414 = vunpack.c.l.b16 %v2336
    %v2415 = vunpack.c.h.b16 %v2336
    %v2416 = vunpack.c.l.b16 %v2337
    %v2417 = vunpack.c.h.b16 %v2337
    %v2418 = vunpack.c.l.b16 %v2338
    %v2419 = vunpack.c.h.b16 %v2338
    %v2420 = vunpack.c.l.b16 %v2339
    %v2421 = vunpack.c.h.b16 %v2339
    %v2422 = vunpack.c.l.b16 %v2340
    %v2423 = vunpack.c.h.b16 %v2340
    %v2424 = vunpack.c.l.b16 %v2341
    %v2425 = vunpack.c.h.b16 %v2341
    %v2426 = vunpack.c.l.b16 %v2342
    %v2427 = vunpack.c.h.b16 %v2342
    %v2428 = vunpack.c.l.b16 %v2343
    %v2429 = vunpack.c.h.b16 %v2343
    %v2430 = vunpack.c.l.b16 %v2344
    %v2431 = vunpack.c.h.b16 %v2344
    %v2432 = vunpack.c.l.b16 %v2345
    %v2433 = vunpack.c.h.b16 %v2345
    %v2434 = vunpack.c.l.b16 %v2346
    %v2435 = vunpack.c.h.b16 %v2346
    %v2436 = vunpack.c.l.b16 %v2347
    %v2437 = vunpack.c.h.b16 %v2347
    %v2438 = vpack.c.b16 %v2414, %v2406
    %v2439 = vpack.c.b16 %v2415, %v2407
    %v2440 = vpack.c.b16 %v2416, %v2408
    %v2441 = vpack.c.b16 %v2417, %v2409
    %v2442 = vpack.c.b16 %v2418, %v2410
    %v2443 = vpack.c.b16 %v2419, %v2411
    %v2444 = vpack.c.b16 %v2420, %v2412
    %v2445 = vpack.c.b16 %v2421, %v2413
    %v2446 = vpack.c.b16 %v2430, %v2422
    %v2447 = vpack.c.b16 %v2431, %v2423
    %v2448 = vpack.c.b16 %v2432, %v2424
    %v2449 = vpack.c.b16 %v2433, %v2425
    %v2450 = vpack.c.b16 %v2434, %v2426
    %v2451 = vpack.c.b16 %v2435, %v2427
    %v2452 = vpack.c.b16 %v2436, %v2428
    %v2453 = vpack.c.b16 %v2437, %v2429
    %v2471 = vsel %vm212, %v2330, 0
    %v2474 = vsel %vm212, %v2331, 0
    %2476 = vmatprep.subr.bf16.mxu0 0
    %2477 = vmatpush1.bf16.msra.mxu0 0
    %2478 = vmatprep.subr.bf16.mxu0 0
    %2479 = vmatpush1.bf16.msra.mxu0 0
    %2480 = vmatprep.subr.bf16.mxu0 0
    %2481 = vmatpush1.bf16.msra.mxu0 0
    %2482 = vmatprep.subr.bf16.mxu0 0
    %2483 = vmatpush1.bf16.msra.mxu0 0
    %2484 = vmatprep.subr.bf16.mxu0 0
    %2485 = vmatpush1.bf16.msra.mxu0 0
    %2486 = vmatprep.subr.bf16.mxu0 0
    %2487 = vmatpush1.bf16.msra.mxu0 0
    %2488 = vmatprep.subr.bf16.mxu0 %v2447
    %2489 = vmatpush1.bf16.msra.mxu0 %v2446
    %2490 = vmatprep.subr.bf16.mxu0 %v2439
    %2491 = vmatpush1.bf16.msra.mxu0 %v2438
    %2492 = vmatprep.subr.bf16.mxu0 0
    %2493 = vmatpush2.bf16.msra.mxu0 0
    %2494 = vmatprep.subr.bf16.mxu0 0
    %2495 = vmatpush2.bf16.msra.mxu0 0
    %2496 = vmatprep.subr.bf16.mxu0 0
    %2497 = vmatpush2.bf16.msra.mxu0 0
    %2498 = vmatprep.subr.bf16.mxu0 0
    %2499 = vmatpush2.bf16.msra.mxu0 0
    %2500 = vmatprep.subr.bf16.mxu0 0
    %2501 = vmatpush2.bf16.msra.mxu0 0
    %2502 = vmatprep.subr.bf16.mxu0 0
    %2503 = vmatpush2.bf16.msra.mxu0 0
    %2504 = vmatprep.subr.bf16.mxu0 0
    %2505 = vmatpush2.bf16.msra.mxu0 0
    %2506 = vmatprep.subr.bf16.mxu0 0
    %2507 = vmatpush2.bf16.msra.mxu0 0
    %2508 = vmatprep.mubr.bf16.mxu0 0
    %2509 = vmatmul.mubr.bf16.gmra.mxu0 %v2471
    %v2510 = vpop.f32.mrf.mxu0
    %v2511 = vadd.f32 %v2353, %v2510
    %v2512 = vpop.f32.mrf.mxu0
    %v2513 = vadd.f32 %v2357, %v2512
    %v2514 = vpop.f32.mrf.mxu0
    %v2515 = vadd.f32 %v2353, %v2514
    %v2516 = vpop.f32.mrf.mxu0
    %v2517 = vadd.f32 %v2357, %v2516
    %2518 = vmatprep.mubr.bf16.mxu0 0
    %2519 = vmatmul.mubr.bf16.gmra.mxu0 %v2474
    %v2520 = vpop.f32.mrf.mxu0
    %v2521 = vadd.f32 %v2353, %v2520
    %v2522 = vpop.f32.mrf.mxu0
    %v2523 = vadd.f32 %v2357, %v2522
    %v2524 = vpop.f32.mrf.mxu0
    %v2525 = vadd.f32 %v2353, %v2524
    %v2526 = vpop.f32.mrf.mxu0
    %v2527 = vadd.f32 %v2357, %v2526
    %2528 = vdwg.mxu0
    %2529 = vmatprep.subr.bf16.mxu0 0
    %2530 = vmatpush1.bf16.msra.mxu0 0
    %2531 = vmatprep.subr.bf16.mxu0 0
    %2532 = vmatpush1.bf16.msra.mxu0 0
    %2533 = vmatprep.subr.bf16.mxu0 0
    %2534 = vmatpush1.bf16.msra.mxu0 0
    %2535 = vmatprep.subr.bf16.mxu0 0
    %2536 = vmatpush1.bf16.msra.mxu0 0
    %2537 = vmatprep.subr.bf16.mxu0 0
    %2538 = vmatpush1.bf16.msra.mxu0 0
    %2539 = vmatprep.subr.bf16.mxu0 0
    %2540 = vmatpush1.bf16.msra.mxu0 0
    %2541 = vmatprep.subr.bf16.mxu0 %v2449
    %2542 = vmatpush1.bf16.msra.mxu0 %v2448
    %2543 = vmatprep.subr.bf16.mxu0 %v2441
    %2544 = vmatpush1.bf16.msra.mxu0 %v2440
    %2545 = vmatprep.subr.bf16.mxu0 0
    %2546 = vmatpush2.bf16.msra.mxu0 0
    %2547 = vmatprep.subr.bf16.mxu0 0
    %2548 = vmatpush2.bf16.msra.mxu0 0
    %2549 = vmatprep.subr.bf16.mxu0 0
    %2550 = vmatpush2.bf16.msra.mxu0 0
    %2551 = vmatprep.subr.bf16.mxu0 0
    %2552 = vmatpush2.bf16.msra.mxu0 0
    %2553 = vmatprep.subr.bf16.mxu0 0
    %2554 = vmatpush2.bf16.msra.mxu0 0
    %2555 = vmatprep.subr.bf16.mxu0 0
    %2556 = vmatpush2.bf16.msra.mxu0 0
    %2557 = vmatprep.subr.bf16.mxu0 0
    %2558 = vmatpush2.bf16.msra.mxu0 0
    %2559 = vmatprep.subr.bf16.mxu0 0
    %2560 = vmatpush2.bf16.msra.mxu0 0
    %2561 = vmatprep.mubr.bf16.mxu0 0
    %2562 = vmatmul.mubr.bf16.gmra.mxu0 %v2471
    %v2563 = vpop.f32.mrf.mxu0
    %v2564 = vadd.f32 %v2361, %v2563
    %v2565 = vpop.f32.mrf.mxu0
    %v2566 = vadd.f32 %v2365, %v2565
    %v2567 = vpop.f32.mrf.mxu0
    %v2568 = vadd.f32 %v2361, %v2567
    %v2569 = vpop.f32.mrf.mxu0
    %v2570 = vadd.f32 %v2365, %v2569
    %2571 = vmatprep.mubr.bf16.mxu0 0
    %2572 = vmatmul.mubr.bf16.gmra.mxu0 %v2474
    %v2573 = vpop.f32.mrf.mxu0
    %v2574 = vadd.f32 %v2361, %v2573
    %v2575 = vpop.f32.mrf.mxu0
    %v2576 = vadd.f32 %v2365, %v2575
    %v2577 = vpop.f32.mrf.mxu0
    %v2578 = vadd.f32 %v2361, %v2577
    %v2579 = vpop.f32.mrf.mxu0
    %v2580 = vadd.f32 %v2365, %v2579
    %2581 = vdwg.mxu0
    %2582 = vmatprep.subr.bf16.mxu0 0
    %2583 = vmatpush1.bf16.msra.mxu0 0
    %2584 = vmatprep.subr.bf16.mxu0 0
    %2585 = vmatpush1.bf16.msra.mxu0 0
    %2586 = vmatprep.subr.bf16.mxu0 0
    %2587 = vmatpush1.bf16.msra.mxu0 0
    %2588 = vmatprep.subr.bf16.mxu0 0
    %2589 = vmatpush1.bf16.msra.mxu0 0
    %2590 = vmatprep.subr.bf16.mxu0 0
    %2591 = vmatpush1.bf16.msra.mxu0 0
    %2592 = vmatprep.subr.bf16.mxu0 0
    %2593 = vmatpush1.bf16.msra.mxu0 0
    %2594 = vmatprep.subr.bf16.mxu0 %v2451
    %2595 = vmatpush1.bf16.msra.mxu0 %v2450
    %2596 = vmatprep.subr.bf16.mxu0 %v2443
    %2597 = vmatpush1.bf16.msra.mxu0 %v2442
    %2598 = vmatprep.subr.bf16.mxu0 0
    %2599 = vmatpush2.bf16.msra.mxu0 0
    %2600 = vmatprep.subr.bf16.mxu0 0
    %2601 = vmatpush2.bf16.msra.mxu0 0
    %2602 = vmatprep.subr.bf16.mxu0 0
    %2603 = vmatpush2.bf16.msra.mxu0 0
    %2604 = vmatprep.subr.bf16.mxu0 0
    %2605 = vmatpush2.bf16.msra.mxu0 0
    %2606 = vmatprep.subr.bf16.mxu0 0
    %2607 = vmatpush2.bf16.msra.mxu0 0
    %2608 = vmatprep.subr.bf16.mxu0 0
    %2609 = vmatpush2.bf16.msra.mxu0 0
    %2610 = vmatprep.subr.bf16.mxu0 0
    %2611 = vmatpush2.bf16.msra.mxu0 0
    %2612 = vmatprep.subr.bf16.mxu0 0
    %2613 = vmatpush2.bf16.msra.mxu0 0
    %2614 = vmatprep.mubr.bf16.mxu0 0
    %2615 = vmatmul.mubr.bf16.gmra.mxu0 %v2471
    %v2616 = vpop.f32.mrf.mxu0
    %v2617 = vadd.f32 %v2369, %v2616
    %v2618 = vpop.f32.mrf.mxu0
    %v2619 = vadd.f32 %v2373, %v2618
    %v2620 = vpop.f32.mrf.mxu0
    %v2621 = vadd.f32 %v2369, %v2620
    %v2622 = vpop.f32.mrf.mxu0
    %v2623 = vadd.f32 %v2373, %v2622
    %2624 = vmatprep.mubr.bf16.mxu0 0
    %2625 = vmatmul.mubr.bf16.gmra.mxu0 %v2474
    %v2626 = vpop.f32.mrf.mxu0
    %v2627 = vadd.f32 %v2369, %v2626
    %v2628 = vpop.f32.mrf.mxu0
    %v2629 = vadd.f32 %v2373, %v2628
    %v2630 = vpop.f32.mrf.mxu0
    %v2631 = vadd.f32 %v2369, %v2630
    %v2632 = vpop.f32.mrf.mxu0
    %v2633 = vadd.f32 %v2373, %v2632
    %2634 = vdwg.mxu0
    %2635 = vmatprep.subr.bf16.mxu0 0
    %2636 = vmatpush1.bf16.msra.mxu0 0
    %2637 = vmatprep.subr.bf16.mxu0 0
    %2638 = vmatpush1.bf16.msra.mxu0 0
    %2639 = vmatprep.subr.bf16.mxu0 0
    %2640 = vmatpush1.bf16.msra.mxu0 0
    %2641 = vmatprep.subr.bf16.mxu0 0
    %2642 = vmatpush1.bf16.msra.mxu0 0
    %2643 = vmatprep.subr.bf16.mxu0 0
    %2644 = vmatpush1.bf16.msra.mxu0 0
    %2645 = vmatprep.subr.bf16.mxu0 0
    %2646 = vmatpush1.bf16.msra.mxu0 0
    %2647 = vmatprep.subr.bf16.mxu0 %v2453
    %2648 = vmatpush1.bf16.msra.mxu0 %v2452
    %2649 = vmatprep.subr.bf16.mxu0 %v2445
    %2650 = vmatpush1.bf16.msra.mxu0 %v2444
    %2651 = vmatprep.subr.bf16.mxu0 0
    %2652 = vmatpush2.bf16.msra.mxu0 0
    %2653 = vmatprep.subr.bf16.mxu0 0
    %2654 = vmatpush2.bf16.msra.mxu0 0
    %2655 = vmatprep.subr.bf16.mxu0 0
    %2656 = vmatpush2.bf16.msra.mxu0 0
    %2657 = vmatprep.subr.bf16.mxu0 0
    %2658 = vmatpush2.bf16.msra.mxu0 0
    %2659 = vmatprep.subr.bf16.mxu0 0
    %2660 = vmatpush2.bf16.msra.mxu0 0
    %2661 = vmatprep.subr.bf16.mxu0 0
    %2662 = vmatpush2.bf16.msra.mxu0 0
    %2663 = vmatprep.subr.bf16.mxu0 0
    %2664 = vmatpush2.bf16.msra.mxu0 0
    %2665 = vmatprep.subr.bf16.mxu0 0
    %2666 = vmatpush2.bf16.msra.mxu0 0
    %2667 = vmatprep.mubr.bf16.mxu0 0
    %2668 = vmatmul.mubr.bf16.gmra.mxu0 %v2471
    %v2669 = vpop.f32.mrf.mxu0
    %v2670 = vadd.f32 %v2377, %v2669
    %v2671 = vpop.f32.mrf.mxu0
    %v2672 = vadd.f32 %v2381, %v2671
    %v2673 = vpop.f32.mrf.mxu0
    %v2674 = vadd.f32 %v2377, %v2673
    %v2675 = vpop.f32.mrf.mxu0
    %v2676 = vadd.f32 %v2381, %v2675
    %2677 = vmatprep.mubr.bf16.mxu0 0
    %2678 = vmatmul.mubr.bf16.gmra.mxu0 %v2474
    %v2679 = vpop.f32.mrf.mxu0
    %v2680 = vadd.f32 %v2377, %v2679
    %v2681 = vpop.f32.mrf.mxu0
    %v2682 = vadd.f32 %v2381, %v2681
    %v2683 = vpop.f32.mrf.mxu0
    %v2684 = vadd.f32 %v2377, %v2683
    %v2685 = vpop.f32.mrf.mxu0
    %v2686 = vadd.f32 %v2381, %v2685
    %2687 = vdwg.mxu0
    %v2688 = vld [vmem:[%s7] sm:$0xff]
    %v2689 = vld [vmem:[#allocation7] sm:$0xff]
    %v2690 = vrot.slane %v2511, 4
    %v2691 = vadd.f32 %v2511, %v2690
    %v2692 = vrot.slane %v2691, 2
    %v2693 = vadd.f32 %v2691, %v2692
    %v2694 = vrot.slane %v2693, 1
    %v2695 = vadd.f32 %v2693, %v2694
    %v2696 = vrot.slane %v2513, 4
    %v2697 = vadd.f32 %v2513, %v2696
    %v2698 = vrot.slane %v2697, 2
    %v2699 = vadd.f32 %v2697, %v2698
    %v2700 = vrot.slane %v2699, 1
    %v2701 = vadd.f32 %v2699, %v2700
    %v2702 = vrot.slane %v2564, 4
    %v2703 = vadd.f32 %v2564, %v2702
    %v2704 = vrot.slane %v2703, 2
    %v2705 = vadd.f32 %v2703, %v2704
    %v2706 = vrot.slane %v2705, 1
    %v2707 = vadd.f32 %v2705, %v2706
    %v2708 = vrot.slane %v2566, 4
    %v2709 = vadd.f32 %v2566, %v2708
    %v2710 = vrot.slane %v2709, 2
    %v2711 = vadd.f32 %v2709, %v2710
    %v2712 = vrot.slane %v2711, 1
    %v2713 = vadd.f32 %v2711, %v2712
    %v2714 = vrot.slane %v2617, 4
    %v2715 = vadd.f32 %v2617, %v2714
    %v2716 = vrot.slane %v2715, 2
    %v2717 = vadd.f32 %v2715, %v2716
    %v2718 = vrot.slane %v2717, 1
    %v2719 = vadd.f32 %v2717, %v2718
    %v2720 = vrot.slane %v2619, 4
    %v2721 = vadd.f32 %v2619, %v2720
    %v2722 = vrot.slane %v2721, 2
    %v2723 = vadd.f32 %v2721, %v2722
    %v2724 = vrot.slane %v2723, 1
    %v2725 = vadd.f32 %v2723, %v2724
    %v2726 = vrot.slane %v2670, 4
    %v2727 = vadd.f32 %v2670, %v2726
    %v2728 = vrot.slane %v2727, 2
    %v2729 = vadd.f32 %v2727, %v2728
    %v2730 = vrot.slane %v2729, 1
    %v2731 = vadd.f32 %v2729, %v2730
    %v2732 = vrot.slane %v2672, 4
    %v2733 = vadd.f32 %v2672, %v2732
    %v2734 = vrot.slane %v2733, 2
    %v2735 = vadd.f32 %v2733, %v2734
    %v2736 = vrot.slane %v2735, 1
    %v2737 = vadd.f32 %v2735, %v2736
    %v2738 = vrot.slane %v2515, 4
    %v2739 = vadd.f32 %v2515, %v2738
    %v2740 = vrot.slane %v2739, 2
    %v2741 = vadd.f32 %v2739, %v2740
    %v2742 = vrot.slane %v2741, 1
    %v2743 = vadd.f32 %v2741, %v2742
    %v2744 = vrot.slane %v2517, 4
    %v2745 = vadd.f32 %v2517, %v2744
    %v2746 = vrot.slane %v2745, 2
    %v2747 = vadd.f32 %v2745, %v2746
    %v2748 = vrot.slane %v2747, 1
    %v2749 = vadd.f32 %v2747, %v2748
    %v2750 = vrot.slane %v2568, 4
    %v2751 = vadd.f32 %v2568, %v2750
    %v2752 = vrot.slane %v2751, 2
    %v2753 = vadd.f32 %v2751, %v2752
    %v2754 = vrot.slane %v2753, 1
    %v2755 = vadd.f32 %v2753, %v2754
    %v2756 = vrot.slane %v2570, 4
    %v2757 = vadd.f32 %v2570, %v2756
    %v2758 = vrot.slane %v2757, 2
    %v2759 = vadd.f32 %v2757, %v2758
    %v2760 = vrot.slane %v2759, 1
    %v2761 = vadd.f32 %v2759, %v2760
    %v2762 = vrot.slane %v2621, 4
    %v2763 = vadd.f32 %v2621, %v2762
    %v2764 = vrot.slane %v2763, 2
    %v2765 = vadd.f32 %v2763, %v2764
    %v2766 = vrot.slane %v2765, 1
    %v2767 = vadd.f32 %v2765, %v2766
    %v2768 = vrot.slane %v2623, 4
    %v2769 = vadd.f32 %v2623, %v2768
    %v2770 = vrot.slane %v2769, 2
    %v2771 = vadd.f32 %v2769, %v2770
    %v2772 = vrot.slane %v2771, 1
    %v2773 = vadd.f32 %v2771, %v2772
    %v2774 = vrot.slane %v2674, 4
    %v2775 = vadd.f32 %v2674, %v2774
    %v2776 = vrot.slane %v2775, 2
    %v2777 = vadd.f32 %v2775, %v2776
    %v2778 = vrot.slane %v2777, 1
    %v2779 = vadd.f32 %v2777, %v2778
    %v2780 = vrot.slane %v2676, 4
    %v2781 = vadd.f32 %v2676, %v2780
    %v2782 = vrot.slane %v2781, 2
    %v2783 = vadd.f32 %v2781, %v2782
    %v2784 = vrot.slane %v2783, 1
    %v2785 = vadd.f32 %v2783, %v2784
    %v2786 = vrot.slane %v2521, 4
    %v2787 = vadd.f32 %v2521, %v2786
    %v2788 = vrot.slane %v2787, 2
    %v2789 = vadd.f32 %v2787, %v2788
    %v2790 = vrot.slane %v2789, 1
    %v2791 = vadd.f32 %v2789, %v2790
    %v2792 = vrot.slane %v2523, 4
    %v2793 = vadd.f32 %v2523, %v2792
    %v2794 = vrot.slane %v2793, 2
    %v2795 = vadd.f32 %v2793, %v2794
    %v2796 = vrot.slane %v2795, 1
    %v2797 = vadd.f32 %v2795, %v2796
    %v2798 = vrot.slane %v2574, 4
    %v2799 = vadd.f32 %v2574, %v2798
    %v2800 = vrot.slane %v2799, 2
    %v2801 = vadd.f32 %v2799, %v2800
    %v2802 = vrot.slane %v2801, 1
    %v2803 = vadd.f32 %v2801, %v2802
    %v2804 = vrot.slane %v2576, 4
    %v2805 = vadd.f32 %v2576, %v2804
    %v2806 = vrot.slane %v2805, 2
    %v2807 = vadd.f32 %v2805, %v2806
    %v2808 = vrot.slane %v2807, 1
    %v2809 = vadd.f32 %v2807, %v2808
    %v2810 = vrot.slane %v2627, 4
    %v2811 = vadd.f32 %v2627, %v2810
    %v2812 = vrot.slane %v2811, 2
    %v2813 = vadd.f32 %v2811, %v2812
    %v2814 = vrot.slane %v2813, 1
    %v2815 = vadd.f32 %v2813, %v2814
    %v2816 = vrot.slane %v2629, 4
    %v2817 = vadd.f32 %v2629, %v2816
    %v2818 = vrot.slane %v2817, 2
    %v2819 = vadd.f32 %v2817, %v2818
    %v2820 = vrot.slane %v2819, 1
    %v2821 = vadd.f32 %v2819, %v2820
    %v2822 = vrot.slane %v2680, 4
    %v2823 = vadd.f32 %v2680, %v2822
    %v2824 = vrot.slane %v2823, 2
    %v2825 = vadd.f32 %v2823, %v2824
    %v2826 = vrot.slane %v2825, 1
    %v2827 = vadd.f32 %v2825, %v2826
    %v2828 = vrot.slane %v2682, 4
    %v2829 = vadd.f32 %v2682, %v2828
    %v2830 = vrot.slane %v2829, 2
    %v2831 = vadd.f32 %v2829, %v2830
    %v2832 = vrot.slane %v2831, 1
    %v2833 = vadd.f32 %v2831, %v2832
    %v2834 = vrot.slane %v2525, 4
    %v2835 = vadd.f32 %v2525, %v2834
    %v2836 = vrot.slane %v2835, 2
    %v2837 = vadd.f32 %v2835, %v2836
    %v2838 = vrot.slane %v2837, 1
    %v2839 = vadd.f32 %v2837, %v2838
    %v2840 = vrot.slane %v2527, 4
    %v2841 = vadd.f32 %v2527, %v2840
    %v2842 = vrot.slane %v2841, 2
    %v2843 = vadd.f32 %v2841, %v2842
    %v2844 = vrot.slane %v2843, 1
    %v2845 = vadd.f32 %v2843, %v2844
    %v2846 = vrot.slane %v2578, 4
    %v2847 = vadd.f32 %v2578, %v2846
    %v2848 = vrot.slane %v2847, 2
    %v2849 = vadd.f32 %v2847, %v2848
    %v2850 = vrot.slane %v2849, 1
    %v2851 = vadd.f32 %v2849, %v2850
    %v2852 = vrot.slane %v2580, 4
    %v2853 = vadd.f32 %v2580, %v2852
    %v2854 = vrot.slane %v2853, 2
    %v2855 = vadd.f32 %v2853, %v2854
    %v2856 = vrot.slane %v2855, 1
    %v2857 = vadd.f32 %v2855, %v2856
    %v2858 = vrot.slane %v2631, 4
    %v2859 = vadd.f32 %v2631, %v2858
    %v2860 = vrot.slane %v2859, 2
    %v2861 = vadd.f32 %v2859, %v2860
    %v2862 = vrot.slane %v2861, 1
    %v2863 = vadd.f32 %v2861, %v2862
    %v2864 = vrot.slane %v2633, 4
    %v2865 = vadd.f32 %v2633, %v2864
    %v2866 = vrot.slane %v2865, 2
    %v2867 = vadd.f32 %v2865, %v2866
    %v2868 = vrot.slane %v2867, 1
    %v2869 = vadd.f32 %v2867, %v2868
    %v2870 = vrot.slane %v2684, 4
    %v2871 = vadd.f32 %v2684, %v2870
    %v2872 = vrot.slane %v2871, 2
    %v2873 = vadd.f32 %v2871, %v2872
    %v2874 = vrot.slane %v2873, 1
    %v2875 = vadd.f32 %v2873, %v2874
    %v2876 = vrot.slane %v2686, 4
    %v2877 = vadd.f32 %v2686, %v2876
    %v2878 = vrot.slane %v2877, 2
    %v2879 = vadd.f32 %v2877, %v2878
    %v2880 = vrot.slane %v2879, 1
    %v2881 = vadd.f32 %v2879, %v2880
    %v2882 = vmul.f32 %v2695, 0.125
    %v2883 = vmul.f32 %v2701, 0.125
    %v2884 = vmul.f32 %v2707, 0.125
    %v2885 = vmul.f32 %v2713, 0.125
    %v2886 = vmul.f32 %v2719, 0.125
    %v2887 = vmul.f32 %v2725, 0.125
    %v2888 = vmul.f32 %v2731, 0.125
    %v2889 = vmul.f32 %v2737, 0.125
    %v2890 = vmul.f32 %v2743, 0.125
    %v2891 = vmul.f32 %v2749, 0.125
    %v2892 = vmul.f32 %v2755, 0.125
    %v2893 = vmul.f32 %v2761, 0.125
    %v2894 = vmul.f32 %v2767, 0.125
    %v2895 = vmul.f32 %v2773, 0.125
    %v2896 = vmul.f32 %v2779, 0.125
    %v2897 = vmul.f32 %v2785, 0.125
    %v2898 = vmul.f32 %v2791, 0.125
    %v2899 = vmul.f32 %v2797, 0.125
    %v2900 = vmul.f32 %v2803, 0.125
    %v2901 = vmul.f32 %v2809, 0.125
    %v2902 = vmul.f32 %v2815, 0.125
    %v2903 = vmul.f32 %v2821, 0.125
    %v2904 = vmul.f32 %v2827, 0.125
    %v2905 = vmul.f32 %v2833, 0.125
    %v2906 = vmul.f32 %v2839, 0.125
    %v2907 = vmul.f32 %v2845, 0.125
    %v2908 = vmul.f32 %v2851, 0.125
    %v2909 = vmul.f32 %v2857, 0.125
    %v2910 = vmul.f32 %v2863, 0.125
    %v2911 = vmul.f32 %v2869, 0.125
    %v2912 = vmul.f32 %v2875, 0.125
    %v2913 = vmul.f32 %v2881, 0.125
    %v2914 = vmul.f32 %v2511, %v2511
    %v2915 = vmul.f32 %v2513, %v2513
    %v2916 = vmul.f32 %v2564, %v2564
    %v2917 = vmul.f32 %v2566, %v2566
    %v2918 = vmul.f32 %v2617, %v2617
    %v2919 = vmul.f32 %v2619, %v2619
    %v2920 = vmul.f32 %v2670, %v2670
    %v2921 = vmul.f32 %v2672, %v2672
    %v2922 = vmul.f32 %v2515, %v2515
    %v2923 = vmul.f32 %v2517, %v2517
    %v2924 = vmul.f32 %v2568, %v2568
    %v2925 = vmul.f32 %v2570, %v2570
    %v2926 = vmul.f32 %v2621, %v2621
    %v2927 = vmul.f32 %v2623, %v2623
    %v2928 = vmul.f32 %v2674, %v2674
    %v2929 = vmul.f32 %v2676, %v2676
    %v2930 = vmul.f32 %v2521, %v2521
    %v2931 = vmul.f32 %v2523, %v2523
    %v2932 = vmul.f32 %v2574, %v2574
    %v2933 = vmul.f32 %v2576, %v2576
    %v2934 = vmul.f32 %v2627, %v2627
    %v2935 = vmul.f32 %v2629, %v2629
    %v2936 = vmul.f32 %v2680, %v2680
    %v2937 = vmul.f32 %v2682, %v2682
    %v2938 = vmul.f32 %v2525, %v2525
    %v2939 = vmul.f32 %v2527, %v2527
    %v2940 = vmul.f32 %v2578, %v2578
    %v2941 = vmul.f32 %v2580, %v2580
    %v2942 = vmul.f32 %v2631, %v2631
    %v2943 = vmul.f32 %v2633, %v2633
    %v2944 = vmul.f32 %v2684, %v2684
    %v2945 = vmul.f32 %v2686, %v2686
    %v2946 = vrot.slane %v2914, 4
    %v2947 = vadd.f32 %v2914, %v2946
    %v2948 = vrot.slane %v2947, 2
    %v2949 = vadd.f32 %v2947, %v2948
    %v2950 = vrot.slane %v2949, 1
    %v2951 = vadd.f32 %v2949, %v2950
    %v2952 = vrot.slane %v2915, 4
    %v2953 = vadd.f32 %v2915, %v2952
    %v2954 = vrot.slane %v2953, 2
    %v2955 = vadd.f32 %v2953, %v2954
    %v2956 = vrot.slane %v2955, 1
    %v2957 = vadd.f32 %v2955, %v2956
    %v2958 = vrot.slane %v2916, 4
    %v2959 = vadd.f32 %v2916, %v2958
    %v2960 = vrot.slane %v2959, 2
    %v2961 = vadd.f32 %v2959, %v2960
    %v2962 = vrot.slane %v2961, 1
    %v2963 = vadd.f32 %v2961, %v2962
    %v2964 = vrot.slane %v2917, 4
    %v2965 = vadd.f32 %v2917, %v2964
    %v2966 = vrot.slane %v2965, 2
    %v2967 = vadd.f32 %v2965, %v2966
    %v2968 = vrot.slane %v2967, 1
    %v2969 = vadd.f32 %v2967, %v2968
    %v2970 = vrot.slane %v2918, 4
    %v2971 = vadd.f32 %v2918, %v2970
    %v2972 = vrot.slane %v2971, 2
    %v2973 = vadd.f32 %v2971, %v2972
    %v2974 = vrot.slane %v2973, 1
    %v2975 = vadd.f32 %v2973, %v2974
    %v2976 = vrot.slane %v2919, 4
    %v2977 = vadd.f32 %v2919, %v2976
    %v2978 = vrot.slane %v2977, 2
    %v2979 = vadd.f32 %v2977, %v2978
    %v2980 = vrot.slane %v2979, 1
    %v2981 = vadd.f32 %v2979, %v2980
    %v2982 = vrot.slane %v2920, 4
    %v2983 = vadd.f32 %v2920, %v2982
    %v2984 = vrot.slane %v2983, 2
    %v2985 = vadd.f32 %v2983, %v2984
    %v2986 = vrot.slane %v2985, 1
    %v2987 = vadd.f32 %v2985, %v2986
    %v2988 = vrot.slane %v2921, 4
    %v2989 = vadd.f32 %v2921, %v2988
    %v2990 = vrot.slane %v2989, 2
    %v2991 = vadd.f32 %v2989, %v2990
    %v2992 = vrot.slane %v2991, 1
    %v2993 = vadd.f32 %v2991, %v2992
    %v2994 = vrot.slane %v2922, 4
    %v2995 = vadd.f32 %v2922, %v2994
    %v2996 = vrot.slane %v2995, 2
    %v2997 = vadd.f32 %v2995, %v2996
    %v2998 = vrot.slane %v2997, 1
    %v2999 = vadd.f32 %v2997, %v2998
    %v3000 = vrot.slane %v2923, 4
    %v3001 = vadd.f32 %v2923, %v3000
    %v3002 = vrot.slane %v3001, 2
    %v3003 = vadd.f32 %v3001, %v3002
    %v3004 = vrot.slane %v3003, 1
    %v3005 = vadd.f32 %v3003, %v3004
    %v3006 = vrot.slane %v2924, 4
    %v3007 = vadd.f32 %v2924, %v3006
    %v3008 = vrot.slane %v3007, 2
    %v3009 = vadd.f32 %v3007, %v3008
    %v3010 = vrot.slane %v3009, 1
    %v3011 = vadd.f32 %v3009, %v3010
    %v3012 = vrot.slane %v2925, 4
    %v3013 = vadd.f32 %v2925, %v3012
    %v3014 = vrot.slane %v3013, 2
    %v3015 = vadd.f32 %v3013, %v3014
    %v3016 = vrot.slane %v3015, 1
    %v3017 = vadd.f32 %v3015, %v3016
    %v3018 = vrot.slane %v2926, 4
    %v3019 = vadd.f32 %v2926, %v3018
    %v3020 = vrot.slane %v3019, 2
    %v3021 = vadd.f32 %v3019, %v3020
    %v3022 = vrot.slane %v3021, 1
    %v3023 = vadd.f32 %v3021, %v3022
    %v3024 = vrot.slane %v2927, 4
    %v3025 = vadd.f32 %v2927, %v3024
    %v3026 = vrot.slane %v3025, 2
    %v3027 = vadd.f32 %v3025, %v3026
    %v3028 = vrot.slane %v3027, 1
    %v3029 = vadd.f32 %v3027, %v3028
    %v3030 = vrot.slane %v2928, 4
    %v3031 = vadd.f32 %v2928, %v3030
    %v3032 = vrot.slane %v3031, 2
    %v3033 = vadd.f32 %v3031, %v3032
    %v3034 = vrot.slane %v3033, 1
    %v3035 = vadd.f32 %v3033, %v3034
    %v3036 = vrot.slane %v2929, 4
    %v3037 = vadd.f32 %v2929, %v3036
    %v3038 = vrot.slane %v3037, 2
    %v3039 = vadd.f32 %v3037, %v3038
    %v3040 = vrot.slane %v3039, 1
    %v3041 = vadd.f32 %v3039, %v3040
    %v3042 = vrot.slane %v2930, 4
    %v3043 = vadd.f32 %v2930, %v3042
    %v3044 = vrot.slane %v3043, 2
    %v3045 = vadd.f32 %v3043, %v3044
    %v3046 = vrot.slane %v3045, 1
    %v3047 = vadd.f32 %v3045, %v3046
    %v3048 = vrot.slane %v2931, 4
    %v3049 = vadd.f32 %v2931, %v3048
    %v3050 = vrot.slane %v3049, 2
    %v3051 = vadd.f32 %v3049, %v3050
    %v3052 = vrot.slane %v3051, 1
    %v3053 = vadd.f32 %v3051, %v3052
    %v3054 = vrot.slane %v2932, 4
    %v3055 = vadd.f32 %v2932, %v3054
    %v3056 = vrot.slane %v3055, 2
    %v3057 = vadd.f32 %v3055, %v3056
    %v3058 = vrot.slane %v3057, 1
    %v3059 = vadd.f32 %v3057, %v3058
    %v3060 = vrot.slane %v2933, 4
    %v3061 = vadd.f32 %v2933, %v3060
    %v3062 = vrot.slane %v3061, 2
    %v3063 = vadd.f32 %v3061, %v3062
    %v3064 = vrot.slane %v3063, 1
    %v3065 = vadd.f32 %v3063, %v3064
    %v3066 = vrot.slane %v2934, 4
    %v3067 = vadd.f32 %v2934, %v3066
    %v3068 = vrot.slane %v3067, 2
    %v3069 = vadd.f32 %v3067, %v3068
    %v3070 = vrot.slane %v3069, 1
    %v3071 = vadd.f32 %v3069, %v3070
    %v3072 = vrot.slane %v2935, 4
    %v3073 = vadd.f32 %v2935, %v3072
    %v3074 = vrot.slane %v3073, 2
    %v3075 = vadd.f32 %v3073, %v3074
    %v3076 = vrot.slane %v3075, 1
    %v3077 = vadd.f32 %v3075, %v3076
    %v3078 = vrot.slane %v2936, 4
    %v3079 = vadd.f32 %v2936, %v3078
    %v3080 = vrot.slane %v3079, 2
    %v3081 = vadd.f32 %v3079, %v3080
    %v3082 = vrot.slane %v3081, 1
    %v3083 = vadd.f32 %v3081, %v3082
    %v3084 = vrot.slane %v2937, 4
    %v3085 = vadd.f32 %v2937, %v3084
    %v3086 = vrot.slane %v3085, 2
    %v3087 = vadd.f32 %v3085, %v3086
    %v3088 = vrot.slane %v3087, 1
    %v3089 = vadd.f32 %v3087, %v3088
    %v3090 = vrot.slane %v2938, 4
    %v3091 = vadd.f32 %v2938, %v3090
    %v3092 = vrot.slane %v3091, 2
    %v3093 = vadd.f32 %v3091, %v3092
    %v3094 = vrot.slane %v3093, 1
    %v3095 = vadd.f32 %v3093, %v3094
    %v3096 = vrot.slane %v2939, 4
    %v3097 = vadd.f32 %v2939, %v3096
    %v3098 = vrot.slane %v3097, 2
    %v3099 = vadd.f32 %v3097, %v3098
    %v3100 = vrot.slane %v3099, 1
    %v3101 = vadd.f32 %v3099, %v3100
    %v3102 = vrot.slane %v2940, 4
    %v3103 = vadd.f32 %v2940, %v3102
    %v3104 = vrot.slane %v3103, 2
    %v3105 = vadd.f32 %v3103, %v3104
    %v3106 = vrot.slane %v3105, 1
    %v3107 = vadd.f32 %v3105, %v3106
    %v3108 = vrot.slane %v2941, 4
    %v3109 = vadd.f32 %v2941, %v3108
    %v3110 = vrot.slane %v3109, 2
    %v3111 = vadd.f32 %v3109, %v3110
    %v3112 = vrot.slane %v3111, 1
    %v3113 = vadd.f32 %v3111, %v3112
    %v3114 = vrot.slane %v2942, 4
    %v3115 = vadd.f32 %v2942, %v3114
    %v3116 = vrot.slane %v3115, 2
    %v3117 = vadd.f32 %v3115, %v3116
    %v3118 = vrot.slane %v3117, 1
    %v3119 = vadd.f32 %v3117, %v3118
    %v3120 = vrot.slane %v2943, 4
    %v3121 = vadd.f32 %v2943, %v3120
    %v3122 = vrot.slane %v3121, 2
    %v3123 = vadd.f32 %v3121, %v3122
    %v3124 = vrot.slane %v3123, 1
    %v3125 = vadd.f32 %v3123, %v3124
    %v3126 = vrot.slane %v2944, 4
    %v3127 = vadd.f32 %v2944, %v3126
    %v3128 = vrot.slane %v3127, 2
    %v3129 = vadd.f32 %v3127, %v3128
    %v3130 = vrot.slane %v3129, 1
    %v3131 = vadd.f32 %v3129, %v3130
    %v3132 = vrot.slane %v2945, 4
    %v3133 = vadd.f32 %v2945, %v3132
    %v3134 = vrot.slane %v3133, 2
    %v3135 = vadd.f32 %v3133, %v3134
    %v3136 = vrot.slane %v3135, 1
    %v3137 = vadd.f32 %v3135, %v3136
    %v3138 = vmul.f32 %v2951, 0.125
    %v3139 = vmul.f32 %v2957, 0.125
    %v3140 = vmul.f32 %v2963, 0.125
    %v3141 = vmul.f32 %v2969, 0.125
    %v3142 = vmul.f32 %v2975, 0.125
    %v3143 = vmul.f32 %v2981, 0.125
    %v3144 = vmul.f32 %v2987, 0.125
    %v3145 = vmul.f32 %v2993, 0.125
    %v3146 = vmul.f32 %v2999, 0.125
    %v3147 = vmul.f32 %v3005, 0.125
    %v3148 = vmul.f32 %v3011, 0.125
    %v3149 = vmul.f32 %v3017, 0.125
    %v3150 = vmul.f32 %v3023, 0.125
    %v3151 = vmul.f32 %v3029, 0.125
    %v3152 = vmul.f32 %v3035, 0.125
    %v3153 = vmul.f32 %v3041, 0.125
    %v3154 = vmul.f32 %v3047, 0.125
    %v3155 = vmul.f32 %v3053, 0.125
    %v3156 = vmul.f32 %v3059, 0.125
    %v3157 = vmul.f32 %v3065, 0.125
    %v3158 = vmul.f32 %v3071, 0.125
    %v3159 = vmul.f32 %v3077, 0.125
    %v3160 = vmul.f32 %v3083, 0.125
    %v3161 = vmul.f32 %v3089, 0.125
    %v3162 = vmul.f32 %v3095, 0.125
    %v3163 = vmul.f32 %v3101, 0.125
    %v3164 = vmul.f32 %v3107, 0.125
    %v3165 = vmul.f32 %v3113, 0.125
    %v3166 = vmul.f32 %v3119, 0.125
    %v3167 = vmul.f32 %v3125, 0.125
    %v3168 = vmul.f32 %v3131, 0.125
    %v3169 = vmul.f32 %v3137, 0.125
    %v3170 = vmul.f32 %v2882, %v2882
    %v3171 = vmul.f32 %v2883, %v2883
    %v3172 = vmul.f32 %v2884, %v2884
    %v3173 = vmul.f32 %v2885, %v2885
    %v3174 = vmul.f32 %v2886, %v2886
    %v3175 = vmul.f32 %v2887, %v2887
    %v3176 = vmul.f32 %v2888, %v2888
    %v3177 = vmul.f32 %v2889, %v2889
    %v3178 = vmul.f32 %v2890, %v2890
    %v3179 = vmul.f32 %v2891, %v2891
    %v3180 = vmul.f32 %v2892, %v2892
    %v3181 = vmul.f32 %v2893, %v2893
    %v3182 = vmul.f32 %v2894, %v2894
    %v3183 = vmul.f32 %v2895, %v2895
    %v3184 = vmul.f32 %v2896, %v2896
    %v3185 = vmul.f32 %v2897, %v2897
    %v3186 = vmul.f32 %v2898, %v2898
    %v3187 = vmul.f32 %v2899, %v2899
    %v3188 = vmul.f32 %v2900, %v2900
    %v3189 = vmul.f32 %v2901, %v2901
    %v3190 = vmul.f32 %v2902, %v2902
    %v3191 = vmul.f32 %v2903, %v2903
    %v3192 = vmul.f32 %v2904, %v2904
    %v3193 = vmul.f32 %v2905, %v2905
    %v3194 = vmul.f32 %v2906, %v2906
    %v3195 = vmul.f32 %v2907, %v2907
    %v3196 = vmul.f32 %v2908, %v2908
    %v3197 = vmul.f32 %v2909, %v2909
    %v3198 = vmul.f32 %v2910, %v2910
    %v3199 = vmul.f32 %v2911, %v2911
    %v3200 = vmul.f32 %v2912, %v2912
    %v3201 = vmul.f32 %v2913, %v2913
    %v3202 = vsub.f32 %v3138, %v3170
    %v3203 = vsub.f32 %v3139, %v3171
    %v3204 = vsub.f32 %v3140, %v3172
    %v3205 = vsub.f32 %v3141, %v3173
    %v3206 = vsub.f32 %v3142, %v3174
    %v3207 = vsub.f32 %v3143, %v3175
    %v3208 = vsub.f32 %v3144, %v3176
    %v3209 = vsub.f32 %v3145, %v3177
    %v3210 = vsub.f32 %v3146, %v3178
    %v3211 = vsub.f32 %v3147, %v3179
    %v3212 = vsub.f32 %v3148, %v3180
    %v3213 = vsub.f32 %v3149, %v3181
    %v3214 = vsub.f32 %v3150, %v3182
    %v3215 = vsub.f32 %v3151, %v3183
    %v3216 = vsub.f32 %v3152, %v3184
    %v3217 = vsub.f32 %v3153, %v3185
    %v3218 = vsub.f32 %v3154, %v3186
    %v3219 = vsub.f32 %v3155, %v3187
    %v3220 = vsub.f32 %v3156, %v3188
    %v3221 = vsub.f32 %v3157, %v3189
    %v3222 = vsub.f32 %v3158, %v3190
    %v3223 = vsub.f32 %v3159, %v3191
    %v3224 = vsub.f32 %v3160, %v3192
    %v3225 = vsub.f32 %v3161, %v3193
    %v3226 = vsub.f32 %v3162, %v3194
    %v3227 = vsub.f32 %v3163, %v3195
    %v3228 = vsub.f32 %v3164, %v3196
    %v3229 = vsub.f32 %v3165, %v3197
    %v3230 = vsub.f32 %v3166, %v3198
    %v3231 = vsub.f32 %v3167, %v3199
    %v3232 = vsub.f32 %v3168, %v3200
    %v3233 = vsub.f32 %v3169, %v3201
    %v3234 = vadd.f32 %v3202, 1e-05
    %v3235 = vadd.f32 %v3203, 1e-05
    %v3236 = vadd.f32 %v3204, 1e-05
    %v3237 = vadd.f32 %v3205, 1e-05
    %v3238 = vadd.f32 %v3206, 1e-05
    %v3239 = vadd.f32 %v3207, 1e-05
    %v3240 = vadd.f32 %v3208, 1e-05
    %v3241 = vadd.f32 %v3209, 1e-05
    %v3242 = vadd.f32 %v3210, 1e-05
    %v3243 = vadd.f32 %v3211, 1e-05
    %v3244 = vadd.f32 %v3212, 1e-05
    %v3245 = vadd.f32 %v3213, 1e-05
    %v3246 = vadd.f32 %v3214, 1e-05
    %v3247 = vadd.f32 %v3215, 1e-05
    %v3248 = vadd.f32 %v3216, 1e-05
    %v3249 = vadd.f32 %v3217, 1e-05
    %v3250 = vadd.f32 %v3218, 1e-05
    %v3251 = vadd.f32 %v3219, 1e-05
    %v3252 = vadd.f32 %v3220, 1e-05
    %v3253 = vadd.f32 %v3221, 1e-05
    %v3254 = vadd.f32 %v3222, 1e-05
    %v3255 = vadd.f32 %v3223, 1e-05
    %v3256 = vadd.f32 %v3224, 1e-05
    %v3257 = vadd.f32 %v3225, 1e-05
    %v3258 = vadd.f32 %v3226, 1e-05
    %v3259 = vadd.f32 %v3227, 1e-05
    %v3260 = vadd.f32 %v3228, 1e-05
    %v3261 = vadd.f32 %v3229, 1e-05
    %v3262 = vadd.f32 %v3230, 1e-05
    %v3263 = vadd.f32 %v3231, 1e-05
    %v3264 = vadd.f32 %v3232, 1e-05
    %v3265 = vadd.f32 %v3233, 1e-05
    %v3266 = vrsqrt.pop %v3234
    %v3267 = vrsqrt.pop %v3235
    %v3268 = vrsqrt.pop %v3236
    %v3269 = vrsqrt.pop %v3237
    %v3270 = vrsqrt.pop %v3238
    %v3271 = vrsqrt.pop %v3239
    %v3272 = vrsqrt.pop %v3240
    %v3273 = vrsqrt.pop %v3241
    %v3274 = vrsqrt.pop %v3242
    %v3275 = vrsqrt.pop %v3243
    %v3276 = vrsqrt.pop %v3244
    %v3277 = vrsqrt.pop %v3245
    %v3278 = vrsqrt.pop %v3246
    %v3279 = vrsqrt.pop %v3247
    %v3280 = vrsqrt.pop %v3248
    %v3281 = vrsqrt.pop %v3249
    %v3282 = vrsqrt.pop %v3250
    %v3283 = vrsqrt.pop %v3251
    %v3284 = vrsqrt.pop %v3252
    %v3285 = vrsqrt.pop %v3253
    %v3286 = vrsqrt.pop %v3254
    %v3287 = vrsqrt.pop %v3255
    %v3288 = vrsqrt.pop %v3256
    %v3289 = vrsqrt.pop %v3257
    %v3290 = vrsqrt.pop %v3258
    %v3291 = vrsqrt.pop %v3259
    %v3292 = vrsqrt.pop %v3260
    %v3293 = vrsqrt.pop %v3261
    %v3294 = vrsqrt.pop %v3262
    %v3295 = vrsqrt.pop %v3263
    %v3296 = vrsqrt.pop %v3264
    %v3297 = vrsqrt.pop %v3265
    %v3330 = vcombine.low %v3266, %v3267
    %v3331 = vcombine.low %v3268, %v3269
    %v3332 = vcombine.low %v3270, %v3271
    %v3333 = vcombine.low %v3272, %v3273
    %v3335 = vunpack.c.l.s4 1966171168
    %v3336 = vunpack.c.0.s8 %v3335
    %v3337 = vlaneseq
    %v3338 = vshrl.u32 %v3337, 7
    %v3339 = vsub.s32 %v3336, %v3338
    %v3340 = vrot.slane %v3330, %v3339
    %v3342 = vunpack.c.l.s4 1966171168
    %v3343 = vunpack.c.0.s8 %v3342
    %v3344 = vlaneseq
    %v3345 = vshrl.u32 %v3344, 7
    %v3346 = vsub.s32 %v3343, %v3345
    %v3347 = vrot.slane %v3331, %v3346
    %v3349 = vunpack.c.l.s4 1966171168
    %v3350 = vunpack.c.0.s8 %v3349
    %v3351 = vlaneseq
    %v3352 = vshrl.u32 %v3351, 7
    %v3353 = vsub.s32 %v3350, %v3352
    %v3354 = vrot.slane %v3332, %v3353
    %v3356 = vunpack.c.l.s4 1966171168
    %v3357 = vunpack.c.0.s8 %v3356
    %v3358 = vlaneseq
    %v3359 = vshrl.u32 %v3358, 7
    %v3360 = vsub.s32 %v3357, %v3359
    %v3361 = vrot.slane %v3333, %v3360
    %v3362 = vcombine.low %v3340, %v3347
    %v3363 = vcombine.low %v3354, %v3361
    %v3365 = vunpack.c.l.s4 1966171168
    %v3366 = vunpack.c.0.s8 %v3365
    %v3367 = vlaneseq
    %v3368 = vshrl.u32 %v3367, 7
    %v3369 = vsub.s32 %v3366, %v3368
    %v3370 = vrot.slane %v3362, %v3369
    %v3372 = vunpack.c.l.s4 1966171168
    %v3373 = vunpack.c.0.s8 %v3372
    %v3374 = vlaneseq
    %v3375 = vshrl.u32 %v3374, 7
    %v3376 = vsub.s32 %v3373, %v3375
    %v3377 = vrot.slane %v3363, %v3376
    %v3378 = vcombine.low %v3370, %v3377
    %v3379 = vcombine.low %v3274, %v3275
    %v3380 = vcombine.low %v3276, %v3277
    %v3381 = vcombine.low %v3278, %v3279
    %v3382 = vcombine.low %v3280, %v3281
    %v3384 = vunpack.c.l.s4 1966171168
    %v3385 = vunpack.c.0.s8 %v3384
    %v3386 = vlaneseq
    %v3387 = vshrl.u32 %v3386, 7
    %v3388 = vsub.s32 %v3385, %v3387
    %v3389 = vrot.slane %v3379, %v3388
    %v3391 = vunpack.c.l.s4 1966171168
    %v3392 = vunpack.c.0.s8 %v3391
    %v3393 = vlaneseq
    %v3394 = vshrl.u32 %v3393, 7
    %v3395 = vsub.s32 %v3392, %v3394
    %v3396 = vrot.slane %v3380, %v3395
    %v3398 = vunpack.c.l.s4 1966171168
    %v3399 = vunpack.c.0.s8 %v3398
    %v3400 = vlaneseq
    %v3401 = vshrl.u32 %v3400, 7
    %v3402 = vsub.s32 %v3399, %v3401
    %v3403 = vrot.slane %v3381, %v3402
    %v3405 = vunpack.c.l.s4 1966171168
    %v3406 = vunpack.c.0.s8 %v3405
    %v3407 = vlaneseq
    %v3408 = vshrl.u32 %v3407, 7
    %v3409 = vsub.s32 %v3406, %v3408
    %v3410 = vrot.slane %v3382, %v3409
    %v3411 = vcombine.low %v3389, %v3396
    %v3412 = vcombine.low %v3403, %v3410
    %v3414 = vunpack.c.l.s4 1966171168
    %v3415 = vunpack.c.0.s8 %v3414
    %v3416 = vlaneseq
    %v3417 = vshrl.u32 %v3416, 7
    %v3418 = vsub.s32 %v3415, %v3417
    %v3419 = vrot.slane %v3411, %v3418
    %v3421 = vunpack.c.l.s4 1966171168
    %v3422 = vunpack.c.0.s8 %v3421
    %v3423 = vlaneseq
    %v3424 = vshrl.u32 %v3423, 7
    %v3425 = vsub.s32 %v3422, %v3424
    %v3426 = vrot.slane %v3412, %v3425
    %v3427 = vcombine.low %v3419, %v3426
    %v3428 = vcombine.low %v3282, %v3283
    %v3429 = vcombine.low %v3284, %v3285
    %v3430 = vcombine.low %v3286, %v3287
    %v3431 = vcombine.low %v3288, %v3289
    %v3433 = vunpack.c.l.s4 1966171168
    %v3434 = vunpack.c.0.s8 %v3433
    %v3435 = vlaneseq
    %v3436 = vshrl.u32 %v3435, 7
    %v3437 = vsub.s32 %v3434, %v3436
    %v3438 = vrot.slane %v3428, %v3437
    %v3440 = vunpack.c.l.s4 1966171168
    %v3441 = vunpack.c.0.s8 %v3440
    %v3442 = vlaneseq
    %v3443 = vshrl.u32 %v3442, 7
    %v3444 = vsub.s32 %v3441, %v3443
    %v3445 = vrot.slane %v3429, %v3444
    %v3447 = vunpack.c.l.s4 1966171168
    %v3448 = vunpack.c.0.s8 %v3447
    %v3449 = vlaneseq
    %v3450 = vshrl.u32 %v3449, 7
    %v3451 = vsub.s32 %v3448, %v3450
    %v3452 = vrot.slane %v3430, %v3451
    %v3454 = vunpack.c.l.s4 1966171168
    %v3455 = vunpack.c.0.s8 %v3454
    %v3456 = vlaneseq
    %v3457 = vshrl.u32 %v3456, 7
    %v3458 = vsub.s32 %v3455, %v3457
    %v3459 = vrot.slane %v3431, %v3458
    %v3460 = vcombine.low %v3438, %v3445
    %v3461 = vcombine.low %v3452, %v3459
    %v3463 = vunpack.c.l.s4 1966171168
    %v3464 = vunpack.c.0.s8 %v3463
    %v3465 = vlaneseq
    %v3466 = vshrl.u32 %v3465, 7
    %v3467 = vsub.s32 %v3464, %v3466
    %v3468 = vrot.slane %v3460, %v3467
    %v3470 = vunpack.c.l.s4 1966171168
    %v3471 = vunpack.c.0.s8 %v3470
    %v3472 = vlaneseq
    %v3473 = vshrl.u32 %v3472, 7
    %v3474 = vsub.s32 %v3471, %v3473
    %v3475 = vrot.slane %v3461, %v3474
    %v3476 = vcombine.low %v3468, %v3475
    %v3477 = vcombine.low %v3290, %v3291
    %v3478 = vcombine.low %v3292, %v3293
    %v3479 = vcombine.low %v3294, %v3295
    %v3480 = vcombine.low %v3296, %v3297
    %v3482 = vunpack.c.l.s4 1966171168
    %v3483 = vunpack.c.0.s8 %v3482
    %v3484 = vlaneseq
    %v3485 = vshrl.u32 %v3484, 7
    %v3486 = vsub.s32 %v3483, %v3485
    %v3487 = vrot.slane %v3477, %v3486
    %v3489 = vunpack.c.l.s4 1966171168
    %v3490 = vunpack.c.0.s8 %v3489
    %v3491 = vlaneseq
    %v3492 = vshrl.u32 %v3491, 7
    %v3493 = vsub.s32 %v3490, %v3492
    %v3494 = vrot.slane %v3478, %v3493
    %v3496 = vunpack.c.l.s4 1966171168
    %v3497 = vunpack.c.0.s8 %v3496
    %v3498 = vlaneseq
    %v3499 = vshrl.u32 %v3498, 7
    %v3500 = vsub.s32 %v3497, %v3499
    %v3501 = vrot.slane %v3479, %v3500
    %v3503 = vunpack.c.l.s4 1966171168
    %v3504 = vunpack.c.0.s8 %v3503
    %v3505 = vlaneseq
    %v3506 = vshrl.u32 %v3505, 7
    %v3507 = vsub.s32 %v3504, %v3506
    %v3508 = vrot.slane %v3480, %v3507
    %v3509 = vcombine.low %v3487, %v3494
    %v3510 = vcombine.low %v3501, %v3508
    %v3512 = vunpack.c.l.s4 1966171168
    %v3513 = vunpack.c.0.s8 %v3512
    %v3514 = vlaneseq
    %v3515 = vshrl.u32 %v3514, 7
    %v3516 = vsub.s32 %v3513, %v3515
    %v3517 = vrot.slane %v3509, %v3516
    %v3519 = vunpack.c.l.s4 1966171168
    %v3520 = vunpack.c.0.s8 %v3519
    %v3521 = vlaneseq
    %v3522 = vshrl.u32 %v3521, 7
    %v3523 = vsub.s32 %v3520, %v3522
    %v3524 = vrot.slane %v3510, %v3523
    %v3525 = vcombine.low %v3517, %v3524
    %v3530 = vmul.f32 %v2688, %v3378
    %v3531 = vmul.f32 %v2688, %v3427
    %v3532 = vmul.f32 %v2688, %v3476
    %v3533 = vmul.f32 %v2688, %v3525
    %v3538 = vlaneseq
    %v3539 = vshrl.u32 %v3538, 7
    %v3540 = vsub.s32 0, %v3539
    %v3541 = vrot.slane %v3530, %v3540
    %v3542 = vlaneseq
    %v3543 = vshrl.u32 %v3542, 7
    %v3544 = vsub.s32 1, %v3543
    %v3545 = vrot.slane %v3530, %v3544
    %v3546 = vlaneseq
    %v3547 = vshrl.u32 %v3546, 7
    %v3548 = vsub.s32 2, %v3547
    %v3549 = vrot.slane %v3530, %v3548
    %v3550 = vlaneseq
    %v3551 = vshrl.u32 %v3550, 7
    %v3552 = vsub.s32 3, %v3551
    %v3553 = vrot.slane %v3530, %v3552
    %v3554 = vlaneseq
    %v3555 = vshrl.u32 %v3554, 7
    %v3556 = vsub.s32 4, %v3555
    %v3557 = vrot.slane %v3530, %v3556
    %v3558 = vlaneseq
    %v3559 = vshrl.u32 %v3558, 7
    %v3560 = vsub.s32 5, %v3559
    %v3561 = vrot.slane %v3530, %v3560
    %v3562 = vlaneseq
    %v3563 = vshrl.u32 %v3562, 7
    %v3564 = vsub.s32 6, %v3563
    %v3565 = vrot.slane %v3530, %v3564
    %v3566 = vlaneseq
    %v3567 = vshrl.u32 %v3566, 7
    %v3568 = vsub.s32 7, %v3567
    %v3569 = vrot.slane %v3530, %v3568
    %v3570 = vlaneseq
    %v3571 = vshrl.u32 %v3570, 7
    %v3572 = vsub.s32 0, %v3571
    %v3573 = vrot.slane %v3531, %v3572
    %v3574 = vlaneseq
    %v3575 = vshrl.u32 %v3574, 7
    %v3576 = vsub.s32 1, %v3575
    %v3577 = vrot.slane %v3531, %v3576
    %v3578 = vlaneseq
    %v3579 = vshrl.u32 %v3578, 7
    %v3580 = vsub.s32 2, %v3579
    %v3581 = vrot.slane %v3531, %v3580
    %v3582 = vlaneseq
    %v3583 = vshrl.u32 %v3582, 7
    %v3584 = vsub.s32 3, %v3583
    %v3585 = vrot.slane %v3531, %v3584
    %v3586 = vlaneseq
    %v3587 = vshrl.u32 %v3586, 7
    %v3588 = vsub.s32 4, %v3587
    %v3589 = vrot.slane %v3531, %v3588
    %v3590 = vlaneseq
    %v3591 = vshrl.u32 %v3590, 7
    %v3592 = vsub.s32 5, %v3591
    %v3593 = vrot.slane %v3531, %v3592
    %v3594 = vlaneseq
    %v3595 = vshrl.u32 %v3594, 7
    %v3596 = vsub.s32 6, %v3595
    %v3597 = vrot.slane %v3531, %v3596
    %v3598 = vlaneseq
    %v3599 = vshrl.u32 %v3598, 7
    %v3600 = vsub.s32 7, %v3599
    %v3601 = vrot.slane %v3531, %v3600
    %v3602 = vlaneseq
    %v3603 = vshrl.u32 %v3602, 7
    %v3604 = vsub.s32 0, %v3603
    %v3605 = vrot.slane %v3532, %v3604
    %v3606 = vlaneseq
    %v3607 = vshrl.u32 %v3606, 7
    %v3608 = vsub.s32 1, %v3607
    %v3609 = vrot.slane %v3532, %v3608
    %v3610 = vlaneseq
    %v3611 = vshrl.u32 %v3610, 7
    %v3612 = vsub.s32 2, %v3611
    %v3613 = vrot.slane %v3532, %v3612
    %v3614 = vlaneseq
    %v3615 = vshrl.u32 %v3614, 7
    %v3616 = vsub.s32 3, %v3615
    %v3617 = vrot.slane %v3532, %v3616
    %v3618 = vlaneseq
    %v3619 = vshrl.u32 %v3618, 7
    %v3620 = vsub.s32 4, %v3619
    %v3621 = vrot.slane %v3532, %v3620
    %v3622 = vlaneseq
    %v3623 = vshrl.u32 %v3622, 7
    %v3624 = vsub.s32 5, %v3623
    %v3625 = vrot.slane %v3532, %v3624
    %v3626 = vlaneseq
    %v3627 = vshrl.u32 %v3626, 7
    %v3628 = vsub.s32 6, %v3627
    %v3629 = vrot.slane %v3532, %v3628
    %v3630 = vlaneseq
    %v3631 = vshrl.u32 %v3630, 7
    %v3632 = vsub.s32 7, %v3631
    %v3633 = vrot.slane %v3532, %v3632
    %v3634 = vlaneseq
    %v3635 = vshrl.u32 %v3634, 7
    %v3636 = vsub.s32 0, %v3635
    %v3637 = vrot.slane %v3533, %v3636
    %v3638 = vlaneseq
    %v3639 = vshrl.u32 %v3638, 7
    %v3640 = vsub.s32 1, %v3639
    %v3641 = vrot.slane %v3533, %v3640
    %v3642 = vlaneseq
    %v3643 = vshrl.u32 %v3642, 7
    %v3644 = vsub.s32 2, %v3643
    %v3645 = vrot.slane %v3533, %v3644
    %v3646 = vlaneseq
    %v3647 = vshrl.u32 %v3646, 7
    %v3648 = vsub.s32 3, %v3647
    %v3649 = vrot.slane %v3533, %v3648
    %v3650 = vlaneseq
    %v3651 = vshrl.u32 %v3650, 7
    %v3652 = vsub.s32 4, %v3651
    %v3653 = vrot.slane %v3533, %v3652
    %v3654 = vlaneseq
    %v3655 = vshrl.u32 %v3654, 7
    %v3656 = vsub.s32 5, %v3655
    %v3657 = vrot.slane %v3533, %v3656
    %v3658 = vlaneseq
    %v3659 = vshrl.u32 %v3658, 7
    %v3660 = vsub.s32 6, %v3659
    %v3661 = vrot.slane %v3533, %v3660
    %v3662 = vlaneseq
    %v3663 = vshrl.u32 %v3662, 7
    %v3664 = vsub.s32 7, %v3663
    %v3665 = vrot.slane %v3533, %v3664
    %v3698 = vmul.f32 %v2882, %v3541
    %v3699 = vmul.f32 %v2883, %v3545
    %v3700 = vmul.f32 %v2884, %v3549
    %v3701 = vmul.f32 %v2885, %v3553
    %v3702 = vmul.f32 %v2886, %v3557
    %v3703 = vmul.f32 %v2887, %v3561
    %v3704 = vmul.f32 %v2888, %v3565
    %v3705 = vmul.f32 %v2889, %v3569
    %v3706 = vmul.f32 %v2890, %v3573
    %v3707 = vmul.f32 %v2891, %v3577
    %v3708 = vmul.f32 %v2892, %v3581
    %v3709 = vmul.f32 %v2893, %v3585
    %v3710 = vmul.f32 %v2894, %v3589
    %v3711 = vmul.f32 %v2895, %v3593
    %v3712 = vmul.f32 %v2896, %v3597
    %v3713 = vmul.f32 %v2897, %v3601
    %v3714 = vmul.f32 %v2898, %v3605
    %v3715 = vmul.f32 %v2899, %v3609
    %v3716 = vmul.f32 %v2900, %v3613
    %v3717 = vmul.f32 %v2901, %v3617
    %v3718 = vmul.f32 %v2902, %v3621
    %v3719 = vmul.f32 %v2903, %v3625
    %v3720 = vmul.f32 %v2904, %v3629
    %v3721 = vmul.f32 %v2905, %v3633
    %v3722 = vmul.f32 %v2906, %v3637
    %v3723 = vmul.f32 %v2907, %v3641
    %v3724 = vmul.f32 %v2908, %v3645
    %v3725 = vmul.f32 %v2909, %v3649
    %v3726 = vmul.f32 %v2910, %v3653
    %v3727 = vmul.f32 %v2911, %v3657
    %v3728 = vmul.f32 %v2912, %v3661
    %v3729 = vmul.f32 %v2913, %v3665
    %v3762 = vcombine.low %v3698, %v3699
    %v3763 = vcombine.low %v3700, %v3701
    %v3764 = vcombine.low %v3702, %v3703
    %v3765 = vcombine.low %v3704, %v3705
    %v3767 = vunpack.c.l.s4 1966171168
    %v3768 = vunpack.c.0.s8 %v3767
    %v3769 = vlaneseq
    %v3770 = vshrl.u32 %v3769, 7
    %v3771 = vsub.s32 %v3768, %v3770
    %v3772 = vrot.slane %v3762, %v3771
    %v3774 = vunpack.c.l.s4 1966171168
    %v3775 = vunpack.c.0.s8 %v3774
    %v3776 = vlaneseq
    %v3777 = vshrl.u32 %v3776, 7
    %v3778 = vsub.s32 %v3775, %v3777
    %v3779 = vrot.slane %v3763, %v3778
    %v3781 = vunpack.c.l.s4 1966171168
    %v3782 = vunpack.c.0.s8 %v3781
    %v3783 = vlaneseq
    %v3784 = vshrl.u32 %v3783, 7
    %v3785 = vsub.s32 %v3782, %v3784
    %v3786 = vrot.slane %v3764, %v3785
    %v3788 = vunpack.c.l.s4 1966171168
    %v3789 = vunpack.c.0.s8 %v3788
    %v3790 = vlaneseq
    %v3791 = vshrl.u32 %v3790, 7
    %v3792 = vsub.s32 %v3789, %v3791
    %v3793 = vrot.slane %v3765, %v3792
    %v3794 = vcombine.low %v3772, %v3779
    %v3795 = vcombine.low %v3786, %v3793
    %v3797 = vunpack.c.l.s4 1966171168
    %v3798 = vunpack.c.0.s8 %v3797
    %v3799 = vlaneseq
    %v3800 = vshrl.u32 %v3799, 7
    %v3801 = vsub.s32 %v3798, %v3800
    %v3802 = vrot.slane %v3794, %v3801
    %v3804 = vunpack.c.l.s4 1966171168
    %v3805 = vunpack.c.0.s8 %v3804
    %v3806 = vlaneseq
    %v3807 = vshrl.u32 %v3806, 7
    %v3808 = vsub.s32 %v3805, %v3807
    %v3809 = vrot.slane %v3795, %v3808
    %v3810 = vcombine.low %v3802, %v3809
    %v3811 = vcombine.low %v3706, %v3707
    %v3812 = vcombine.low %v3708, %v3709
    %v3813 = vcombine.low %v3710, %v3711
    %v3814 = vcombine.low %v3712, %v3713
    %v3816 = vunpack.c.l.s4 1966171168
    %v3817 = vunpack.c.0.s8 %v3816
    %v3818 = vlaneseq
    %v3819 = vshrl.u32 %v3818, 7
    %v3820 = vsub.s32 %v3817, %v3819
    %v3821 = vrot.slane %v3811, %v3820
    %v3823 = vunpack.c.l.s4 1966171168
    %v3824 = vunpack.c.0.s8 %v3823
    %v3825 = vlaneseq
    %v3826 = vshrl.u32 %v3825, 7
    %v3827 = vsub.s32 %v3824, %v3826
    %v3828 = vrot.slane %v3812, %v3827
    %v3830 = vunpack.c.l.s4 1966171168
    %v3831 = vunpack.c.0.s8 %v3830
    %v3832 = vlaneseq
    %v3833 = vshrl.u32 %v3832, 7
    %v3834 = vsub.s32 %v3831, %v3833
    %v3835 = vrot.slane %v3813, %v3834
    %v3837 = vunpack.c.l.s4 1966171168
    %v3838 = vunpack.c.0.s8 %v3837
    %v3839 = vlaneseq
    %v3840 = vshrl.u32 %v3839, 7
    %v3841 = vsub.s32 %v3838, %v3840
    %v3842 = vrot.slane %v3814, %v3841
    %v3843 = vcombine.low %v3821, %v3828
    %v3844 = vcombine.low %v3835, %v3842
    %v3846 = vunpack.c.l.s4 1966171168
    %v3847 = vunpack.c.0.s8 %v3846
    %v3848 = vlaneseq
    %v3849 = vshrl.u32 %v3848, 7
    %v3850 = vsub.s32 %v3847, %v3849
    %v3851 = vrot.slane %v3843, %v3850
    %v3853 = vunpack.c.l.s4 1966171168
    %v3854 = vunpack.c.0.s8 %v3853
    %v3855 = vlaneseq
    %v3856 = vshrl.u32 %v3855, 7
    %v3857 = vsub.s32 %v3854, %v3856
    %v3858 = vrot.slane %v3844, %v3857
    %v3859 = vcombine.low %v3851, %v3858
    %v3860 = vcombine.low %v3714, %v3715
    %v3861 = vcombine.low %v3716, %v3717
    %v3862 = vcombine.low %v3718, %v3719
    %v3863 = vcombine.low %v3720, %v3721
    %v3865 = vunpack.c.l.s4 1966171168
    %v3866 = vunpack.c.0.s8 %v3865
    %v3867 = vlaneseq
    %v3868 = vshrl.u32 %v3867, 7
    %v3869 = vsub.s32 %v3866, %v3868
    %v3870 = vrot.slane %v3860, %v3869
    %v3872 = vunpack.c.l.s4 1966171168
    %v3873 = vunpack.c.0.s8 %v3872
    %v3874 = vlaneseq
    %v3875 = vshrl.u32 %v3874, 7
    %v3876 = vsub.s32 %v3873, %v3875
    %v3877 = vrot.slane %v3861, %v3876
    %v3879 = vunpack.c.l.s4 1966171168
    %v3880 = vunpack.c.0.s8 %v3879
    %v3881 = vlaneseq
    %v3882 = vshrl.u32 %v3881, 7
    %v3883 = vsub.s32 %v3880, %v3882
    %v3884 = vrot.slane %v3862, %v3883
    %v3886 = vunpack.c.l.s4 1966171168
    %v3887 = vunpack.c.0.s8 %v3886
    %v3888 = vlaneseq
    %v3889 = vshrl.u32 %v3888, 7
    %v3890 = vsub.s32 %v3887, %v3889
    %v3891 = vrot.slane %v3863, %v3890
    %v3892 = vcombine.low %v3870, %v3877
    %v3893 = vcombine.low %v3884, %v3891
    %v3895 = vunpack.c.l.s4 1966171168
    %v3896 = vunpack.c.0.s8 %v3895
    %v3897 = vlaneseq
    %v3898 = vshrl.u32 %v3897, 7
    %v3899 = vsub.s32 %v3896, %v3898
    %v3900 = vrot.slane %v3892, %v3899
    %v3902 = vunpack.c.l.s4 1966171168
    %v3903 = vunpack.c.0.s8 %v3902
    %v3904 = vlaneseq
    %v3905 = vshrl.u32 %v3904, 7
    %v3906 = vsub.s32 %v3903, %v3905
    %v3907 = vrot.slane %v3893, %v3906
    %v3908 = vcombine.low %v3900, %v3907
    %v3909 = vcombine.low %v3722, %v3723
    %v3910 = vcombine.low %v3724, %v3725
    %v3911 = vcombine.low %v3726, %v3727
    %v3912 = vcombine.low %v3728, %v3729
    %v3914 = vunpack.c.l.s4 1966171168
    %v3915 = vunpack.c.0.s8 %v3914
    %v3916 = vlaneseq
    %v3917 = vshrl.u32 %v3916, 7
    %v3918 = vsub.s32 %v3915, %v3917
    %v3919 = vrot.slane %v3909, %v3918
    %v3921 = vunpack.c.l.s4 1966171168
    %v3922 = vunpack.c.0.s8 %v3921
    %v3923 = vlaneseq
    %v3924 = vshrl.u32 %v3923, 7
    %v3925 = vsub.s32 %v3922, %v3924
    %v3926 = vrot.slane %v3910, %v3925
    %v3928 = vunpack.c.l.s4 1966171168
    %v3929 = vunpack.c.0.s8 %v3928
    %v3930 = vlaneseq
    %v3931 = vshrl.u32 %v3930, 7
    %v3932 = vsub.s32 %v3929, %v3931
    %v3933 = vrot.slane %v3911, %v3932
    %v3935 = vunpack.c.l.s4 1966171168
    %v3936 = vunpack.c.0.s8 %v3935
    %v3937 = vlaneseq
    %v3938 = vshrl.u32 %v3937, 7
    %v3939 = vsub.s32 %v3936, %v3938
    %v3940 = vrot.slane %v3912, %v3939
    %v3941 = vcombine.low %v3919, %v3926
    %v3942 = vcombine.low %v3933, %v3940
    %v3944 = vunpack.c.l.s4 1966171168
    %v3945 = vunpack.c.0.s8 %v3944
    %v3946 = vlaneseq
    %v3947 = vshrl.u32 %v3946, 7
    %v3948 = vsub.s32 %v3945, %v3947
    %v3949 = vrot.slane %v3941, %v3948
    %v3951 = vunpack.c.l.s4 1966171168
    %v3952 = vunpack.c.0.s8 %v3951
    %v3953 = vlaneseq
    %v3954 = vshrl.u32 %v3953, 7
    %v3955 = vsub.s32 %v3952, %v3954
    %v3956 = vrot.slane %v3942, %v3955
    %v3957 = vcombine.low %v3949, %v3956
    %v3962 = vsub.f32 %v2689, %v3810
    %v3963 = vsub.f32 %v2689, %v3859
    %v3964 = vsub.f32 %v2689, %v3908
    %v3965 = vsub.f32 %v2689, %v3957
    %v3966 = vmul.f32 %v2511, %v3541
    %v3967 = vmul.f32 %v2513, %v3545
    %v3968 = vmul.f32 %v2564, %v3549
    %v3969 = vmul.f32 %v2566, %v3553
    %v3970 = vmul.f32 %v2617, %v3557
    %v3971 = vmul.f32 %v2619, %v3561
    %v3972 = vmul.f32 %v2670, %v3565
    %v3973 = vmul.f32 %v2672, %v3569
    %v3974 = vmul.f32 %v2515, %v3573
    %v3975 = vmul.f32 %v2517, %v3577
    %v3976 = vmul.f32 %v2568, %v3581
    %v3977 = vmul.f32 %v2570, %v3585
    %v3978 = vmul.f32 %v2621, %v3589
    %v3979 = vmul.f32 %v2623, %v3593
    %v3980 = vmul.f32 %v2674, %v3597
    %v3981 = vmul.f32 %v2676, %v3601
    %v3982 = vmul.f32 %v2521, %v3605
    %v3983 = vmul.f32 %v2523, %v3609
    %v3984 = vmul.f32 %v2574, %v3613
    %v3985 = vmul.f32 %v2576, %v3617
    %v3986 = vmul.f32 %v2627, %v3621
    %v3987 = vmul.f32 %v2629, %v3625
    %v3988 = vmul.f32 %v2680, %v3629
    %v3989 = vmul.f32 %v2682, %v3633
    %v3990 = vmul.f32 %v2525, %v3637
    %v3991 = vmul.f32 %v2527, %v3641
    %v3992 = vmul.f32 %v2578, %v3645
    %v3993 = vmul.f32 %v2580, %v3649
    %v3994 = vmul.f32 %v2631, %v3653
    %v3995 = vmul.f32 %v2633, %v3657
    %v3996 = vmul.f32 %v2684, %v3661
    %v3997 = vmul.f32 %v2686, %v3665
    %v4002 = vlaneseq
    %v4003 = vshrl.u32 %v4002, 7
    %v4004 = vsub.s32 0, %v4003
    %v4005 = vrot.slane %v3962, %v4004
    %v4006 = vlaneseq
    %v4007 = vshrl.u32 %v4006, 7
    %v4008 = vsub.s32 1, %v4007
    %v4009 = vrot.slane %v3962, %v4008
    %v4010 = vlaneseq
    %v4011 = vshrl.u32 %v4010, 7
    %v4012 = vsub.s32 2, %v4011
    %v4013 = vrot.slane %v3962, %v4012
    %v4014 = vlaneseq
    %v4015 = vshrl.u32 %v4014, 7
    %v4016 = vsub.s32 3, %v4015
    %v4017 = vrot.slane %v3962, %v4016
    %v4018 = vlaneseq
    %v4019 = vshrl.u32 %v4018, 7
    %v4020 = vsub.s32 4, %v4019
    %v4021 = vrot.slane %v3962, %v4020
    %v4022 = vlaneseq
    %v4023 = vshrl.u32 %v4022, 7
    %v4024 = vsub.s32 5, %v4023
    %v4025 = vrot.slane %v3962, %v4024
    %v4026 = vlaneseq
    %v4027 = vshrl.u32 %v4026, 7
    %v4028 = vsub.s32 6, %v4027
    %v4029 = vrot.slane %v3962, %v4028
    %v4030 = vlaneseq
    %v4031 = vshrl.u32 %v4030, 7
    %v4032 = vsub.s32 7, %v4031
    %v4033 = vrot.slane %v3962, %v4032
    %v4034 = vlaneseq
    %v4035 = vshrl.u32 %v4034, 7
    %v4036 = vsub.s32 0, %v4035
    %v4037 = vrot.slane %v3963, %v4036
    %v4038 = vlaneseq
    %v4039 = vshrl.u32 %v4038, 7
    %v4040 = vsub.s32 1, %v4039
    %v4041 = vrot.slane %v3963, %v4040
    %v4042 = vlaneseq
    %v4043 = vshrl.u32 %v4042, 7
    %v4044 = vsub.s32 2, %v4043
    %v4045 = vrot.slane %v3963, %v4044
    %v4046 = vlaneseq
    %v4047 = vshrl.u32 %v4046, 7
    %v4048 = vsub.s32 3, %v4047
    %v4049 = vrot.slane %v3963, %v4048
    %v4050 = vlaneseq
    %v4051 = vshrl.u32 %v4050, 7
    %v4052 = vsub.s32 4, %v4051
    %v4053 = vrot.slane %v3963, %v4052
    %v4054 = vlaneseq
    %v4055 = vshrl.u32 %v4054, 7
    %v4056 = vsub.s32 5, %v4055
    %v4057 = vrot.slane %v3963, %v4056
    %v4058 = vlaneseq
    %v4059 = vshrl.u32 %v4058, 7
    %v4060 = vsub.s32 6, %v4059
    %v4061 = vrot.slane %v3963, %v4060
    %v4062 = vlaneseq
    %v4063 = vshrl.u32 %v4062, 7
    %v4064 = vsub.s32 7, %v4063
    %v4065 = vrot.slane %v3963, %v4064
    %v4066 = vlaneseq
    %v4067 = vshrl.u32 %v4066, 7
    %v4068 = vsub.s32 0, %v4067
    %v4069 = vrot.slane %v3964, %v4068
    %v4070 = vlaneseq
    %v4071 = vshrl.u32 %v4070, 7
    %v4072 = vsub.s32 1, %v4071
    %v4073 = vrot.slane %v3964, %v4072
    %v4074 = vlaneseq
    %v4075 = vshrl.u32 %v4074, 7
    %v4076 = vsub.s32 2, %v4075
    %v4077 = vrot.slane %v3964, %v4076
    %v4078 = vlaneseq
    %v4079 = vshrl.u32 %v4078, 7
    %v4080 = vsub.s32 3, %v4079
    %v4081 = vrot.slane %v3964, %v4080
    %v4082 = vlaneseq
    %v4083 = vshrl.u32 %v4082, 7
    %v4084 = vsub.s32 4, %v4083
    %v4085 = vrot.slane %v3964, %v4084
    %v4086 = vlaneseq
    %v4087 = vshrl.u32 %v4086, 7
    %v4088 = vsub.s32 5, %v4087
    %v4089 = vrot.slane %v3964, %v4088
    %v4090 = vlaneseq
    %v4091 = vshrl.u32 %v4090, 7
    %v4092 = vsub.s32 6, %v4091
    %v4093 = vrot.slane %v3964, %v4092
    %v4094 = vlaneseq
    %v4095 = vshrl.u32 %v4094, 7
    %v4096 = vsub.s32 7, %v4095
    %v4097 = vrot.slane %v3964, %v4096
    %v4098 = vlaneseq
    %v4099 = vshrl.u32 %v4098, 7
    %v4100 = vsub.s32 0, %v4099
    %v4101 = vrot.slane %v3965, %v4100
    %v4102 = vlaneseq
    %v4103 = vshrl.u32 %v4102, 7
    %v4104 = vsub.s32 1, %v4103
    %v4105 = vrot.slane %v3965, %v4104
    %v4106 = vlaneseq
    %v4107 = vshrl.u32 %v4106, 7
    %v4108 = vsub.s32 2, %v4107
    %v4109 = vrot.slane %v3965, %v4108
    %v4110 = vlaneseq
    %v4111 = vshrl.u32 %v4110, 7
    %v4112 = vsub.s32 3, %v4111
    %v4113 = vrot.slane %v3965, %v4112
    %v4114 = vlaneseq
    %v4115 = vshrl.u32 %v4114, 7
    %v4116 = vsub.s32 4, %v4115
    %v4117 = vrot.slane %v3965, %v4116
    %v4118 = vlaneseq
    %v4119 = vshrl.u32 %v4118, 7
    %v4120 = vsub.s32 5, %v4119
    %v4121 = vrot.slane %v3965, %v4120
    %v4122 = vlaneseq
    %v4123 = vshrl.u32 %v4122, 7
    %v4124 = vsub.s32 6, %v4123
    %v4125 = vrot.slane %v3965, %v4124
    %v4126 = vlaneseq
    %v4127 = vshrl.u32 %v4126, 7
    %v4128 = vsub.s32 7, %v4127
    %v4129 = vrot.slane %v3965, %v4128
    %v4162 = vadd.f32 %v3966, %v4005
    %v4163 = vadd.f32 %v3967, %v4009
    %v4164 = vadd.f32 %v3968, %v4013
    %v4165 = vadd.f32 %v3969, %v4017
    %v4166 = vadd.f32 %v3970, %v4021
    %v4167 = vadd.f32 %v3971, %v4025
    %v4168 = vadd.f32 %v3972, %v4029
    %v4169 = vadd.f32 %v3973, %v4033
    %v4170 = vadd.f32 %v3974, %v4037
    %v4171 = vadd.f32 %v3975, %v4041
    %v4172 = vadd.f32 %v3976, %v4045
    %v4173 = vadd.f32 %v3977, %v4049
    %v4174 = vadd.f32 %v3978, %v4053
    %v4175 = vadd.f32 %v3979, %v4057
    %v4176 = vadd.f32 %v3980, %v4061
    %v4177 = vadd.f32 %v3981, %v4065
    %v4178 = vadd.f32 %v3982, %v4069
    %v4179 = vadd.f32 %v3983, %v4073
    %v4180 = vadd.f32 %v3984, %v4077
    %v4181 = vadd.f32 %v3985, %v4081
    %v4182 = vadd.f32 %v3986, %v4085
    %v4183 = vadd.f32 %v3987, %v4089
    %v4184 = vadd.f32 %v3988, %v4093
    %v4185 = vadd.f32 %v3989, %v4097
    %v4186 = vadd.f32 %v3990, %v4101
    %v4187 = vadd.f32 %v3991, %v4105
    %v4188 = vadd.f32 %v3992, %v4109
    %v4189 = vadd.f32 %v3993, %v4113
    %v4190 = vadd.f32 %v3994, %v4117
    %v4191 = vadd.f32 %v3995, %v4121
    %v4192 = vadd.f32 %v3996, %v4125
    %v4193 = vadd.f32 %v3997, %v4129
    %v4194 = vmax.f32 %v4162, 0.0
    %v4195 = vmax.f32 %v4163, 0.0
    %v4196 = vmax.f32 %v4164, 0.0
    %v4197 = vmax.f32 %v4165, 0.0
    %v4198 = vmax.f32 %v4166, 0.0
    %v4199 = vmax.f32 %v4167, 0.0
    %v4200 = vmax.f32 %v4168, 0.0
    %v4201 = vmax.f32 %v4169, 0.0
    %v4202 = vmax.f32 %v4170, 0.0
    %v4203 = vmax.f32 %v4171, 0.0
    %v4204 = vmax.f32 %v4172, 0.0
    %v4205 = vmax.f32 %v4173, 0.0
    %v4206 = vmax.f32 %v4174, 0.0
    %v4207 = vmax.f32 %v4175, 0.0
    %v4208 = vmax.f32 %v4176, 0.0
    %v4209 = vmax.f32 %v4177, 0.0
    %v4210 = vmax.f32 %v4178, 0.0
    %v4211 = vmax.f32 %v4179, 0.0
    %v4212 = vmax.f32 %v4180, 0.0
    %v4213 = vmax.f32 %v4181, 0.0
    %v4214 = vmax.f32 %v4182, 0.0
    %v4215 = vmax.f32 %v4183, 0.0
    %v4216 = vmax.f32 %v4184, 0.0
    %v4217 = vmax.f32 %v4185, 0.0
    %v4218 = vmax.f32 %v4186, 0.0
    %v4219 = vmax.f32 %v4187, 0.0
    %v4220 = vmax.f32 %v4188, 0.0
    %v4221 = vmax.f32 %v4189, 0.0
    %v4222 = vmax.f32 %v4190, 0.0
    %v4223 = vmax.f32 %v4191, 0.0
    %v4224 = vmax.f32 %v4192, 0.0
    %v4225 = vmax.f32 %v4193, 0.0
    %s4226 = smul.u32 4, 128
    %s4227 = smul.u32 %s4226, 2
    %s4228 = sshll.u32 %s4227, 4
    %4229 = dma.done %s72, %s4228
    %v4230 = vpack.c.bf16 %v4202, %v4194
    %v4231 = vpack.c.bf16 %v4203, %v4195
    %v4232 = vpack.c.bf16 %v4204, %v4196
    %v4233 = vpack.c.bf16 %v4205, %v4197
    %v4234 = vpack.c.bf16 %v4206, %v4198
    %v4235 = vpack.c.bf16 %v4207, %v4199
    %v4236 = vpack.c.bf16 %v4208, %v4200
    %v4237 = vpack.c.bf16 %v4209, %v4201
    %v4238 = vpack.c.bf16 %v4218, %v4210
    %v4239 = vpack.c.bf16 %v4219, %v4211
    %v4240 = vpack.c.bf16 %v4220, %v4212
    %v4241 = vpack.c.bf16 %v4221, %v4213
    %v4242 = vpack.c.bf16 %v4222, %v4214
    %v4243 = vpack.c.bf16 %v4223, %v4215
    %v4244 = vpack.c.bf16 %v4224, %v4216
    %v4245 = vpack.c.bf16 %v4225, %v4217
    %v4246 = vld [vmem:[#allocation3] sm:$0xff]
    %v4247 = vld [vmem:[#allocation3 + $0x8] sm:$0xff]
    %v4248 = vld [vmem:[#allocation3 + $0x10] sm:$0xff]
    %v4249 = vld [vmem:[#allocation3 + $0x18] sm:$0xff]
    %v4250 = vld [vmem:[#allocation3 + $0x20] sm:$0xff]
    %v4251 = vld [vmem:[#allocation3 + $0x28] sm:$0xff]
    %v4252 = vld [vmem:[#allocation3 + $0x30] sm:$0xff]
    %v4253 = vld [vmem:[#allocation3 + $0x38] sm:$0xff]
    %v4254 = vld [vmem:[#allocation3 + $0x40] sm:$0xff]
    %v4255 = vld [vmem:[#allocation3 + $0x48] sm:$0xff]
    %v4256 = vld [vmem:[#allocation3 + $0x50] sm:$0xff]
    %v4257 = vld [vmem:[#allocation3 + $0x58] sm:$0xff]
    %v4258 = vld [vmem:[#allocation3 + $0x60] sm:$0xff]
    %v4259 = vld [vmem:[#allocation3 + $0x68] sm:$0xff]
    %v4260 = vld [vmem:[#allocation3 + $0x70] sm:$0xff]
    %v4261 = vld [vmem:[#allocation3 + $0x78] sm:$0xff]
    %v4262 = vld [vmem:[#allocation3 + $0x80] sm:$0xff]
    %v4263 = vld [vmem:[#allocation3 + $0x88] sm:$0xff]
    %v4264 = vld [vmem:[#allocation3 + $0x90] sm:$0xff]
    %v4265 = vld [vmem:[#allocation3 + $0x98] sm:$0xff]
    %v4266 = vld [vmem:[#allocation3 + $0xa0] sm:$0xff]
    %v4267 = vld [vmem:[#allocation3 + $0xa8] sm:$0xff]
    %v4268 = vld [vmem:[#allocation3 + $0xb0] sm:$0xff]
    %v4269 = vld [vmem:[#allocation3 + $0xb8] sm:$0xff]
    %v4270 = vld [vmem:[#allocation3 + $0xc0] sm:$0xff]
    %v4271 = vld [vmem:[#allocation3 + $0xc8] sm:$0xff]
    %v4272 = vld [vmem:[#allocation3 + $0xd0] sm:$0xff]
    %v4273 = vld [vmem:[#allocation3 + $0xd8] sm:$0xff]
    %v4274 = vld [vmem:[#allocation3 + $0xe0] sm:$0xff]
    %v4275 = vld [vmem:[#allocation3 + $0xe8] sm:$0xff]
    %v4276 = vld [vmem:[#allocation3 + $0xf0] sm:$0xff]
    %v4277 = vld [vmem:[#allocation3 + $0xf8] sm:$0xff]
    %v4278 = vld [vmem:[#allocation3 + $0x100] sm:$0xff]
    %v4279 = vld [vmem:[#allocation3 + $0x108] sm:$0xff]
    %v4280 = vld [vmem:[#allocation3 + $0x110] sm:$0xff]
    %v4281 = vld [vmem:[#allocation3 + $0x118] sm:$0xff]
    %v4282 = vld [vmem:[#allocation3 + $0x120] sm:$0xff]
    %v4283 = vld [vmem:[#allocation3 + $0x128] sm:$0xff]
    %v4284 = vld [vmem:[#allocation3 + $0x130] sm:$0xff]
    %v4285 = vld [vmem:[#allocation3 + $0x138] sm:$0xff]
    %v4286 = vld [vmem:[#allocation3 + $0x140] sm:$0xff]
    %v4287 = vld [vmem:[#allocation3 + $0x148] sm:$0xff]
    %v4288 = vld [vmem:[#allocation3 + $0x150] sm:$0xff]
    %v4289 = vld [vmem:[#allocation3 + $0x158] sm:$0xff]
    %v4290 = vld [vmem:[#allocation3 + $0x160] sm:$0xff]
    %v4291 = vld [vmem:[#allocation3 + $0x168] sm:$0xff]
    %v4292 = vld [vmem:[#allocation3 + $0x170] sm:$0xff]
    %v4293 = vld [vmem:[#allocation3 + $0x178] sm:$0xff]
    %v4294 = vld [vmem:[#allocation3 + $0x180] sm:$0xff]
    %v4295 = vld [vmem:[#allocation3 + $0x188] sm:$0xff]
    %v4296 = vld [vmem:[#allocation3 + $0x190] sm:$0xff]
    %v4297 = vld [vmem:[#allocation3 + $0x198] sm:$0xff]
    %v4298 = vld [vmem:[#allocation3 + $0x1a0] sm:$0xff]
    %v4299 = vld [vmem:[#allocation3 + $0x1a8] sm:$0xff]
    %v4300 = vld [vmem:[#allocation3 + $0x1b0] sm:$0xff]
    %v4301 = vld [vmem:[#allocation3 + $0x1b8] sm:$0xff]
    %v4302 = vld [vmem:[#allocation3 + $0x1c0] sm:$0xff]
    %v4303 = vld [vmem:[#allocation3 + $0x1c8] sm:$0xff]
    %v4304 = vld [vmem:[#allocation3 + $0x1d0] sm:$0xff]
    %v4305 = vld [vmem:[#allocation3 + $0x1d8] sm:$0xff]
    %v4306 = vld [vmem:[#allocation3 + $0x1e0] sm:$0xff]
    %v4307 = vld [vmem:[#allocation3 + $0x1e8] sm:$0xff]
    %v4308 = vld [vmem:[#allocation3 + $0x1f0] sm:$0xff]
    %v4309 = vld [vmem:[#allocation3 + $0x1f8] sm:$0xff]
    %v4310 = vld [vmem:[#allocation3 + $0x200] sm:$0xff]
    %v4311 = vld [vmem:[#allocation3 + $0x208] sm:$0xff]
    %v4312 = vld [vmem:[#allocation3 + $0x210] sm:$0xff]
    %v4313 = vld [vmem:[#allocation3 + $0x218] sm:$0xff]
    %v4314 = vld [vmem:[#allocation3 + $0x220] sm:$0xff]
    %v4315 = vld [vmem:[#allocation3 + $0x228] sm:$0xff]
    %v4316 = vld [vmem:[#allocation3 + $0x230] sm:$0xff]
    %v4317 = vld [vmem:[#allocation3 + $0x238] sm:$0xff]
    %v4318 = vld [vmem:[#allocation3 + $0x240] sm:$0xff]
    %v4319 = vld [vmem:[#allocation3 + $0x248] sm:$0xff]
    %v4320 = vld [vmem:[#allocation3 + $0x250] sm:$0xff]
    %v4321 = vld [vmem:[#allocation3 + $0x258] sm:$0xff]
    %v4322 = vld [vmem:[#allocation3 + $0x260] sm:$0xff]
    %v4323 = vld [vmem:[#allocation3 + $0x268] sm:$0xff]
    %v4324 = vld [vmem:[#allocation3 + $0x270] sm:$0xff]
    %v4325 = vld [vmem:[#allocation3 + $0x278] sm:$0xff]
    %v4326 = vld [vmem:[#allocation3 + $0x280] sm:$0xff]
    %v4327 = vld [vmem:[#allocation3 + $0x288] sm:$0xff]
    %v4328 = vld [vmem:[#allocation3 + $0x290] sm:$0xff]
    %v4329 = vld [vmem:[#allocation3 + $0x298] sm:$0xff]
    %v4330 = vld [vmem:[#allocation3 + $0x2a0] sm:$0xff]
    %v4331 = vld [vmem:[#allocation3 + $0x2a8] sm:$0xff]
    %v4332 = vld [vmem:[#allocation3 + $0x2b0] sm:$0xff]
    %v4333 = vld [vmem:[#allocation3 + $0x2b8] sm:$0xff]
    %v4334 = vld [vmem:[#allocation3 + $0x2c0] sm:$0xff]
    %v4335 = vld [vmem:[#allocation3 + $0x2c8] sm:$0xff]
    %v4336 = vld [vmem:[#allocation3 + $0x2d0] sm:$0xff]
    %v4337 = vld [vmem:[#allocation3 + $0x2d8] sm:$0xff]
    %v4338 = vld [vmem:[#allocation3 + $0x2e0] sm:$0xff]
    %v4339 = vld [vmem:[#allocation3 + $0x2e8] sm:$0xff]
    %v4340 = vld [vmem:[#allocation3 + $0x2f0] sm:$0xff]
    %v4341 = vld [vmem:[#allocation3 + $0x2f8] sm:$0xff]
    %v4342 = vld [vmem:[#allocation3 + $0x300] sm:$0xff]
    %v4343 = vld [vmem:[#allocation3 + $0x308] sm:$0xff]
    %v4344 = vld [vmem:[#allocation3 + $0x310] sm:$0xff]
    %v4345 = vld [vmem:[#allocation3 + $0x318] sm:$0xff]
    %v4346 = vld [vmem:[#allocation3 + $0x320] sm:$0xff]
    %v4347 = vld [vmem:[#allocation3 + $0x328] sm:$0xff]
    %v4348 = vld [vmem:[#allocation3 + $0x330] sm:$0xff]
    %v4349 = vld [vmem:[#allocation3 + $0x338] sm:$0xff]
    %v4350 = vld [vmem:[#allocation3 + $0x340] sm:$0xff]
    %v4351 = vld [vmem:[#allocation3 + $0x348] sm:$0xff]
    %v4352 = vld [vmem:[#allocation3 + $0x350] sm:$0xff]
    %v4353 = vld [vmem:[#allocation3 + $0x358] sm:$0xff]
    %v4354 = vld [vmem:[#allocation3 + $0x360] sm:$0xff]
    %v4355 = vld [vmem:[#allocation3 + $0x368] sm:$0xff]
    %v4356 = vld [vmem:[#allocation3 + $0x370] sm:$0xff]
    %v4357 = vld [vmem:[#allocation3 + $0x378] sm:$0xff]
    %v4358 = vld [vmem:[#allocation3 + $0x380] sm:$0xff]
    %v4359 = vld [vmem:[#allocation3 + $0x388] sm:$0xff]
    %v4360 = vld [vmem:[#allocation3 + $0x390] sm:$0xff]
    %v4361 = vld [vmem:[#allocation3 + $0x398] sm:$0xff]
    %v4362 = vld [vmem:[#allocation3 + $0x3a0] sm:$0xff]
    %v4363 = vld [vmem:[#allocation3 + $0x3a8] sm:$0xff]
    %v4364 = vld [vmem:[#allocation3 + $0x3b0] sm:$0xff]
    %v4365 = vld [vmem:[#allocation3 + $0x3b8] sm:$0xff]
    %v4366 = vld [vmem:[#allocation3 + $0x3c0] sm:$0xff]
    %v4367 = vld [vmem:[#allocation3 + $0x3c8] sm:$0xff]
    %v4368 = vld [vmem:[#allocation3 + $0x3d0] sm:$0xff]
    %v4369 = vld [vmem:[#allocation3 + $0x3d8] sm:$0xff]
    %v4370 = vld [vmem:[#allocation3 + $0x3e0] sm:$0xff]
    %v4371 = vld [vmem:[#allocation3 + $0x3e8] sm:$0xff]
    %v4372 = vld [vmem:[#allocation3 + $0x3f0] sm:$0xff]
    %v4373 = vld [vmem:[#allocation3 + $0x3f8] sm:$0xff]
    %v4374 = vld [vmem:[%s10] sm:$0x3]
    %v4376 = vlaneseq
    %v4377 = vshrl.u32 %v4376, 7
    %v4378 = vsub.s32 0, %v4377
    %v4379 = vrot.slane %v4374, %v4378
    %v4380 = vlaneseq
    %v4381 = vshrl.u32 %v4380, 7
    %v4382 = vsub.s32 1, %v4381
    %v4383 = vrot.slane %v4374, %v4382
    %v4514 = vunpack.c.l.b16 %v4246
    %v4515 = vunpack.c.h.b16 %v4246
    %v4516 = vunpack.c.l.b16 %v4247
    %v4517 = vunpack.c.h.b16 %v4247
    %v4518 = vunpack.c.l.b16 %v4248
    %v4519 = vunpack.c.h.b16 %v4248
    %v4520 = vunpack.c.l.b16 %v4249
    %v4521 = vunpack.c.h.b16 %v4249
    %v4522 = vunpack.c.l.b16 %v4250
    %v4523 = vunpack.c.h.b16 %v4250
    %v4524 = vunpack.c.l.b16 %v4251
    %v4525 = vunpack.c.h.b16 %v4251
    %v4526 = vunpack.c.l.b16 %v4252
    %v4527 = vunpack.c.h.b16 %v4252
    %v4528 = vunpack.c.l.b16 %v4253
    %v4529 = vunpack.c.h.b16 %v4253
    %v4530 = vunpack.c.l.b16 %v4254
    %v4531 = vunpack.c.h.b16 %v4254
    %v4532 = vunpack.c.l.b16 %v4255
    %v4533 = vunpack.c.h.b16 %v4255
    %v4534 = vunpack.c.l.b16 %v4256
    %v4535 = vunpack.c.h.b16 %v4256
    %v4536 = vunpack.c.l.b16 %v4257
    %v4537 = vunpack.c.h.b16 %v4257
    %v4538 = vunpack.c.l.b16 %v4258
    %v4539 = vunpack.c.h.b16 %v4258
    %v4540 = vunpack.c.l.b16 %v4259
    %v4541 = vunpack.c.h.b16 %v4259
    %v4542 = vunpack.c.l.b16 %v4260
    %v4543 = vunpack.c.h.b16 %v4260
    %v4544 = vunpack.c.l.b16 %v4261
    %v4545 = vunpack.c.h.b16 %v4261
    %v4546 = vunpack.c.l.b16 %v4262
    %v4547 = vunpack.c.h.b16 %v4262
    %v4548 = vunpack.c.l.b16 %v4263
    %v4549 = vunpack.c.h.b16 %v4263
    %v4550 = vunpack.c.l.b16 %v4264
    %v4551 = vunpack.c.h.b16 %v4264
    %v4552 = vunpack.c.l.b16 %v4265
    %v4553 = vunpack.c.h.b16 %v4265
    %v4554 = vunpack.c.l.b16 %v4266
    %v4555 = vunpack.c.h.b16 %v4266
    %v4556 = vunpack.c.l.b16 %v4267
    %v4557 = vunpack.c.h.b16 %v4267
    %v4558 = vunpack.c.l.b16 %v4268
    %v4559 = vunpack.c.h.b16 %v4268
    %v4560 = vunpack.c.l.b16 %v4269
    %v4561 = vunpack.c.h.b16 %v4269
    %v4562 = vunpack.c.l.b16 %v4270
    %v4563 = vunpack.c.h.b16 %v4270
    %v4564 = vunpack.c.l.b16 %v4271
    %v4565 = vunpack.c.h.b16 %v4271
    %v4566 = vunpack.c.l.b16 %v4272
    %v4567 = vunpack.c.h.b16 %v4272
    %v4568 = vunpack.c.l.b16 %v4273
    %v4569 = vunpack.c.h.b16 %v4273
    %v4570 = vunpack.c.l.b16 %v4274
    %v4571 = vunpack.c.h.b16 %v4274
    %v4572 = vunpack.c.l.b16 %v4275
    %v4573 = vunpack.c.h.b16 %v4275
    %v4574 = vunpack.c.l.b16 %v4276
    %v4575 = vunpack.c.h.b16 %v4276
    %v4576 = vunpack.c.l.b16 %v4277
    %v4577 = vunpack.c.h.b16 %v4277
    %v4578 = vunpack.c.l.b16 %v4278
    %v4579 = vunpack.c.h.b16 %v4278
    %v4580 = vunpack.c.l.b16 %v4279
    %v4581 = vunpack.c.h.b16 %v4279
    %v4582 = vunpack.c.l.b16 %v4280
    %v4583 = vunpack.c.h.b16 %v4280
    %v4584 = vunpack.c.l.b16 %v4281
    %v4585 = vunpack.c.h.b16 %v4281
    %v4586 = vunpack.c.l.b16 %v4282
    %v4587 = vunpack.c.h.b16 %v4282
    %v4588 = vunpack.c.l.b16 %v4283
    %v4589 = vunpack.c.h.b16 %v4283
    %v4590 = vunpack.c.l.b16 %v4284
    %v4591 = vunpack.c.h.b16 %v4284
    %v4592 = vunpack.c.l.b16 %v4285
    %v4593 = vunpack.c.h.b16 %v4285
    %v4594 = vunpack.c.l.b16 %v4286
    %v4595 = vunpack.c.h.b16 %v4286
    %v4596 = vunpack.c.l.b16 %v4287
    %v4597 = vunpack.c.h.b16 %v4287
    %v4598 = vunpack.c.l.b16 %v4288
    %v4599 = vunpack.c.h.b16 %v4288
    %v4600 = vunpack.c.l.b16 %v4289
    %v4601 = vunpack.c.h.b16 %v4289
    %v4602 = vunpack.c.l.b16 %v4290
    %v4603 = vunpack.c.h.b16 %v4290
    %v4604 = vunpack.c.l.b16 %v4291
    %v4605 = vunpack.c.h.b16 %v4291
    %v4606 = vunpack.c.l.b16 %v4292
    %v4607 = vunpack.c.h.b16 %v4292
    %v4608 = vunpack.c.l.b16 %v4293
    %v4609 = vunpack.c.h.b16 %v4293
    %v4610 = vunpack.c.l.b16 %v4294
    %v4611 = vunpack.c.h.b16 %v4294
    %v4612 = vunpack.c.l.b16 %v4295
    %v4613 = vunpack.c.h.b16 %v4295
    %v4614 = vunpack.c.l.b16 %v4296
    %v4615 = vunpack.c.h.b16 %v4296
    %v4616 = vunpack.c.l.b16 %v4297
    %v4617 = vunpack.c.h.b16 %v4297
    %v4618 = vunpack.c.l.b16 %v4298
    %v4619 = vunpack.c.h.b16 %v4298
    %v4620 = vunpack.c.l.b16 %v4299
    %v4621 = vunpack.c.h.b16 %v4299
    %v4622 = vunpack.c.l.b16 %v4300
    %v4623 = vunpack.c.h.b16 %v4300
    %v4624 = vunpack.c.l.b16 %v4301
    %v4625 = vunpack.c.h.b16 %v4301
    %v4626 = vunpack.c.l.b16 %v4302
    %v4627 = vunpack.c.h.b16 %v4302
    %v4628 = vunpack.c.l.b16 %v4303
    %v4629 = vunpack.c.h.b16 %v4303
    %v4630 = vunpack.c.l.b16 %v4304
    %v4631 = vunpack.c.h.b16 %v4304
    %v4632 = vunpack.c.l.b16 %v4305
    %v4633 = vunpack.c.h.b16 %v4305
    %v4634 = vunpack.c.l.b16 %v4306
    %v4635 = vunpack.c.h.b16 %v4306
    %v4636 = vunpack.c.l.b16 %v4307
    %v4637 = vunpack.c.h.b16 %v4307
    %v4638 = vunpack.c.l.b16 %v4308
    %v4639 = vunpack.c.h.b16 %v4308
    %v4640 = vunpack.c.l.b16 %v4309
    %v4641 = vunpack.c.h.b16 %v4309
    %v4642 = vunpack.c.l.b16 %v4310
    %v4643 = vunpack.c.h.b16 %v4310
    %v4644 = vunpack.c.l.b16 %v4311
    %v4645 = vunpack.c.h.b16 %v4311
    %v4646 = vunpack.c.l.b16 %v4312
    %v4647 = vunpack.c.h.b16 %v4312
    %v4648 = vunpack.c.l.b16 %v4313
    %v4649 = vunpack.c.h.b16 %v4313
    %v4650 = vunpack.c.l.b16 %v4314
    %v4651 = vunpack.c.h.b16 %v4314
    %v4652 = vunpack.c.l.b16 %v4315
    %v4653 = vunpack.c.h.b16 %v4315
    %v4654 = vunpack.c.l.b16 %v4316
    %v4655 = vunpack.c.h.b16 %v4316
    %v4656 = vunpack.c.l.b16 %v4317
    %v4657 = vunpack.c.h.b16 %v4317
    %v4658 = vunpack.c.l.b16 %v4318
    %v4659 = vunpack.c.h.b16 %v4318
    %v4660 = vunpack.c.l.b16 %v4319
    %v4661 = vunpack.c.h.b16 %v4319
    %v4662 = vunpack.c.l.b16 %v4320
    %v4663 = vunpack.c.h.b16 %v4320
    %v4664 = vunpack.c.l.b16 %v4321
    %v4665 = vunpack.c.h.b16 %v4321
    %v4666 = vunpack.c.l.b16 %v4322
    %v4667 = vunpack.c.h.b16 %v4322
    %v4668 = vunpack.c.l.b16 %v4323
    %v4669 = vunpack.c.h.b16 %v4323
    %v4670 = vunpack.c.l.b16 %v4324
    %v4671 = vunpack.c.h.b16 %v4324
    %v4672 = vunpack.c.l.b16 %v4325
    %v4673 = vunpack.c.h.b16 %v4325
    %v4674 = vunpack.c.l.b16 %v4326
    %v4675 = vunpack.c.h.b16 %v4326
    %v4676 = vunpack.c.l.b16 %v4327
    %v4677 = vunpack.c.h.b16 %v4327
    %v4678 = vunpack.c.l.b16 %v4328
    %v4679 = vunpack.c.h.b16 %v4328
    %v4680 = vunpack.c.l.b16 %v4329
    %v4681 = vunpack.c.h.b16 %v4329
    %v4682 = vunpack.c.l.b16 %v4330
    %v4683 = vunpack.c.h.b16 %v4330
    %v4684 = vunpack.c.l.b16 %v4331
    %v4685 = vunpack.c.h.b16 %v4331
    %v4686 = vunpack.c.l.b16 %v4332
    %v4687 = vunpack.c.h.b16 %v4332
    %v4688 = vunpack.c.l.b16 %v4333
    %v4689 = vunpack.c.h.b16 %v4333
    %v4690 = vunpack.c.l.b16 %v4334
    %v4691 = vunpack.c.h.b16 %v4334
    %v4692 = vunpack.c.l.b16 %v4335
    %v4693 = vunpack.c.h.b16 %v4335
    %v4694 = vunpack.c.l.b16 %v4336
    %v4695 = vunpack.c.h.b16 %v4336
    %v4696 = vunpack.c.l.b16 %v4337
    %v4697 = vunpack.c.h.b16 %v4337
    %v4698 = vunpack.c.l.b16 %v4338
    %v4699 = vunpack.c.h.b16 %v4338
    %v4700 = vunpack.c.l.b16 %v4339
    %v4701 = vunpack.c.h.b16 %v4339
    %v4702 = vunpack.c.l.b16 %v4340
    %v4703 = vunpack.c.h.b16 %v4340
    %v4704 = vunpack.c.l.b16 %v4341
    %v4705 = vunpack.c.h.b16 %v4341
    %v4706 = vunpack.c.l.b16 %v4342
    %v4707 = vunpack.c.h.b16 %v4342
    %v4708 = vunpack.c.l.b16 %v4343
    %v4709 = vunpack.c.h.b16 %v4343
    %v4710 = vunpack.c.l.b16 %v4344
    %v4711 = vunpack.c.h.b16 %v4344
    %v4712 = vunpack.c.l.b16 %v4345
    %v4713 = vunpack.c.h.b16 %v4345
    %v4714 = vunpack.c.l.b16 %v4346
    %v4715 = vunpack.c.h.b16 %v4346
    %v4716 = vunpack.c.l.b16 %v4347
    %v4717 = vunpack.c.h.b16 %v4347
    %v4718 = vunpack.c.l.b16 %v4348
    %v4719 = vunpack.c.h.b16 %v4348
    %v4720 = vunpack.c.l.b16 %v4349
    %v4721 = vunpack.c.h.b16 %v4349
    %v4722 = vunpack.c.l.b16 %v4350
    %v4723 = vunpack.c.h.b16 %v4350
    %v4724 = vunpack.c.l.b16 %v4351
    %v4725 = vunpack.c.h.b16 %v4351
    %v4726 = vunpack.c.l.b16 %v4352
    %v4727 = vunpack.c.h.b16 %v4352
    %v4728 = vunpack.c.l.b16 %v4353
    %v4729 = vunpack.c.h.b16 %v4353
    %v4730 = vunpack.c.l.b16 %v4354
    %v4731 = vunpack.c.h.b16 %v4354
    %v4732 = vunpack.c.l.b16 %v4355
    %v4733 = vunpack.c.h.b16 %v4355
    %v4734 = vunpack.c.l.b16 %v4356
    %v4735 = vunpack.c.h.b16 %v4356
    %v4736 = vunpack.c.l.b16 %v4357
    %v4737 = vunpack.c.h.b16 %v4357
    %v4738 = vunpack.c.l.b16 %v4358
    %v4739 = vunpack.c.h.b16 %v4358
    %v4740 = vunpack.c.l.b16 %v4359
    %v4741 = vunpack.c.h.b16 %v4359
    %v4742 = vunpack.c.l.b16 %v4360
    %v4743 = vunpack.c.h.b16 %v4360
    %v4744 = vunpack.c.l.b16 %v4361
    %v4745 = vunpack.c.h.b16 %v4361
    %v4746 = vunpack.c.l.b16 %v4362
    %v4747 = vunpack.c.h.b16 %v4362
    %v4748 = vunpack.c.l.b16 %v4363
    %v4749 = vunpack.c.h.b16 %v4363
    %v4750 = vunpack.c.l.b16 %v4364
    %v4751 = vunpack.c.h.b16 %v4364
    %v4752 = vunpack.c.l.b16 %v4365
    %v4753 = vunpack.c.h.b16 %v4365
    %v4754 = vunpack.c.l.b16 %v4366
    %v4755 = vunpack.c.h.b16 %v4366
    %v4756 = vunpack.c.l.b16 %v4367
    %v4757 = vunpack.c.h.b16 %v4367
    %v4758 = vunpack.c.l.b16 %v4368
    %v4759 = vunpack.c.h.b16 %v4368
    %v4760 = vunpack.c.l.b16 %v4369
    %v4761 = vunpack.c.h.b16 %v4369
    %v4762 = vunpack.c.l.b16 %v4370
    %v4763 = vunpack.c.h.b16 %v4370
    %v4764 = vunpack.c.l.b16 %v4371
    %v4765 = vunpack.c.h.b16 %v4371
    %v4766 = vunpack.c.l.b16 %v4372
    %v4767 = vunpack.c.h.b16 %v4372
    %v4768 = vunpack.c.l.b16 %v4373
    %v4769 = vunpack.c.h.b16 %v4373
    %v4770 = vpack.c.b16 %v4516, %v4514
    %v4771 = vpack.c.b16 %v4517, %v4515
    %v4772 = vpack.c.b16 %v4520, %v4518
    %v4773 = vpack.c.b16 %v4521, %v4519
    %v4774 = vpack.c.b16 %v4524, %v4522
    %v4775 = vpack.c.b16 %v4525, %v4523
    %v4776 = vpack.c.b16 %v4528, %v4526
    %v4777 = vpack.c.b16 %v4529, %v4527
    %v4778 = vpack.c.b16 %v4532, %v4530
    %v4779 = vpack.c.b16 %v4533, %v4531
    %v4780 = vpack.c.b16 %v4536, %v4534
    %v4781 = vpack.c.b16 %v4537, %v4535
    %v4782 = vpack.c.b16 %v4540, %v4538
    %v4783 = vpack.c.b16 %v4541, %v4539
    %v4784 = vpack.c.b16 %v4544, %v4542
    %v4785 = vpack.c.b16 %v4545, %v4543
    %v4786 = vpack.c.b16 %v4548, %v4546
    %v4787 = vpack.c.b16 %v4549, %v4547
    %v4788 = vpack.c.b16 %v4552, %v4550
    %v4789 = vpack.c.b16 %v4553, %v4551
    %v4790 = vpack.c.b16 %v4556, %v4554
    %v4791 = vpack.c.b16 %v4557, %v4555
    %v4792 = vpack.c.b16 %v4560, %v4558
    %v4793 = vpack.c.b16 %v4561, %v4559
    %v4794 = vpack.c.b16 %v4564, %v4562
    %v4795 = vpack.c.b16 %v4565, %v4563
    %v4796 = vpack.c.b16 %v4568, %v4566
    %v4797 = vpack.c.b16 %v4569, %v4567
    %v4798 = vpack.c.b16 %v4572, %v4570
    %v4799 = vpack.c.b16 %v4573, %v4571
    %v4800 = vpack.c.b16 %v4576, %v4574
    %v4801 = vpack.c.b16 %v4577, %v4575
    %v4802 = vpack.c.b16 %v4580, %v4578
    %v4803 = vpack.c.b16 %v4581, %v4579
    %v4804 = vpack.c.b16 %v4584, %v4582
    %v4805 = vpack.c.b16 %v4585, %v4583
    %v4806 = vpack.c.b16 %v4588, %v4586
    %v4807 = vpack.c.b16 %v4589, %v4587
    %v4808 = vpack.c.b16 %v4592, %v4590
    %v4809 = vpack.c.b16 %v4593, %v4591
    %v4810 = vpack.c.b16 %v4596, %v4594
    %v4811 = vpack.c.b16 %v4597, %v4595
    %v4812 = vpack.c.b16 %v4600, %v4598
    %v4813 = vpack.c.b16 %v4601, %v4599
    %v4814 = vpack.c.b16 %v4604, %v4602
    %v4815 = vpack.c.b16 %v4605, %v4603
    %v4816 = vpack.c.b16 %v4608, %v4606
    %v4817 = vpack.c.b16 %v4609, %v4607
    %v4818 = vpack.c.b16 %v4612, %v4610
    %v4819 = vpack.c.b16 %v4613, %v4611
    %v4820 = vpack.c.b16 %v4616, %v4614
    %v4821 = vpack.c.b16 %v4617, %v4615
    %v4822 = vpack.c.b16 %v4620, %v4618
    %v4823 = vpack.c.b16 %v4621, %v4619
    %v4824 = vpack.c.b16 %v4624, %v4622
    %v4825 = vpack.c.b16 %v4625, %v4623
    %v4826 = vpack.c.b16 %v4628, %v4626
    %v4827 = vpack.c.b16 %v4629, %v4627
    %v4828 = vpack.c.b16 %v4632, %v4630
    %v4829 = vpack.c.b16 %v4633, %v4631
    %v4830 = vpack.c.b16 %v4636, %v4634
    %v4831 = vpack.c.b16 %v4637, %v4635
    %v4832 = vpack.c.b16 %v4640, %v4638
    %v4833 = vpack.c.b16 %v4641, %v4639
    %v4834 = vpack.c.b16 %v4644, %v4642
    %v4835 = vpack.c.b16 %v4645, %v4643
    %v4836 = vpack.c.b16 %v4648, %v4646
    %v4837 = vpack.c.b16 %v4649, %v4647
    %v4838 = vpack.c.b16 %v4652, %v4650
    %v4839 = vpack.c.b16 %v4653, %v4651
    %v4840 = vpack.c.b16 %v4656, %v4654
    %v4841 = vpack.c.b16 %v4657, %v4655
    %v4842 = vpack.c.b16 %v4660, %v4658
    %v4843 = vpack.c.b16 %v4661, %v4659
    %v4844 = vpack.c.b16 %v4664, %v4662
    %v4845 = vpack.c.b16 %v4665, %v4663
    %v4846 = vpack.c.b16 %v4668, %v4666
    %v4847 = vpack.c.b16 %v4669, %v4667
    %v4848 = vpack.c.b16 %v4672, %v4670
    %v4849 = vpack.c.b16 %v4673, %v4671
    %v4850 = vpack.c.b16 %v4676, %v4674
    %v4851 = vpack.c.b16 %v4677, %v4675
    %v4852 = vpack.c.b16 %v4680, %v4678
    %v4853 = vpack.c.b16 %v4681, %v4679
    %v4854 = vpack.c.b16 %v4684, %v4682
    %v4855 = vpack.c.b16 %v4685, %v4683
    %v4856 = vpack.c.b16 %v4688, %v4686
    %v4857 = vpack.c.b16 %v4689, %v4687
    %v4858 = vpack.c.b16 %v4692, %v4690
    %v4859 = vpack.c.b16 %v4693, %v4691
    %v4860 = vpack.c.b16 %v4696, %v4694
    %v4861 = vpack.c.b16 %v4697, %v4695
    %v4862 = vpack.c.b16 %v4700, %v4698
    %v4863 = vpack.c.b16 %v4701, %v4699
    %v4864 = vpack.c.b16 %v4704, %v4702
    %v4865 = vpack.c.b16 %v4705, %v4703
    %v4866 = vpack.c.b16 %v4708, %v4706
    %v4867 = vpack.c.b16 %v4709, %v4707
    %v4868 = vpack.c.b16 %v4712, %v4710
    %v4869 = vpack.c.b16 %v4713, %v4711
    %v4870 = vpack.c.b16 %v4716, %v4714
    %v4871 = vpack.c.b16 %v4717, %v4715
    %v4872 = vpack.c.b16 %v4720, %v4718
    %v4873 = vpack.c.b16 %v4721, %v4719
    %v4874 = vpack.c.b16 %v4724, %v4722
    %v4875 = vpack.c.b16 %v4725, %v4723
    %v4876 = vpack.c.b16 %v4728, %v4726
    %v4877 = vpack.c.b16 %v4729, %v4727
    %v4878 = vpack.c.b16 %v4732, %v4730
    %v4879 = vpack.c.b16 %v4733, %v4731
    %v4880 = vpack.c.b16 %v4736, %v4734
    %v4881 = vpack.c.b16 %v4737, %v4735
    %v4882 = vpack.c.b16 %v4740, %v4738
    %v4883 = vpack.c.b16 %v4741, %v4739
    %v4884 = vpack.c.b16 %v4744, %v4742
    %v4885 = vpack.c.b16 %v4745, %v4743
    %v4886 = vpack.c.b16 %v4748, %v4746
    %v4887 = vpack.c.b16 %v4749, %v4747
    %v4888 = vpack.c.b16 %v4752, %v4750
    %v4889 = vpack.c.b16 %v4753, %v4751
    %v4890 = vpack.c.b16 %v4756, %v4754
    %v4891 = vpack.c.b16 %v4757, %v4755
    %v4892 = vpack.c.b16 %v4760, %v4758
    %v4893 = vpack.c.b16 %v4761, %v4759
    %v4894 = vpack.c.b16 %v4764, %v4762
    %v4895 = vpack.c.b16 %v4765, %v4763
    %v4896 = vpack.c.b16 %v4768, %v4766
    %v4897 = vpack.c.b16 %v4769, %v4767
    %5026 = vmatprep.subr.bf16.mxu0 %v4785
    %5027 = vmatpush1.bf16.msra.mxu0 %v4784
    %5028 = vmatprep.subr.bf16.mxu0 %v4783
    %5029 = vmatpush1.bf16.msra.mxu0 %v4782
    %5030 = vmatprep.subr.bf16.mxu0 %v4781
    %5031 = vmatpush1.bf16.msra.mxu0 %v4780
    %5032 = vmatprep.subr.bf16.mxu0 %v4779
    %5033 = vmatpush1.bf16.msra.mxu0 %v4778
    %5034 = vmatprep.subr.bf16.mxu0 %v4777
    %5035 = vmatpush1.bf16.msra.mxu0 %v4776
    %5036 = vmatprep.subr.bf16.mxu0 %v4775
    %5037 = vmatpush1.bf16.msra.mxu0 %v4774
    %5038 = vmatprep.subr.bf16.mxu0 %v4773
    %5039 = vmatpush1.bf16.msra.mxu0 %v4772
    %5040 = vmatprep.subr.bf16.mxu0 %v4771
    %5041 = vmatpush1.bf16.msra.mxu0 %v4770
    %5042 = vmatprep.subr.bf16.mxu0 %v4801
    %5043 = vmatpush2.bf16.msra.mxu0 %v4800
    %5044 = vmatprep.subr.bf16.mxu0 %v4799
    %5045 = vmatpush2.bf16.msra.mxu0 %v4798
    %5046 = vmatprep.subr.bf16.mxu0 %v4797
    %5047 = vmatpush2.bf16.msra.mxu0 %v4796
    %5048 = vmatprep.subr.bf16.mxu0 %v4795
    %5049 = vmatpush2.bf16.msra.mxu0 %v4794
    %5050 = vmatprep.subr.bf16.mxu0 %v4793
    %5051 = vmatpush2.bf16.msra.mxu0 %v4792
    %5052 = vmatprep.subr.bf16.mxu0 %v4791
    %5053 = vmatpush2.bf16.msra.mxu0 %v4790
    %5054 = vmatprep.subr.bf16.mxu0 %v4789
    %5055 = vmatpush2.bf16.msra.mxu0 %v4788
    %5056 = vmatprep.subr.bf16.mxu0 %v4787
    %5057 = vmatpush2.bf16.msra.mxu0 %v4786
    %5058 = vmatprep.mubr.bf16.mxu0 %v4231
    %5059 = vmatmul.mubr.bf16.gmra.mxu0 %v4230
    %v5060 = vpop.f32.mrf.mxu0
    %v5061 = vadd.f32 %v4379, %v5060
    %v5062 = vpop.f32.mrf.mxu0
    %v5063 = vadd.f32 %v4383, %v5062
    %v5064 = vpop.f32.mrf.mxu0
    %v5065 = vadd.f32 %v4379, %v5064
    %v5066 = vpop.f32.mrf.mxu0
    %v5067 = vadd.f32 %v4383, %v5066
    %5068 = vmatprep.mubr.bf16.mxu0 %v4239
    %5069 = vmatmul.mubr.bf16.gmra.mxu0 %v4238
    %v5070 = vpop.f32.mrf.mxu0
    %v5071 = vadd.f32 %v4379, %v5070
    %v5072 = vpop.f32.mrf.mxu0
    %v5073 = vadd.f32 %v4383, %v5072
    %v5074 = vpop.f32.mrf.mxu0
    %v5075 = vadd.f32 %v4379, %v5074
    %v5076 = vpop.f32.mrf.mxu0
    %v5077 = vadd.f32 %v4383, %v5076
    %5078 = vdwg.mxu0
    %5079 = vmatprep.subr.bf16.mxu0 %v4817
    %5080 = vmatpush1.bf16.msra.mxu0 %v4816
    %5081 = vmatprep.subr.bf16.mxu0 %v4815
    %5082 = vmatpush1.bf16.msra.mxu0 %v4814
    %5083 = vmatprep.subr.bf16.mxu0 %v4813
    %5084 = vmatpush1.bf16.msra.mxu0 %v4812
    %5085 = vmatprep.subr.bf16.mxu0 %v4811
    %5086 = vmatpush1.bf16.msra.mxu0 %v4810
    %5087 = vmatprep.subr.bf16.mxu0 %v4809
    %5088 = vmatpush1.bf16.msra.mxu0 %v4808
    %5089 = vmatprep.subr.bf16.mxu0 %v4807
    %5090 = vmatpush1.bf16.msra.mxu0 %v4806
    %5091 = vmatprep.subr.bf16.mxu0 %v4805
    %5092 = vmatpush1.bf16.msra.mxu0 %v4804
    %5093 = vmatprep.subr.bf16.mxu0 %v4803
    %5094 = vmatpush1.bf16.msra.mxu0 %v4802
    %5095 = vmatprep.subr.bf16.mxu0 %v4833
    %5096 = vmatpush2.bf16.msra.mxu0 %v4832
    %5097 = vmatprep.subr.bf16.mxu0 %v4831
    %5098 = vmatpush2.bf16.msra.mxu0 %v4830
    %5099 = vmatprep.subr.bf16.mxu0 %v4829
    %5100 = vmatpush2.bf16.msra.mxu0 %v4828
    %5101 = vmatprep.subr.bf16.mxu0 %v4827
    %5102 = vmatpush2.bf16.msra.mxu0 %v4826
    %5103 = vmatprep.subr.bf16.mxu0 %v4825
    %5104 = vmatpush2.bf16.msra.mxu0 %v4824
    %5105 = vmatprep.subr.bf16.mxu0 %v4823
    %5106 = vmatpush2.bf16.msra.mxu0 %v4822
    %5107 = vmatprep.subr.bf16.mxu0 %v4821
    %5108 = vmatpush2.bf16.msra.mxu0 %v4820
    %5109 = vmatprep.subr.bf16.mxu0 %v4819
    %5110 = vmatpush2.bf16.msra.mxu0 %v4818
    %5111 = vmatprep.mubr.bf16.mxu0 %v4233
    %5112 = vmatmul.mubr.bf16.gmra.mxu0 %v4232
    %v5113 = vpop.f32.mrf.mxu0
    %v5114 = vadd.f32 %v5061, %v5113
    %v5115 = vpop.f32.mrf.mxu0
    %v5116 = vadd.f32 %v5063, %v5115
    %v5117 = vpop.f32.mrf.mxu0
    %v5118 = vadd.f32 %v5065, %v5117
    %v5119 = vpop.f32.mrf.mxu0
    %v5120 = vadd.f32 %v5067, %v5119
    %5121 = vmatprep.mubr.bf16.mxu0 %v4241
    %5122 = vmatmul.mubr.bf16.gmra.mxu0 %v4240
    %v5123 = vpop.f32.mrf.mxu0
    %v5124 = vadd.f32 %v5071, %v5123
    %v5125 = vpop.f32.mrf.mxu0
    %v5126 = vadd.f32 %v5073, %v5125
    %v5127 = vpop.f32.mrf.mxu0
    %v5128 = vadd.f32 %v5075, %v5127
    %v5129 = vpop.f32.mrf.mxu0
    %v5130 = vadd.f32 %v5077, %v5129
    %5131 = vdwg.mxu0
    %5132 = vmatprep.subr.bf16.mxu0 %v4849
    %5133 = vmatpush1.bf16.msra.mxu0 %v4848
    %5134 = vmatprep.subr.bf16.mxu0 %v4847
    %5135 = vmatpush1.bf16.msra.mxu0 %v4846
    %5136 = vmatprep.subr.bf16.mxu0 %v4845
    %5137 = vmatpush1.bf16.msra.mxu0 %v4844
    %5138 = vmatprep.subr.bf16.mxu0 %v4843
    %5139 = vmatpush1.bf16.msra.mxu0 %v4842
    %5140 = vmatprep.subr.bf16.mxu0 %v4841
    %5141 = vmatpush1.bf16.msra.mxu0 %v4840
    %5142 = vmatprep.subr.bf16.mxu0 %v4839
    %5143 = vmatpush1.bf16.msra.mxu0 %v4838
    %5144 = vmatprep.subr.bf16.mxu0 %v4837
    %5145 = vmatpush1.bf16.msra.mxu0 %v4836
    %5146 = vmatprep.subr.bf16.mxu0 %v4835
    %5147 = vmatpush1.bf16.msra.mxu0 %v4834
    %5148 = vmatprep.subr.bf16.mxu0 %v4865
    %5149 = vmatpush2.bf16.msra.mxu0 %v4864
    %5150 = vmatprep.subr.bf16.mxu0 %v4863
    %5151 = vmatpush2.bf16.msra.mxu0 %v4862
    %5152 = vmatprep.subr.bf16.mxu0 %v4861
    %5153 = vmatpush2.bf16.msra.mxu0 %v4860
    %5154 = vmatprep.subr.bf16.mxu0 %v4859
    %5155 = vmatpush2.bf16.msra.mxu0 %v4858
    %5156 = vmatprep.subr.bf16.mxu0 %v4857
    %5157 = vmatpush2.bf16.msra.mxu0 %v4856
    %5158 = vmatprep.subr.bf16.mxu0 %v4855
    %5159 = vmatpush2.bf16.msra.mxu0 %v4854
    %5160 = vmatprep.subr.bf16.mxu0 %v4853
    %5161 = vmatpush2.bf16.msra.mxu0 %v4852
    %5162 = vmatprep.subr.bf16.mxu0 %v4851
    %5163 = vmatpush2.bf16.msra.mxu0 %v4850
    %5164 = vmatprep.mubr.bf16.mxu0 %v4235
    %5165 = vmatmul.mubr.bf16.gmra.mxu0 %v4234
    %v5166 = vpop.f32.mrf.mxu0
    %v5167 = vadd.f32 %v5114, %v5166
    %v5168 = vpop.f32.mrf.mxu0
    %v5169 = vadd.f32 %v5116, %v5168
    %v5170 = vpop.f32.mrf.mxu0
    %v5171 = vadd.f32 %v5118, %v5170
    %v5172 = vpop.f32.mrf.mxu0
    %v5173 = vadd.f32 %v5120, %v5172
    %5174 = vmatprep.mubr.bf16.mxu0 %v4243
    %5175 = vmatmul.mubr.bf16.gmra.mxu0 %v4242
    %v5176 = vpop.f32.mrf.mxu0
    %v5177 = vadd.f32 %v5124, %v5176
    %v5178 = vpop.f32.mrf.mxu0
    %v5179 = vadd.f32 %v5126, %v5178
    %v5180 = vpop.f32.mrf.mxu0
    %v5181 = vadd.f32 %v5128, %v5180
    %v5182 = vpop.f32.mrf.mxu0
    %v5183 = vadd.f32 %v5130, %v5182
    %5184 = vdwg.mxu0
    %5185 = vmatprep.subr.bf16.mxu0 %v4881
    %5186 = vmatpush1.bf16.msra.mxu0 %v4880
    %5187 = vmatprep.subr.bf16.mxu0 %v4879
    %5188 = vmatpush1.bf16.msra.mxu0 %v4878
    %5189 = vmatprep.subr.bf16.mxu0 %v4877
    %5190 = vmatpush1.bf16.msra.mxu0 %v4876
    %5191 = vmatprep.subr.bf16.mxu0 %v4875
    %5192 = vmatpush1.bf16.msra.mxu0 %v4874
    %5193 = vmatprep.subr.bf16.mxu0 %v4873
    %5194 = vmatpush1.bf16.msra.mxu0 %v4872
    %5195 = vmatprep.subr.bf16.mxu0 %v4871
    %5196 = vmatpush1.bf16.msra.mxu0 %v4870
    %5197 = vmatprep.subr.bf16.mxu0 %v4869
    %5198 = vmatpush1.bf16.msra.mxu0 %v4868
    %5199 = vmatprep.subr.bf16.mxu0 %v4867
    %5200 = vmatpush1.bf16.msra.mxu0 %v4866
    %5201 = vmatprep.subr.bf16.mxu0 %v4897
    %5202 = vmatpush2.bf16.msra.mxu0 %v4896
    %5203 = vmatprep.subr.bf16.mxu0 %v4895
    %5204 = vmatpush2.bf16.msra.mxu0 %v4894
    %5205 = vmatprep.subr.bf16.mxu0 %v4893
    %5206 = vmatpush2.bf16.msra.mxu0 %v4892
    %5207 = vmatprep.subr.bf16.mxu0 %v4891
    %5208 = vmatpush2.bf16.msra.mxu0 %v4890
    %5209 = vmatprep.subr.bf16.mxu0 %v4889
    %5210 = vmatpush2.bf16.msra.mxu0 %v4888
    %5211 = vmatprep.subr.bf16.mxu0 %v4887
    %5212 = vmatpush2.bf16.msra.mxu0 %v4886
    %5213 = vmatprep.subr.bf16.mxu0 %v4885
    %5214 = vmatpush2.bf16.msra.mxu0 %v4884
    %5215 = vmatprep.subr.bf16.mxu0 %v4883
    %5216 = vmatpush2.bf16.msra.mxu0 %v4882
    %5217 = vmatprep.mubr.bf16.mxu0 %v4237
    %5218 = vmatmul.mubr.bf16.gmra.mxu0 %v4236
    %v5219 = vpop.f32.mrf.mxu0
    %v5220 = vadd.f32 %v5167, %v5219
    %v5221 = vpop.f32.mrf.mxu0
    %v5222 = vadd.f32 %v5169, %v5221
    %v5223 = vpop.f32.mrf.mxu0
    %v5224 = vadd.f32 %v5171, %v5223
    %v5225 = vpop.f32.mrf.mxu0
    %v5226 = vadd.f32 %v5173, %v5225
    %5227 = vmatprep.mubr.bf16.mxu0 %v4245
    %5228 = vmatmul.mubr.bf16.gmra.mxu0 %v4244
    %v5229 = vpop.f32.mrf.mxu0
    %v5230 = vadd.f32 %v5177, %v5229
    %v5231 = vpop.f32.mrf.mxu0
    %v5232 = vadd.f32 %v5179, %v5231
    %v5233 = vpop.f32.mrf.mxu0
    %v5234 = vadd.f32 %v5181, %v5233
    %v5235 = vpop.f32.mrf.mxu0
    %v5236 = vadd.f32 %v5183, %v5235
    %5237 = vdwg.mxu0
    %v5238 = vld [vmem:[%s11] sm:$0x3]
    %v5239 = vld [vmem:[%s12] sm:$0x3]
    %v5240 = vrot.slane %v5220, 4
    %v5241 = vadd.f32 %v5220, %v5240
    %v5242 = vrot.slane %v5241, 2
    %v5243 = vadd.f32 %v5241, %v5242
    %v5244 = vrot.slane %v5243, 1
    %v5245 = vadd.f32 %v5243, %v5244
    %v5246 = vrot.slane %v5222, 4
    %v5247 = vadd.f32 %v5222, %v5246
    %v5248 = vrot.slane %v5247, 2
    %v5249 = vadd.f32 %v5247, %v5248
    %v5250 = vrot.slane %v5249, 1
    %v5251 = vadd.f32 %v5249, %v5250
    %v5252 = vrot.slane %v5224, 4
    %v5253 = vadd.f32 %v5224, %v5252
    %v5254 = vrot.slane %v5253, 2
    %v5255 = vadd.f32 %v5253, %v5254
    %v5256 = vrot.slane %v5255, 1
    %v5257 = vadd.f32 %v5255, %v5256
    %v5258 = vrot.slane %v5226, 4
    %v5259 = vadd.f32 %v5226, %v5258
    %v5260 = vrot.slane %v5259, 2
    %v5261 = vadd.f32 %v5259, %v5260
    %v5262 = vrot.slane %v5261, 1
    %v5263 = vadd.f32 %v5261, %v5262
    %v5264 = vrot.slane %v5230, 4
    %v5265 = vadd.f32 %v5230, %v5264
    %v5266 = vrot.slane %v5265, 2
    %v5267 = vadd.f32 %v5265, %v5266
    %v5268 = vrot.slane %v5267, 1
    %v5269 = vadd.f32 %v5267, %v5268
    %v5270 = vrot.slane %v5232, 4
    %v5271 = vadd.f32 %v5232, %v5270
    %v5272 = vrot.slane %v5271, 2
    %v5273 = vadd.f32 %v5271, %v5272
    %v5274 = vrot.slane %v5273, 1
    %v5275 = vadd.f32 %v5273, %v5274
    %v5276 = vrot.slane %v5234, 4
    %v5277 = vadd.f32 %v5234, %v5276
    %v5278 = vrot.slane %v5277, 2
    %v5279 = vadd.f32 %v5277, %v5278
    %v5280 = vrot.slane %v5279, 1
    %v5281 = vadd.f32 %v5279, %v5280
    %v5282 = vrot.slane %v5236, 4
    %v5283 = vadd.f32 %v5236, %v5282
    %v5284 = vrot.slane %v5283, 2
    %v5285 = vadd.f32 %v5283, %v5284
    %v5286 = vrot.slane %v5285, 1
    %v5287 = vadd.f32 %v5285, %v5286
    %v5288 = vmul.f32 %v5245, 0.125
    %v5289 = vmul.f32 %v5251, 0.125
    %v5290 = vmul.f32 %v5257, 0.125
    %v5291 = vmul.f32 %v5263, 0.125
    %v5292 = vmul.f32 %v5269, 0.125
    %v5293 = vmul.f32 %v5275, 0.125
    %v5294 = vmul.f32 %v5281, 0.125
    %v5295 = vmul.f32 %v5287, 0.125
    %v5296 = vmul.f32 %v5220, %v5220
    %v5297 = vmul.f32 %v5222, %v5222
    %v5298 = vmul.f32 %v5224, %v5224
    %v5299 = vmul.f32 %v5226, %v5226
    %v5300 = vmul.f32 %v5230, %v5230
    %v5301 = vmul.f32 %v5232, %v5232
    %v5302 = vmul.f32 %v5234, %v5234
    %v5303 = vmul.f32 %v5236, %v5236
    %v5304 = vrot.slane %v5296, 4
    %v5305 = vadd.f32 %v5296, %v5304
    %v5306 = vrot.slane %v5305, 2
    %v5307 = vadd.f32 %v5305, %v5306
    %v5308 = vrot.slane %v5307, 1
    %v5309 = vadd.f32 %v5307, %v5308
    %v5310 = vrot.slane %v5297, 4
    %v5311 = vadd.f32 %v5297, %v5310
    %v5312 = vrot.slane %v5311, 2
    %v5313 = vadd.f32 %v5311, %v5312
    %v5314 = vrot.slane %v5313, 1
    %v5315 = vadd.f32 %v5313, %v5314
    %v5316 = vrot.slane %v5298, 4
    %v5317 = vadd.f32 %v5298, %v5316
    %v5318 = vrot.slane %v5317, 2
    %v5319 = vadd.f32 %v5317, %v5318
    %v5320 = vrot.slane %v5319, 1
    %v5321 = vadd.f32 %v5319, %v5320
    %v5322 = vrot.slane %v5299, 4
    %v5323 = vadd.f32 %v5299, %v5322
    %v5324 = vrot.slane %v5323, 2
    %v5325 = vadd.f32 %v5323, %v5324
    %v5326 = vrot.slane %v5325, 1
    %v5327 = vadd.f32 %v5325, %v5326
    %v5328 = vrot.slane %v5300, 4
    %v5329 = vadd.f32 %v5300, %v5328
    %v5330 = vrot.slane %v5329, 2
    %v5331 = vadd.f32 %v5329, %v5330
    %v5332 = vrot.slane %v5331, 1
    %v5333 = vadd.f32 %v5331, %v5332
    %v5334 = vrot.slane %v5301, 4
    %v5335 = vadd.f32 %v5301, %v5334
    %v5336 = vrot.slane %v5335, 2
    %v5337 = vadd.f32 %v5335, %v5336
    %v5338 = vrot.slane %v5337, 1
    %v5339 = vadd.f32 %v5337, %v5338
    %v5340 = vrot.slane %v5302, 4
    %v5341 = vadd.f32 %v5302, %v5340
    %v5342 = vrot.slane %v5341, 2
    %v5343 = vadd.f32 %v5341, %v5342
    %v5344 = vrot.slane %v5343, 1
    %v5345 = vadd.f32 %v5343, %v5344
    %v5346 = vrot.slane %v5303, 4
    %v5347 = vadd.f32 %v5303, %v5346
    %v5348 = vrot.slane %v5347, 2
    %v5349 = vadd.f32 %v5347, %v5348
    %v5350 = vrot.slane %v5349, 1
    %v5351 = vadd.f32 %v5349, %v5350
    %v5352 = vmul.f32 %v5309, 0.125
    %v5353 = vmul.f32 %v5315, 0.125
    %v5354 = vmul.f32 %v5321, 0.125
    %v5355 = vmul.f32 %v5327, 0.125
    %v5356 = vmul.f32 %v5333, 0.125
    %v5357 = vmul.f32 %v5339, 0.125
    %v5358 = vmul.f32 %v5345, 0.125
    %v5359 = vmul.f32 %v5351, 0.125
    %v5360 = vmul.f32 %v5288, %v5288
    %v5361 = vmul.f32 %v5289, %v5289
    %v5362 = vmul.f32 %v5290, %v5290
    %v5363 = vmul.f32 %v5291, %v5291
    %v5364 = vmul.f32 %v5292, %v5292
    %v5365 = vmul.f32 %v5293, %v5293
    %v5366 = vmul.f32 %v5294, %v5294
    %v5367 = vmul.f32 %v5295, %v5295
    %v5368 = vsub.f32 %v5352, %v5360
    %v5369 = vsub.f32 %v5353, %v5361
    %v5370 = vsub.f32 %v5354, %v5362
    %v5371 = vsub.f32 %v5355, %v5363
    %v5372 = vsub.f32 %v5356, %v5364
    %v5373 = vsub.f32 %v5357, %v5365
    %v5374 = vsub.f32 %v5358, %v5366
    %v5375 = vsub.f32 %v5359, %v5367
    %v5376 = vadd.f32 %v5368, 1e-05
    %v5377 = vadd.f32 %v5369, 1e-05
    %v5378 = vadd.f32 %v5370, 1e-05
    %v5379 = vadd.f32 %v5371, 1e-05
    %v5380 = vadd.f32 %v5372, 1e-05
    %v5381 = vadd.f32 %v5373, 1e-05
    %v5382 = vadd.f32 %v5374, 1e-05
    %v5383 = vadd.f32 %v5375, 1e-05
    %v5384 = vrsqrt.pop %v5376
    %v5385 = vrsqrt.pop %v5377
    %v5386 = vrsqrt.pop %v5378
    %v5387 = vrsqrt.pop %v5379
    %v5388 = vrsqrt.pop %v5380
    %v5389 = vrsqrt.pop %v5381
    %v5390 = vrsqrt.pop %v5382
    %v5391 = vrsqrt.pop %v5383
    %v5400 = vcombine.low %v5384, %v5385
    %v5402 = vunpack.c.l.s4 1966171168
    %v5403 = vunpack.c.0.s8 %v5402
    %v5404 = vlaneseq
    %v5405 = vshrl.u32 %v5404, 7
    %v5406 = vsub.s32 %v5403, %v5405
    %v5407 = vrot.slane %v5400, %v5406
    %v5409 = vunpack.c.l.s4 1966171168
    %v5410 = vunpack.c.0.s8 %v5409
    %v5411 = vlaneseq
    %v5412 = vshrl.u32 %v5411, 7
    %v5413 = vsub.s32 %v5410, %v5412
    %v5414 = vrot.slane %v5407, %v5413
    %v5415 = vcombine.low %v5386, %v5387
    %v5417 = vunpack.c.l.s4 1966171168
    %v5418 = vunpack.c.0.s8 %v5417
    %v5419 = vlaneseq
    %v5420 = vshrl.u32 %v5419, 7
    %v5421 = vsub.s32 %v5418, %v5420
    %v5422 = vrot.slane %v5415, %v5421
    %v5424 = vunpack.c.l.s4 1966171168
    %v5425 = vunpack.c.0.s8 %v5424
    %v5426 = vlaneseq
    %v5427 = vshrl.u32 %v5426, 7
    %v5428 = vsub.s32 %v5425, %v5427
    %v5429 = vrot.slane %v5422, %v5428
    %v5430 = vcombine.low %v5388, %v5389
    %v5432 = vunpack.c.l.s4 1966171168
    %v5433 = vunpack.c.0.s8 %v5432
    %v5434 = vlaneseq
    %v5435 = vshrl.u32 %v5434, 7
    %v5436 = vsub.s32 %v5433, %v5435
    %v5437 = vrot.slane %v5430, %v5436
    %v5439 = vunpack.c.l.s4 1966171168
    %v5440 = vunpack.c.0.s8 %v5439
    %v5441 = vlaneseq
    %v5442 = vshrl.u32 %v5441, 7
    %v5443 = vsub.s32 %v5440, %v5442
    %v5444 = vrot.slane %v5437, %v5443
    %v5445 = vcombine.low %v5390, %v5391
    %v5447 = vunpack.c.l.s4 1966171168
    %v5448 = vunpack.c.0.s8 %v5447
    %v5449 = vlaneseq
    %v5450 = vshrl.u32 %v5449, 7
    %v5451 = vsub.s32 %v5448, %v5450
    %v5452 = vrot.slane %v5445, %v5451
    %v5454 = vunpack.c.l.s4 1966171168
    %v5455 = vunpack.c.0.s8 %v5454
    %v5456 = vlaneseq
    %v5457 = vshrl.u32 %v5456, 7
    %v5458 = vsub.s32 %v5455, %v5457
    %v5459 = vrot.slane %v5452, %v5458
    %v5464 = vmul.f32 %v5238, %v5414
    %v5465 = vmul.f32 %v5238, %v5429
    %v5466 = vmul.f32 %v5238, %v5444
    %v5467 = vmul.f32 %v5238, %v5459
    %v5472 = vlaneseq
    %v5473 = vshrl.u32 %v5472, 7
    %v5474 = vsub.s32 0, %v5473
    %v5475 = vrot.slane %v5464, %v5474
    %v5476 = vlaneseq
    %v5477 = vshrl.u32 %v5476, 7
    %v5478 = vsub.s32 1, %v5477
    %v5479 = vrot.slane %v5464, %v5478
    %v5480 = vlaneseq
    %v5481 = vshrl.u32 %v5480, 7
    %v5482 = vsub.s32 0, %v5481
    %v5483 = vrot.slane %v5465, %v5482
    %v5484 = vlaneseq
    %v5485 = vshrl.u32 %v5484, 7
    %v5486 = vsub.s32 1, %v5485
    %v5487 = vrot.slane %v5465, %v5486
    %v5488 = vlaneseq
    %v5489 = vshrl.u32 %v5488, 7
    %v5490 = vsub.s32 0, %v5489
    %v5491 = vrot.slane %v5466, %v5490
    %v5492 = vlaneseq
    %v5493 = vshrl.u32 %v5492, 7
    %v5494 = vsub.s32 1, %v5493
    %v5495 = vrot.slane %v5466, %v5494
    %v5496 = vlaneseq
    %v5497 = vshrl.u32 %v5496, 7
    %v5498 = vsub.s32 0, %v5497
    %v5499 = vrot.slane %v5467, %v5498
    %v5500 = vlaneseq
    %v5501 = vshrl.u32 %v5500, 7
    %v5502 = vsub.s32 1, %v5501
    %v5503 = vrot.slane %v5467, %v5502
    %v5512 = vmul.f32 %v5288, %v5475
    %v5513 = vmul.f32 %v5289, %v5479
    %v5514 = vmul.f32 %v5290, %v5483
    %v5515 = vmul.f32 %v5291, %v5487
    %v5516 = vmul.f32 %v5292, %v5491
    %v5517 = vmul.f32 %v5293, %v5495
    %v5518 = vmul.f32 %v5294, %v5499
    %v5519 = vmul.f32 %v5295, %v5503
    %v5528 = vcombine.low %v5512, %v5513
    %v5530 = vunpack.c.l.s4 1966171168
    %v5531 = vunpack.c.0.s8 %v5530
    %v5532 = vlaneseq
    %v5533 = vshrl.u32 %v5532, 7
    %v5534 = vsub.s32 %v5531, %v5533
    %v5535 = vrot.slane %v5528, %v5534
    %v5537 = vunpack.c.l.s4 1966171168
    %v5538 = vunpack.c.0.s8 %v5537
    %v5539 = vlaneseq
    %v5540 = vshrl.u32 %v5539, 7
    %v5541 = vsub.s32 %v5538, %v5540
    %v5542 = vrot.slane %v5535, %v5541
    %v5543 = vcombine.low %v5514, %v5515
    %v5545 = vunpack.c.l.s4 1966171168
    %v5546 = vunpack.c.0.s8 %v5545
    %v5547 = vlaneseq
    %v5548 = vshrl.u32 %v5547, 7
    %v5549 = vsub.s32 %v5546, %v5548
    %v5550 = vrot.slane %v5543, %v5549
    %v5552 = vunpack.c.l.s4 1966171168
    %v5553 = vunpack.c.0.s8 %v5552
    %v5554 = vlaneseq
    %v5555 = vshrl.u32 %v5554, 7
    %v5556 = vsub.s32 %v5553, %v5555
    %v5557 = vrot.slane %v5550, %v5556
    %v5558 = vcombine.low %v5516, %v5517
    %v5560 = vunpack.c.l.s4 1966171168
    %v5561 = vunpack.c.0.s8 %v5560
    %v5562 = vlaneseq
    %v5563 = vshrl.u32 %v5562, 7
    %v5564 = vsub.s32 %v5561, %v5563
    %v5565 = vrot.slane %v5558, %v5564
    %v5567 = vunpack.c.l.s4 1966171168
    %v5568 = vunpack.c.0.s8 %v5567
    %v5569 = vlaneseq
    %v5570 = vshrl.u32 %v5569, 7
    %v5571 = vsub.s32 %v5568, %v5570
    %v5572 = vrot.slane %v5565, %v5571
    %v5573 = vcombine.low %v5518, %v5519
    %v5575 = vunpack.c.l.s4 1966171168
    %v5576 = vunpack.c.0.s8 %v5575
    %v5577 = vlaneseq
    %v5578 = vshrl.u32 %v5577, 7
    %v5579 = vsub.s32 %v5576, %v5578
    %v5580 = vrot.slane %v5573, %v5579
    %v5582 = vunpack.c.l.s4 1966171168
    %v5583 = vunpack.c.0.s8 %v5582
    %v5584 = vlaneseq
    %v5585 = vshrl.u32 %v5584, 7
    %v5586 = vsub.s32 %v5583, %v5585
    %v5587 = vrot.slane %v5580, %v5586
    %v5592 = vsub.f32 %v5239, %v5542
    %v5593 = vsub.f32 %v5239, %v5557
    %v5594 = vsub.f32 %v5239, %v5572
    %v5595 = vsub.f32 %v5239, %v5587
    %v5596 = vmul.f32 %v5220, %v5475
    %v5597 = vmul.f32 %v5222, %v5479
    %v5598 = vmul.f32 %v5224, %v5483
    %v5599 = vmul.f32 %v5226, %v5487
    %v5600 = vmul.f32 %v5230, %v5491
    %v5601 = vmul.f32 %v5232, %v5495
    %v5602 = vmul.f32 %v5234, %v5499
    %v5603 = vmul.f32 %v5236, %v5503
    %v5608 = vlaneseq
    %v5609 = vshrl.u32 %v5608, 7
    %v5610 = vsub.s32 0, %v5609
    %v5611 = vrot.slane %v5592, %v5610
    %v5612 = vlaneseq
    %v5613 = vshrl.u32 %v5612, 7
    %v5614 = vsub.s32 1, %v5613
    %v5615 = vrot.slane %v5592, %v5614
    %v5616 = vlaneseq
    %v5617 = vshrl.u32 %v5616, 7
    %v5618 = vsub.s32 0, %v5617
    %v5619 = vrot.slane %v5593, %v5618
    %v5620 = vlaneseq
    %v5621 = vshrl.u32 %v5620, 7
    %v5622 = vsub.s32 1, %v5621
    %v5623 = vrot.slane %v5593, %v5622
    %v5624 = vlaneseq
    %v5625 = vshrl.u32 %v5624, 7
    %v5626 = vsub.s32 0, %v5625
    %v5627 = vrot.slane %v5594, %v5626
    %v5628 = vlaneseq
    %v5629 = vshrl.u32 %v5628, 7
    %v5630 = vsub.s32 1, %v5629
    %v5631 = vrot.slane %v5594, %v5630
    %v5632 = vlaneseq
    %v5633 = vshrl.u32 %v5632, 7
    %v5634 = vsub.s32 0, %v5633
    %v5635 = vrot.slane %v5595, %v5634
    %v5636 = vlaneseq
    %v5637 = vshrl.u32 %v5636, 7
    %v5638 = vsub.s32 1, %v5637
    %v5639 = vrot.slane %v5595, %v5638
    %v5648 = vadd.f32 %v5596, %v5611
    %v5649 = vadd.f32 %v5597, %v5615
    %v5650 = vadd.f32 %v5598, %v5619
    %v5651 = vadd.f32 %v5599, %v5623
    %v5652 = vadd.f32 %v5600, %v5627
    %v5653 = vadd.f32 %v5601, %v5631
    %v5654 = vadd.f32 %v5602, %v5635
    %v5655 = vadd.f32 %v5603, %v5639
    %v5656 = vmax.f32 %v5648, 0.0
    %v5657 = vmax.f32 %v5649, 0.0
    %v5658 = vmax.f32 %v5650, 0.0
    %v5659 = vmax.f32 %v5651, 0.0
    %v5660 = vmax.f32 %v5652, 0.0
    %v5661 = vmax.f32 %v5653, 0.0
    %v5662 = vmax.f32 %v5654, 0.0
    %v5663 = vmax.f32 %v5655, 0.0
    %s5664 = smul.u32 4, 32
    %s5665 = smul.u32 %s5664, 1
    %s5666 = sshll.u32 %s5665, 4
    %5667 = dma.done %s84, %s5666
    %v5668 = vpack.c.bf16 %v5658, %v5656
    %v5669 = vpack.c.bf16 %v5659, %v5657
    %v5670 = vpack.c.bf16 %v5662, %v5660
    %v5671 = vpack.c.bf16 %v5663, %v5661
    %v5672 = vld [vmem:[#allocation4] sm:$0xf]
    %v5673 = vld [vmem:[#allocation4 + $0x4] sm:$0xf]
    %v5674 = vld [vmem:[#allocation4 + $0x8] sm:$0xf]
    %v5675 = vld [vmem:[#allocation4 + $0xc] sm:$0xf]
    %v5676 = vld [vmem:[#allocation4 + $0x10] sm:$0xf]
    %v5677 = vld [vmem:[#allocation4 + $0x14] sm:$0xf]
    %v5678 = vld [vmem:[#allocation4 + $0x18] sm:$0xf]
    %v5679 = vld [vmem:[#allocation4 + $0x1c] sm:$0xf]
    %v5680 = vld [vmem:[#allocation4 + $0x20] sm:$0xf]
    %v5681 = vld [vmem:[#allocation4 + $0x24] sm:$0xf]
    %v5682 = vld [vmem:[#allocation4 + $0x28] sm:$0xf]
    %v5683 = vld [vmem:[#allocation4 + $0x2c] sm:$0xf]
    %v5684 = vld [vmem:[#allocation4 + $0x30] sm:$0xf]
    %v5685 = vld [vmem:[#allocation4 + $0x34] sm:$0xf]
    %v5686 = vld [vmem:[#allocation4 + $0x38] sm:$0xf]
    %v5687 = vld [vmem:[#allocation4 + $0x3c] sm:$0xf]
    %v5688 = vld [vmem:[#allocation4 + $0x40] sm:$0xf]
    %v5689 = vld [vmem:[#allocation4 + $0x44] sm:$0xf]
    %v5690 = vld [vmem:[#allocation4 + $0x48] sm:$0xf]
    %v5691 = vld [vmem:[#allocation4 + $0x4c] sm:$0xf]
    %v5692 = vld [vmem:[#allocation4 + $0x50] sm:$0xf]
    %v5693 = vld [vmem:[#allocation4 + $0x54] sm:$0xf]
    %v5694 = vld [vmem:[#allocation4 + $0x58] sm:$0xf]
    %v5695 = vld [vmem:[#allocation4 + $0x5c] sm:$0xf]
    %v5696 = vld [vmem:[#allocation4 + $0x60] sm:$0xf]
    %v5697 = vld [vmem:[#allocation4 + $0x64] sm:$0xf]
    %v5698 = vld [vmem:[#allocation4 + $0x68] sm:$0xf]
    %v5699 = vld [vmem:[#allocation4 + $0x6c] sm:$0xf]
    %v5700 = vld [vmem:[#allocation4 + $0x70] sm:$0xf]
    %v5701 = vld [vmem:[#allocation4 + $0x74] sm:$0xf]
    %v5702 = vld [vmem:[#allocation4 + $0x78] sm:$0xf]
    %v5703 = vld [vmem:[#allocation4 + $0x7c] sm:$0xf]
    %v5704 = vld [vmem:[%s14] sm:$0x1]
    %v5706 = vlaneseq
    %v5707 = vshrl.u32 %v5706, 7
    %v5708 = vsub.s32 0, %v5707
    %v5709 = vrot.slane %v5704, %v5708
    %v5743 = vunpack.c.l.b16 %v5672
    %v5744 = vunpack.c.l.b16 %v5673
    %v5745 = vunpack.c.l.b16 %v5674
    %v5746 = vunpack.c.l.b16 %v5675
    %v5747 = vunpack.c.l.b16 %v5676
    %v5748 = vunpack.c.l.b16 %v5677
    %v5749 = vunpack.c.l.b16 %v5678
    %v5750 = vunpack.c.l.b16 %v5679
    %v5751 = vunpack.c.l.b16 %v5680
    %v5752 = vunpack.c.l.b16 %v5681
    %v5753 = vunpack.c.l.b16 %v5682
    %v5754 = vunpack.c.l.b16 %v5683
    %v5755 = vunpack.c.l.b16 %v5684
    %v5756 = vunpack.c.l.b16 %v5685
    %v5757 = vunpack.c.l.b16 %v5686
    %v5758 = vunpack.c.l.b16 %v5687
    %v5759 = vunpack.c.l.b16 %v5688
    %v5760 = vunpack.c.l.b16 %v5689
    %v5761 = vunpack.c.l.b16 %v5690
    %v5762 = vunpack.c.l.b16 %v5691
    %v5763 = vunpack.c.l.b16 %v5692
    %v5764 = vunpack.c.l.b16 %v5693
    %v5765 = vunpack.c.l.b16 %v5694
    %v5766 = vunpack.c.l.b16 %v5695
    %v5767 = vunpack.c.l.b16 %v5696
    %v5768 = vunpack.c.l.b16 %v5697
    %v5769 = vunpack.c.l.b16 %v5698
    %v5770 = vunpack.c.l.b16 %v5699
    %v5771 = vunpack.c.l.b16 %v5700
    %v5772 = vunpack.c.l.b16 %v5701
    %v5773 = vunpack.c.l.b16 %v5702
    %v5774 = vunpack.c.l.b16 %v5703
    %v5775 = vpack.c.b16 %v5744, %v5743
    %v5776 = vpack.c.b16 %v5746, %v5745
    %v5777 = vpack.c.b16 %v5748, %v5747
    %v5778 = vpack.c.b16 %v5750, %v5749
    %v5779 = vpack.c.b16 %v5752, %v5751
    %v5780 = vpack.c.b16 %v5754, %v5753
    %v5781 = vpack.c.b16 %v5756, %v5755
    %v5782 = vpack.c.b16 %v5758, %v5757
    %v5783 = vpack.c.b16 %v5760, %v5759
    %v5784 = vpack.c.b16 %v5762, %v5761
    %v5785 = vpack.c.b16 %v5764, %v5763
    %v5786 = vpack.c.b16 %v5766, %v5765
    %v5787 = vpack.c.b16 %v5768, %v5767
    %v5788 = vpack.c.b16 %v5770, %v5769
    %v5789 = vpack.c.b16 %v5772, %v5771
    %v5790 = vpack.c.b16 %v5774, %v5773
    %5807 = vmatprep.subr.bf16.mxu0 0
    %5808 = vmatpush1.bf16.msra.mxu0 %v5782
    %5809 = vmatprep.subr.bf16.mxu0 0
    %5810 = vmatpush1.bf16.msra.mxu0 %v5781
    %5811 = vmatprep.subr.bf16.mxu0 0
    %5812 = vmatpush1.bf16.msra.mxu0 %v5780
    %5813 = vmatprep.subr.bf16.mxu0 0
    %5814 = vmatpush1.bf16.msra.mxu0 %v5779
    %5815 = vmatprep.subr.bf16.mxu0 0
    %5816 = vmatpush1.bf16.msra.mxu0 %v5778
    %5817 = vmatprep.subr.bf16.mxu0 0
    %5818 = vmatpush1.bf16.msra.mxu0 %v5777
    %5819 = vmatprep.subr.bf16.mxu0 0
    %5820 = vmatpush1.bf16.msra.mxu0 %v5776
    %5821 = vmatprep.subr.bf16.mxu0 0
    %5822 = vmatpush1.bf16.msra.mxu0 %v5775
    %5823 = vmatprep.subr.bf16.mxu0 0
    %5824 = vmatpush2.bf16.msra.mxu0 %v5790
    %5825 = vmatprep.subr.bf16.mxu0 0
    %5826 = vmatpush2.bf16.msra.mxu0 %v5789
    %5827 = vmatprep.subr.bf16.mxu0 0
    %5828 = vmatpush2.bf16.msra.mxu0 %v5788
    %5829 = vmatprep.subr.bf16.mxu0 0
    %5830 = vmatpush2.bf16.msra.mxu0 %v5787
    %5831 = vmatprep.subr.bf16.mxu0 0
    %5832 = vmatpush2.bf16.msra.mxu0 %v5786
    %5833 = vmatprep.subr.bf16.mxu0 0
    %5834 = vmatpush2.bf16.msra.mxu0 %v5785
    %5835 = vmatprep.subr.bf16.mxu0 0
    %5836 = vmatpush2.bf16.msra.mxu0 %v5784
    %5837 = vmatprep.subr.bf16.mxu0 0
    %5838 = vmatpush2.bf16.msra.mxu0 %v5783
    %5839 = vmatprep.mubr.bf16.mxu0 %v5669
    %5840 = vmatmul.mubr.bf16.gmra.mxu0 %v5668
    %v5841 = vpop.f32.mrf.mxu0
    %v5842 = vadd.f32 %v5709, %v5841
    %v5843 = vpop.f32.mrf.mxu0
    %v5844 = vpop.f32.mrf.mxu0
    %v5845 = vadd.f32 %v5709, %v5844
    %v5846 = vpop.f32.mrf.mxu0
    %5847 = vmatprep.mubr.bf16.mxu0 %v5671
    %5848 = vmatmul.mubr.bf16.gmra.mxu0 %v5670
    %v5849 = vpop.f32.mrf.mxu0
    %v5850 = vadd.f32 %v5709, %v5849
    %v5851 = vpop.f32.mrf.mxu0
    %v5852 = vpop.f32.mrf.mxu0
    %v5853 = vadd.f32 %v5709, %v5852
    %v5854 = vpop.f32.mrf.mxu0
    %5855 = vdwg.mxu0
    %5856 = vmax.xlane.f32.xlu0 %v5842
    %v5857 = vpop.xlane.xlu0 %5856
    %5858 = vmax.xlane.f32.xlu0 %v5845
    %v5859 = vpop.xlane.xlu0 %5858
    %5860 = vmax.xlane.f32.xlu0 %v5850
    %v5861 = vpop.xlane.xlu0 %5860
    %5862 = vmax.xlane.f32.xlu0 %v5853
    %v5863 = vpop.xlane.xlu0 %5862
    %v5864 = vsub.f32 %v5842, %v5857
    %v5865 = vsub.f32 %v5845, %v5859
    %v5866 = vsub.f32 %v5850, %v5861
    %v5867 = vsub.f32 %v5853, %v5863
    %v5868 = vmul.f32 %v5864, 1.442695
    %v5869 = vpow.pop %v5868
    %v5870 = vmul.f32 %v5865, 1.442695
    %v5871 = vpow.pop %v5870
    %v5872 = vmul.f32 %v5866, 1.442695
    %v5873 = vpow.pop %v5872
    %v5874 = vmul.f32 %v5867, 1.442695
    %v5875 = vpow.pop %v5874
    %5876 = vadd.xlane.f32.xlu0 %v5869
    %v5877 = vpop.xlane.xlu0 %5876
    %5878 = vadd.xlane.f32.xlu0 %v5871
    %v5879 = vpop.xlane.xlu0 %5878
    %5880 = vadd.xlane.f32.xlu0 %v5873
    %v5881 = vpop.xlane.xlu0 %5880
    %5882 = vadd.xlane.f32.xlu0 %v5875
    %v5883 = vpop.xlane.xlu0 %5882
    %v5884 = vrcp.pop %v5877
    %v5885 = vrcp.pop %v5879
    %v5886 = vrcp.pop %v5881
    %v5887 = vrcp.pop %v5883
    %v5888 = vmul.f32 %v5869, %v5884
    %v5889 = vmul.f32 %v5871, %v5885
    %v5890 = vmul.f32 %v5873, %v5886
    %v5891 = vmul.f32 %v5875, %v5887
    %5892 = vst [vmem:[#allocation10] sm:$0xff] %v5888
    %5893 = vst [vmem:[#allocation10 + $0x8] sm:$0xff] %v5889
    %5894 = vst [vmem:[#allocation10 + $0x10] sm:$0xff] %v5890
    %5895 = vst [vmem:[#allocation10 + $0x18] sm:$0xff] %v5891
    // Predicated region
    $region66: #{tpu_custom_call.1} parent=1 // pred_check
      _
    $region67: #{tpu_custom_call.1} parent=1 // pred_check_branch
      %5897 = sbr.rel (0) target = $region69
    $region68: #{tpu_custom_call.1} parent=1 // pred_region
      %s5899 = ssub.s32 512, 512
      %5900 = vsyncadd [#allocation9], %s5899
      %s5901 = sshll.u32 [#allocation10], 4
      %s5902 = int_to_ptr.vmem [resolvable:$true] %s5901
      %5907 = dma.vmem_to_hbm [thread:$0]  %s5902, 512, %s15, [#allocation9], 128, 128, 8
    $region69: #{tpu_custom_call.1} parent=1 // pred_fallthru
      _
    // Predicated region
    $region70: #{tpu_custom_call.1} parent=1 // pred_check
      _
    $region71: #{tpu_custom_call.1} parent=1 // pred_check_branch
      %5909 = sbr.rel (0) target = $region73
    $region72: #{tpu_custom_call.1} parent=1 // pred_region
      %s5911 = ssub.s32 64, 64
      %5912 = vsyncadd [#allocation12], %s5911
      %s5914 = sshll.u32 [#allocation11], 4
      %s5915 = int_to_ptr.vmem [resolvable:$true] %s5914
      %5917 = dma.vmem_to_hbm [thread:$0]  %s5915, 64, %s16, [#allocation12]
    $region73: #{tpu_custom_call.1} parent=1 // pred_fallthru
      _
    // Predicated region
    $region74: #{tpu_custom_call.1} parent=1 // pred_check
      _
    $region75: #{tpu_custom_call.1} parent=1 // pred_check_branch
      %5919 = sbr.rel (0) target = $region77
    $region76: #{tpu_custom_call.1} parent=1 // pred_region
      %5920 = dma.done [#allocation9], 512
    $region77: #{tpu_custom_call.1} parent=1 // pred_fallthru
      _
    // Predicated region
    $region78: #{tpu_custom_call.1} parent=1 // pred_check
      _
    $region79: #{tpu_custom_call.1} parent=1 // pred_check_branch
      %5922 = sbr.rel (0) target = $region81
    $region80: #{tpu_custom_call.1} parent=1 // pred_region
      %5923 = dma.done [#allocation12], 64
    $region81: #{tpu_custom_call.1} parent=1 // pred_fallthru
      _
    %5924 = vsyncpa [#allocation8], 1
    %5925 = vsyncpa [#allocation9], 1
    %5926 = vsyncpa [#allocation12], 1
  %5927 = vsyncmov [#allocation6]
  %s5928 = vpop.sfrf %5927
  %p5929 = scmp.eq.s32.totalorder %s5928, 0
  %p5930 = pneg %p5929
  %5932 = shalt.err (%p5930)
  %s5933 = scalar_lea.sflag [#allocation6], 1
  %5934 = vsyncmov %s5933
  %s5935 = vpop.sfrf %5934
  %p5936 = scmp.eq.s32.totalorder %s5935, 0
  %p5937 = pneg %p5936
  %5939 = shalt.err (%p5937)
  %s5940 = scalar_lea.sflag [#allocation6], 2
  %5941 = vsyncmov %s5940
  %s5942 = vpop.sfrf %5941
  %p5943 = scmp.eq.s32.totalorder %s5942, 0
  %p5944 = pneg %p5943
  %5946 = shalt.err (%p5944)

</llo_original>
